<compile_context>
chip_gen: v6e
topology: v6e:2x2x1
jax: 0.10.0
libtpu: 0.0.40
codegen_flags: <defaults>
</compile_context>

<pallas_src>
import functools

import jax
import jax.numpy as jnp
from jax import lax
from jax.experimental import pallas as pl
from jax.experimental.pallas import tpu as pltpu


_VMEM_LIMIT = 32 * 1024 * 1024  # well above actual footprint, headroom on v7x's 64 MiB


def _compiler_params():
    return pltpu.CompilerParams(
        dimension_semantics=("parallel", "arbitrary"),  # j ("arbitrary"): scratch reuse
        vmem_limit_bytes=_VMEM_LIMIT)


# ----------------------------- Pallas kernels ------------------------------ #

def _conv1_kernel(*refs, stride, nb, ho, wo, cin, has_shortcut):
    """out = relu(bn2(conv3x3(relu(bn1(x)), w1, stride)))  (bf16)
       res = conv1x1(relu(bn1(x)), ws, stride)             (f32, optional)

    Fold-scratch layout (built once per batch block, reused across Cout tiles):
      fold[phase, b, q, jcol, pos*cin + c]  with kw order pos -> (1, 0, 2),
      where for stride 1:  phase=0, padded row q, padded col jcol + kw
            for stride 2:  padded row 2*q + phase, padded col 2*jcol + kw
    Tap row kh then reads fold[kh % stride, :, kh//stride : kh//stride + ho] --
    an aligned, unstrided slice -- and one matmul per kh covers all 3 kw taps
    (K = 3*cin).  Channel block 0 (kw=1) doubles as the 1x1 shortcut input.
    """
    if has_shortcut:
        (x_ref, w_ref, ws_ref, s1_ref, b1_ref, s2_ref, b2_ref,
         out_ref, res_ref, fold_ref) = refs
    else:
        (x_ref, w_ref, s1_ref, b1_ref, s2_ref, b2_ref,
         out_ref, fold_ref) = refs

    j = pl.program_id(1)

    @pl.when(j == 0)
    def _build():
        # bn1 + relu1 + cast, hoisted out of the tap loop (done once per batch blk).
        act = jnp.maximum(x_ref[...] * s1_ref[...] + b1_ref[...], 0.0)
        act = act.astype(jnp.bfloat16)
        fold_ref[...] = jnp.zeros_like(fold_ref)           # covers all zero padding
        if stride == 1:
            # act: (nb, ho, wo, cin); padded rows 1..ho are the real rows.
            fold_ref[0, :, 1:ho + 1, :, 0:cin] = act                                # kw=1
            fold_ref[0, :, 1:ho + 1, 1:wo, cin:2 * cin] = act[:, :, 0:wo - 1, :]    # kw=0
            fold_ref[0, :, 1:ho + 1, 0:wo - 1, 2 * cin:3 * cin] = act[:, :, 1:wo, :]  # kw=2
        else:
            # act: (nb, 2*ho, wo, 2*cin) -- column pairs merged into channels by a
            # free wrapper reshape: lanes [0:cin] = even cols, [cin:2cin] = odd cols.
            e = act[:, :, :, 0:cin].reshape(nb, ho, 2, wo, cin)
            o = act[:, :, :, cin:2 * cin].reshape(nb, ho, 2, wo, cin)
            er0, er1 = e[:, :, 0], e[:, :, 1]          # even / odd input rows
            or0, or1 = o[:, :, 0], o[:, :, 1]
            # phase 0: even padded rows (2q)   -> odd input rows
            fold_ref[0, :, 1:ho + 1, :, 0:cin] = er1
            fold_ref[0, :, 1:ho + 1, 1:wo, cin:2 * cin] = or1[:, :, 0:wo - 1, :]
            fold_ref[0, :, 1:ho + 1, :, 2 * cin:3 * cin] = or1
            # phase 1: odd padded rows (2q+1)  -> even input rows
            fold_ref[1, :, 0:ho, :, 0:cin] = er0
            fold_ref[1, :, 0:ho, 1:wo, cin:2 * cin] = or0[:, :, 0:wo - 1, :]
            fold_ref[1, :, 0:ho, :, 2 * cin:3 * cin] = or0

    # 3 MXU matmuls (K = 3*cin), f32 accumulation; first dot initializes acc.
    m = nb * ho * wo
    acc = None
    for kh in range(3):
        ph, q0 = kh % stride, kh // stride
        a = fold_ref[ph, :, q0:q0 + ho, :, :].reshape(m, 3 * cin)
        d = jnp.dot(a, w_ref[kh], preferred_element_type=jnp.float32)
        acc = d if acc is None else acc + d

    out = jnp.maximum(acc * s2_ref[...] + b2_ref[...], 0.0)     # fused bn2 + relu2
    out_ref[...] = out.reshape(out_ref.shape).astype(out_ref.dtype)

    if has_shortcut:
        # 1x1 stride-s shortcut: center tap (kh=1, kw=1) = channel block 0.
        ph, q0 = 1 % stride, 1 // stride
        a_c = fold_ref[ph, :, q0:q0 + ho, :, 0:cin].reshape(m, cin)
        r = jnp.dot(a_c, ws_ref[...], preferred_element_type=jnp.float32)
        res_ref[...] = r.reshape(res_ref.shape).astype(res_ref.dtype)


def _conv2_kernel(h_ref, w_ref, res_ref, out_ref, fold_ref, *, nb, ho, wo, cmid):
    """out = conv3x3(h, w2, stride=1) + residual   (h is already relu(bn2(.)))."""
    j = pl.program_id(1)

    @pl.when(j == 0)
    def _build():
        h = h_ref[...]                                        # (nb, ho, wo, cmid) bf16
        fold_ref[...] = jnp.zeros_like(fold_ref)              # halo padding in-kernel
        fold_ref[:, 1:ho + 1, :, 0:cmid] = h                                   # kw=1
        fold_ref[:, 1:ho + 1, 1:wo, cmid:2 * cmid] = h[:, :, 0:wo - 1, :]      # kw=0
        fold_ref[:, 1:ho + 1, 0:wo - 1, 2 * cmid:3 * cmid] = h[:, :, 1:wo, :]  # kw=2

    m = nb * ho * wo
    acc = None
    for kh in range(3):
        a = fold_ref[:, kh:kh + ho, :, :].reshape(m, 3 * cmid)
        d = jnp.dot(a, w_ref[kh], preferred_element_type=jnp.float32)
        acc = d if acc is None else acc + d

    out_ref[...] = (acc.reshape(out_ref.shape) + res_ref[...]).astype(out_ref.dtype)


# ------------------------------ Small helpers ------------------------------- #

def _fold_bn(gamma, beta, mean, var, eps=1e-5):
    scale = gamma / jnp.sqrt(var + eps)
    return scale, beta - mean * scale


def _fold_weights(w):
    """(cout, cin, 3, 3) -> (3, 3*cin, cout) bf16, K blocks in kw order (1, 0, 2)."""
    cout, cin = w.shape[0], w.shape[1]
    wt = jnp.transpose(w, (2, 3, 1, 0))             # (kh, kw, cin, cout)
    wt = jnp.stack([wt[:, 1], wt[:, 0], wt[:, 2]], axis=1)
    return wt.reshape(3, 3 * cin, cout).astype(jnp.bfloat16)


def _pick_tn(c):
    """Cout tile (lane dim): whole channel dim when it fits, else a 128-multiple."""
    if c <= 1024:
        return c
    for t in (1024, 896, 768, 640, 512, 384, 256, 128):
        if c % t == 0:
            return t
    return c


def _pick_nb(n, ho, wo):
    """Batch images per grid step: push GEMM M = nb*ho*wo toward >=256."""
    target = max(1, 256 // max(1, ho * wo))
    target = min(target, n, 8)
    nb = 1
    for d in range(1, target + 1):
        if n % d == 0:
            nb = d
    return nb


# ----------------------------- Pallas wrappers ------------------------------ #

def conv1_bn_relu(x, w1, s1, b1, s2, b2, stride, ws=None):
    """relu(bn2(conv3x3(relu(bn1(x)), w1, stride))) [bf16]; optional fused shortcut."""
    n, h, w, cin = x.shape
    cout = w1.shape[0]
    assert stride in (1, 2)
    ho, wo = h // stride, w // stride
    nb = _pick_nb(n, ho, wo)
    tn = _pick_tn(cout)
    nj = cout // tn
    has_shortcut = ws is not None

    if stride == 1:
        xk, ck, rows_p = x, cin, ho + 2
        s1k, b1k = s1.reshape(1, cin), b1.reshape(1, cin)
    else:
        assert h % 2 == 0 and w % 2 == 0, "stride-2 path assumes even H, W"
        # Free reshape (no HBM pass): merge column pairs into channels.
        xk, ck, rows_p = x.reshape(n, h, w // 2, 2 * cin), 2 * cin, ho + 1
        s1k, b1k = jnp.tile(s1, 2).reshape(1, ck), jnp.tile(b1, 2).reshape(1, ck)

    wfold = _fold_weights(w1)                        # (3, 3*cin, cout) bf16
    kernel = functools.partial(_conv1_kernel, stride=stride, nb=nb, ho=ho, wo=wo,
                               cin=cin, has_shortcut=has_shortcut)

    in_specs = [pl.BlockSpec((nb,) + xk.shape[1:], lambda i, j: (i, 0, 0, 0)),
                pl.BlockSpec((3, 3 * cin, tn), lambda i, j: (0, 0, j))]
    args = [xk, wfold]
    if has_shortcut:
        in_specs.append(pl.BlockSpec((cin, tn), lambda i, j: (0, j)))
        args.append(ws.reshape(cout, cin).T.astype(jnp.bfloat16))
    in_specs += [pl.BlockSpec((1, ck), lambda i, j: (0, 0)),
                 pl.BlockSpec((1, ck), lambda i, j: (0, 0)),
                 pl.BlockSpec((1, tn), lambda i, j: (0, j)),
                 pl.BlockSpec((1, tn), lambda i, j: (0, j))]
    args += [s1k, b1k, s2.reshape(1, cout), b2.reshape(1, cout)]

    out_shapes = [jax.ShapeDtypeStruct((n, ho, wo, cout), jnp.bfloat16)]
    out_specs = [pl.BlockSpec((nb, ho, wo, tn), lambda i, j: (i, 0, 0, j))]
    if has_shortcut:
        out_shapes.append(jax.ShapeDtypeStruct((n, ho, wo, cout), jnp.float32))
        out_specs.append(pl.BlockSpec((nb, ho, wo, tn), lambda i, j: (i, 0, 0, j)))

    return pl.pallas_call(
        kernel,
        out_shape=tuple(out_shapes) if has_shortcut else out_shapes[0],
        grid=(n // nb, nj),
        in_specs=in_specs,
        out_specs=tuple(out_specs) if has_shortcut else out_specs[0],
        scratch_shapes=[pltpu.VMEM((stride, nb, rows_p, wo, 3 * cin), jnp.bfloat16)],
        compiler_params=_compiler_params(),
    )(*args)


def conv2_add(h, w2, res):
    """conv3x3(h, w2, stride=1) + res  -> f32 NHWC, written in place over `res`."""
    n, ho, wo, cmid = h.shape
    cout = w2.shape[0]
    nb = _pick_nb(n, ho, wo)
    tn = _pick_tn(cout)
    nj = cout // tn
    wfold = _fold_weights(w2)                        # (3, 3*cmid, cout) bf16
    kernel = functools.partial(_conv2_kernel, nb=nb, ho=ho, wo=wo, cmid=cmid)
    return pl.pallas_call(
        kernel,
        out_shape=jax.ShapeDtypeStruct((n, ho, wo, cout), jnp.float32),
        grid=(n // nb, nj),
        in_specs=[pl.BlockSpec((nb, ho, wo, cmid), lambda i, j: (i, 0, 0, 0)),
                  pl.BlockSpec((3, 3 * cmid, tn), lambda i, j: (0, 0, j)),
                  pl.BlockSpec((nb, ho, wo, tn), lambda i, j: (i, 0, 0, j))],
        out_specs=pl.BlockSpec((nb, ho, wo, tn), lambda i, j: (i, 0, 0, j)),
        scratch_shapes=[pltpu.VMEM((nb, ho + 2, wo, 3 * cmid), jnp.bfloat16)],
        input_output_aliases={2: 0},                 # residual buffer overwritten in place
        compiler_params=_compiler_params(),
    )(h, wfold, res)


# --------------------------- BasicBlock forward ----------------------------- #

def basic_block_forward_nhwc(x, p, stride):
    """NHWC-native forward (use this when chaining blocks to stay NHWC end-to-end)."""
    w1, w2 = p["w1"], p["w2"]
    cout, cin = w1.shape[0], w1.shape[1]
    equal_in_out = (cin == cout)

    s1, b1 = _fold_bn(p["bn1_gamma"], p["bn1_beta"], p["bn1_mean"], p["bn1_var"])
    s2, b2 = _fold_bn(p["bn2_gamma"], p["bn2_beta"], p["bn2_mean"], p["bn2_var"])

    if equal_in_out:
        h = conv1_bn_relu(x, w1, s1, b1, s2, b2, stride)
        res = x                                      # raw input, as in PyTorch
    else:
        h, res = conv1_bn_relu(x, w1, s1, b1, s2, b2, stride, ws=p["ws"])

    # dropRate == 0.0 -> dropout is the identity.
    return conv2_add(h, w2, res)


@functools.partial(jax.jit, static_argnames=("stride",))
def basic_block_forward(x_nchw, p, stride):
    x = jnp.transpose(x_nchw.astype(jnp.float32), (0, 2, 3, 1))   # NCHW -> NHWC
    out = basic_block_forward_nhwc(x, p, stride)
    return jnp.transpose(out, (0, 3, 1, 2))                       # NHWC -> NCHW


# ------------------------ Pure-JAX reference (check) ------------------------ #

def reference_forward(x, p, stride, eps=1e-5):
    def bn(t, g, b, m, v):
        return ((t - m[None, :, None, None]) / jnp.sqrt(v + eps)[None, :, None, None]
                * g[None, :, None, None] + b[None, :, None, None])

    def conv(t, w, s, pad):
        return lax.conv_general_dilated(
            t, w, (s, s), ((pad, pad), (pad, pad)),
            dimension_numbers=("NCHW", "OIHW", "NCHW"),
            precision=lax.Precision.HIGHEST)

    equal = p["w1"].shape[0] == p["w1"].shape[1]
    xb = jax.nn.relu(bn(x, p["bn1_gamma"], p["bn1_beta"], p["bn1_mean"], p["bn1_var"]))
    o = conv(xb, p["w1"], stride, 1)
    o = jax.nn.relu(bn(o, p["bn2_gamma"], p["bn2_beta"], p["bn2_mean"], p["bn2_var"]))
    o = conv(o, p["w2"], 1, 1)
    sc = x if equal else conv(xb, p["ws"], stride, 0)
    return sc + o


# ------------------------------ Param init ---------------------------------- #

def init_params(key, in_planes, out_planes):
    ks = jax.random.split(key, 12)
    p = {
        "w1": 0.1 * jax.random.normal(ks[0], (out_planes, in_planes, 3, 3), jnp.float32),
        "w2": 0.1 * jax.random.normal(ks[1], (out_planes, out_planes, 3, 3), jnp.float32),
        "bn1_gamma": jax.random.uniform(ks[2], (in_planes,), jnp.float32, 0.5, 1.5),
        "bn1_beta": 0.1 * jax.random.normal(ks[3], (in_planes,), jnp.float32),
        "bn1_mean": 0.1 * jax.random.normal(ks[4], (in_planes,), jnp.float32),
        "bn1_var": jax.random.uniform(ks[5], (in_planes,), jnp.float32, 0.5, 1.5),
        "bn2_gamma": jax.random.uniform(ks[6], (out_planes,), jnp.float32, 0.5, 1.5),
        "bn2_beta": 0.1 * jax.random.normal(ks[7], (out_planes,), jnp.float32),
        "bn2_mean": 0.1 * jax.random.normal(ks[8], (out_planes,), jnp.float32),
        "bn2_var": jax.random.uniform(ks[9], (out_planes,), jnp.float32, 0.5, 1.5),
    }
    if in_planes != out_planes:
        p["ws"] = 0.1 * jax.random.normal(ks[10], (out_planes, in_planes, 1, 1), jnp.float32)
    return p


# --------------------------------- Main -------------------------------------- #

if __name__ == "__main__":
    key = jax.random.PRNGKey(0)
    k_x1, k_p1, k_x2, k_p2 = jax.random.split(key, 4)

    # bf16 MXU operands + bf16 conv1->conv2 intermediate (f32 accumulation) vs
    # an f32 HIGHEST-precision reference -> slightly loose tolerance.
    RTOL = ATOL = 3e-2

    # Case 1: in_planes != out_planes, stride 2 (fused 1x1 shortcut path).
    x1 = jax.random.normal(k_x1, (2, 4, 16, 16), jnp.float32)
    p1 = init_params(k_p1, in_planes=4, out_planes=8)
    y1 = jax.block_until_ready(basic_block_forward(x1, p1, stride=2))
    r1 = reference_forward(x1, p1, stride=2)
    assert y1.shape == (2, 8, 8, 8), y1.shape
    assert jnp.allclose(y1, r1, rtol=RTOL, atol=ATOL), float(jnp.max(jnp.abs(y1 - r1)))

    # Case 2: equalInOut, stride 1 (identity shortcut path).
    x2 = jax.random.normal(k_x2, (2, 8, 16, 16), jnp.float32)
    p2 = init_params(k_p2, in_planes=8, out_planes=8)
    y2 = jax.block_until_ready(basic_block_forward(x2, p2, stride=1))
    r2 = reference_forward(x2, p2, stride=1)
    assert y2.shape == (2, 8, 16, 16), y2.shape
    assert jnp.allclose(y2, r2, rtol=RTOL, atol=ATOL), float(jnp.max(jnp.abs(y2 - r2)))

    print("KERNEL_OK")
</pallas_src>

<mosaic_0001>
module attributes {stable_mosaic.version = 11 : i64} {
  func.func @_conv1_kernel(%arg0: i32, %arg1: i32, %arg2: memref<2x16x8x8xf32, #tpu.memory_space<vmem>>, %arg3: memref<3x12x8xbf16, #tpu.memory_space<vmem>>, %arg4: memref<4x8xbf16, #tpu.memory_space<vmem>>, %arg5: memref<1x8xf32, #tpu.memory_space<vmem>>, %arg6: memref<1x8xf32, #tpu.memory_space<vmem>>, %arg7: memref<1x8xf32, #tpu.memory_space<vmem>>, %arg8: memref<1x8xf32, #tpu.memory_space<vmem>>, %arg9: memref<2x8x8x8xbf16, #tpu.memory_space<vmem>>, %arg10: memref<2x8x8x8xf32, #tpu.memory_space<vmem>>, %arg11: memref<2x2x9x8x12xbf16, #tpu.memory_space<vmem>>) attributes {dimension_semantics = [#tpu.dimension_semantics<parallel>, #tpu.dimension_semantics<arbitrary>], iteration_bounds = array<i64: 1, 1>, scalar_prefetch = 0 : i64, scratch_operands = 1 : i64, tpu.core_type = #tpu.core_type<tc>, window_params = [{transform_indices = @transform_0, window_bounds = array<i64: 2, 16, 8, 8>}, {transform_indices = @transform_1, window_bounds = array<i64: 3, 12, 8>}, {transform_indices = @transform_2, window_bounds = array<i64: 4, 8>}, {pipeline_mode = #tpu.pipeline_mode<synchronous>, transform_indices = @transform_3, window_bounds = array<i64: 1, 8>}, {pipeline_mode = #tpu.pipeline_mode<synchronous>, transform_indices = @transform_4, window_bounds = array<i64: 1, 8>}, {transform_indices = @transform_5, window_bounds = array<i64: 1, 8>}, {transform_indices = @transform_6, window_bounds = array<i64: 1, 8>}, {transform_indices = @transform_7, window_bounds = array<i64: 2, 8, 8, 8>}, {transform_indices = @transform_8, window_bounds = array<i64: 2, 8, 8, 8>}]} {
    %c0_i32 = arith.constant 0 : i32
    %0 = arith.cmpi eq, %arg1, %c0_i32 : i32
    %1 = arith.extui %0 : i1 to i32
    %c0_i32_0 = arith.constant 0 : i32
    %2 = arith.cmpi ne, %1, %c0_i32_0 : i32
    scf.if %2 {
      %c0_45 = arith.constant 0 : index
      %c0_46 = arith.constant 0 : index
      %c0_47 = arith.constant 0 : index
      %c0_48 = arith.constant 0 : index
      %41 = vector.load %arg2[%c0_45, %c0_46, %c0_47, %c0_48] : memref<2x16x8x8xf32, #tpu.memory_space<vmem>>, vector<2x16x8x8xf32>
      %c0_49 = arith.constant 0 : index
      %c0_50 = arith.constant 0 : index
      %42 = vector.load %arg5[%c0_49, %c0_50] : memref<1x8xf32, #tpu.memory_space<vmem>>, vector<1x8xf32>
      %43 = vector.shape_cast %42 : vector<1x8xf32> to vector<1x1x1x8xf32>
      %44 = vector.broadcast %43 : vector<1x1x1x8xf32> to vector<2x16x8x8xf32>
      %45 = arith.mulf %41, %44 : vector<2x16x8x8xf32>
      %c0_51 = arith.constant 0 : index
      %c0_52 = arith.constant 0 : index
      %46 = vector.load %arg6[%c0_51, %c0_52] : memref<1x8xf32, #tpu.memory_space<vmem>>, vector<1x8xf32>
      %47 = vector.shape_cast %46 : vector<1x8xf32> to vector<1x1x1x8xf32>
      %48 = vector.broadcast %47 : vector<1x1x1x8xf32> to vector<2x16x8x8xf32>
      %49 = arith.addf %45, %48 : vector<2x16x8x8xf32>
      %cst_53 = arith.constant 0.000000e+00 : f32
      %50 = vector.broadcast %cst_53 : f32 to vector<2x16x8x8xf32>
      %51 = arith.maximumf %49, %50 : vector<2x16x8x8xf32>
      %52 = arith.truncf %51 : vector<2x16x8x8xf32> to vector<2x16x8x8xbf16>
      %cst_54 = arith.constant 0.000000e+00 : bf16
      %53 = vector.broadcast %cst_54 : bf16 to vector<2x2x9x8x12xbf16>
      %c0_55 = arith.constant 0 : index
      %c0_56 = arith.constant 0 : index
      %c0_57 = arith.constant 0 : index
      %c0_58 = arith.constant 0 : index
      %c0_59 = arith.constant 0 : index
      %54 = vector.load %arg11[%c0_55, %c0_56, %c0_57, %c0_58, %c0_59] : memref<2x2x9x8x12xbf16, #tpu.memory_space<vmem>>, vector<2x2x9x8x12xbf16>
      tpu.vector_store %arg11[%c0_55, %c0_56, %c0_57, %c0_58, %c0_59], %53 {strides = array<i32>} : memref<2x2x9x8x12xbf16, #tpu.memory_space<vmem>>, vector<2x2x9x8x12xbf16>,
      %55 = vector.extract_strided_slice %52 {offsets = [0, 0, 0, 0], sizes = [2, 16, 8, 4], strides = [1, 1, 1, 1]} : vector<2x16x8x8xbf16> to vector<2x16x8x4xbf16>
      %56 = vector.shape_cast %55 : vector<2x16x8x4xbf16> to vector<2x8x2x8x4xbf16>
      %57 = vector.extract_strided_slice %52 {offsets = [0, 0, 0, 4], sizes = [2, 16, 8, 4], strides = [1, 1, 1, 1]} : vector<2x16x8x8xbf16> to vector<2x16x8x4xbf16>
      %58 = vector.shape_cast %57 : vector<2x16x8x4xbf16> to vector<2x8x2x8x4xbf16>
      %59 = vector.extract_strided_slice %56 {offsets = [0, 0, 0, 0, 0], sizes = [2, 8, 1, 8, 4], strides = [1, 1, 1, 1, 1]} : vector<2x8x2x8x4xbf16> to vector<2x8x1x8x4xbf16>
      %60 = vector.shape_cast %59 : vector<2x8x1x8x4xbf16> to vector<2x8x8x4xbf16>
      %61 = vector.extract_strided_slice %56 {offsets = [0, 0, 1, 0, 0], sizes = [2, 8, 1, 8, 4], strides = [1, 1, 1, 1, 1]} : vector<2x8x2x8x4xbf16> to vector<2x8x1x8x4xbf16>
      %62 = vector.shape_cast %61 : vector<2x8x1x8x4xbf16> to vector<2x8x8x4xbf16>
      %63 = vector.extract_strided_slice %58 {offsets = [0, 0, 0, 0, 0], sizes = [2, 8, 1, 8, 4], strides = [1, 1, 1, 1, 1]} : vector<2x8x2x8x4xbf16> to vector<2x8x1x8x4xbf16>
      %64 = vector.shape_cast %63 : vector<2x8x1x8x4xbf16> to vector<2x8x8x4xbf16>
      %65 = vector.extract_strided_slice %58 {offsets = [0, 0, 1, 0, 0], sizes = [2, 8, 1, 8, 4], strides = [1, 1, 1, 1, 1]} : vector<2x8x2x8x4xbf16> to vector<2x8x1x8x4xbf16>
      %66 = vector.shape_cast %65 : vector<2x8x1x8x4xbf16> to vector<2x8x8x4xbf16>
      %c0_60 = arith.constant 0 : index
      %c0_61 = arith.constant 0 : index
      %c1_62 = arith.constant 1 : index
      %c0_63 = arith.constant 0 : index
      %c0_64 = arith.constant 0 : index
      %67 = vector.load %arg11[%c0_60, %c0_61, %c1_62, %c0_63, %c0_64] : memref<2x2x9x8x12xbf16, #tpu.memory_space<vmem>>, vector<1x2x8x8x4xbf16>
      %68 = vector.shape_cast %67 : vector<1x2x8x8x4xbf16> to vector<2x8x8x4xbf16>
      %69 = vector.shape_cast %62 : vector<2x8x8x4xbf16> to vector<1x2x8x8x4xbf16>
      tpu.vector_store %arg11[%c0_60, %c0_61, %c1_62, %c0_63, %c0_64], %69 {strides = array<i32>} : memref<2x2x9x8x12xbf16, #tpu.memory_space<vmem>>, vector<1x2x8x8x4xbf16>,
      %70 = vector.extract_strided_slice %66 {offsets = [0, 0, 0, 0], sizes = [2, 8, 7, 4], strides = [1, 1, 1, 1]} : vector<2x8x8x4xbf16> to vector<2x8x7x4xbf16>
      %c0_65 = arith.constant 0 : index
      %c0_66 = arith.constant 0 : index
      %c1_67 = arith.constant 1 : index
      %c1_68 = arith.constant 1 : index
      %c4 = arith.constant 4 : index
      %71 = vector.load %arg11[%c0_65, %c0_66, %c1_67, %c1_68, %c4] : memref<2x2x9x8x12xbf16, #tpu.memory_space<vmem>>, vector<1x2x8x7x4xbf16>
      %72 = vector.shape_cast %71 : vector<1x2x8x7x4xbf16> to vector<2x8x7x4xbf16>
      %73 = vector.shape_cast %70 : vector<2x8x7x4xbf16> to vector<1x2x8x7x4xbf16>
      tpu.vector_store %arg11[%c0_65, %c0_66, %c1_67, %c1_68, %c4], %73 {strides = array<i32>} : memref<2x2x9x8x12xbf16, #tpu.memory_space<vmem>>, vector<1x2x8x7x4xbf16>,
      %c0_69 = arith.constant 0 : index
      %c0_70 = arith.constant 0 : index
      %c1_71 = arith.constant 1 : index
      %c0_72 = arith.constant 0 : index
      %c8 = arith.constant 8 : index
      %74 = vector.load %arg11[%c0_69, %c0_70, %c1_71, %c0_72, %c8] : memref<2x2x9x8x12xbf16, #tpu.memory_space<vmem>>, vector<1x2x8x8x4xbf16>
      %75 = vector.shape_cast %74 : vector<1x2x8x8x4xbf16> to vector<2x8x8x4xbf16>
      %76 = vector.shape_cast %66 : vector<2x8x8x4xbf16> to vector<1x2x8x8x4xbf16>
      tpu.vector_store %arg11[%c0_69, %c0_70, %c1_71, %c0_72, %c8], %76 {strides = array<i32>} : memref<2x2x9x8x12xbf16, #tpu.memory_space<vmem>>, vector<1x2x8x8x4xbf16>,
      %c1_73 = arith.constant 1 : index
      %c0_74 = arith.constant 0 : index
      %c0_75 = arith.constant 0 : index
      %c0_76 = arith.constant 0 : index
      %c0_77 = arith.constant 0 : index
      %77 = vector.load %arg11[%c1_73, %c0_74, %c0_75, %c0_76, %c0_77] : memref<2x2x9x8x12xbf16, #tpu.memory_space<vmem>>, vector<1x2x8x8x4xbf16>
      %78 = vector.shape_cast %77 : vector<1x2x8x8x4xbf16> to vector<2x8x8x4xbf16>
      %79 = vector.shape_cast %60 : vector<2x8x8x4xbf16> to vector<1x2x8x8x4xbf16>
      tpu.vector_store %arg11[%c1_73, %c0_74, %c0_75, %c0_76, %c0_77], %79 {strides = array<i32>} : memref<2x2x9x8x12xbf16, #tpu.memory_space<vmem>>, vector<1x2x8x8x4xbf16>,
      %80 = vector.extract_strided_slice %64 {offsets = [0, 0, 0, 0], sizes = [2, 8, 7, 4], strides = [1, 1, 1, 1]} : vector<2x8x8x4xbf16> to vector<2x8x7x4xbf16>
      %c1_78 = arith.constant 1 : index
      %c0_79 = arith.constant 0 : index
      %c0_80 = arith.constant 0 : index
      %c1_81 = arith.constant 1 : index
      %c4_82 = arith.constant 4 : index
      %81 = vector.load %arg11[%c1_78, %c0_79, %c0_80, %c1_81, %c4_82] : memref<2x2x9x8x12xbf16, #tpu.memory_space<vmem>>, vector<1x2x8x7x4xbf16>
      %82 = vector.shape_cast %81 : vector<1x2x8x7x4xbf16> to vector<2x8x7x4xbf16>
      %83 = vector.shape_cast %80 : vector<2x8x7x4xbf16> to vector<1x2x8x7x4xbf16>
      tpu.vector_store %arg11[%c1_78, %c0_79, %c0_80, %c1_81, %c4_82], %83 {strides = array<i32>} : memref<2x2x9x8x12xbf16, #tpu.memory_space<vmem>>, vector<1x2x8x7x4xbf16>,
      %c1_83 = arith.constant 1 : index
      %c0_84 = arith.constant 0 : index
      %c0_85 = arith.constant 0 : index
      %c0_86 = arith.constant 0 : index
      %c8_87 = arith.constant 8 : index
      %84 = vector.load %arg11[%c1_83, %c0_84, %c0_85, %c0_86, %c8_87] : memref<2x2x9x8x12xbf16, #tpu.memory_space<vmem>>, vector<1x2x8x8x4xbf16>
      %85 = vector.shape_cast %84 : vector<1x2x8x8x4xbf16> to vector<2x8x8x4xbf16>
      %86 = vector.shape_cast %64 : vector<2x8x8x4xbf16> to vector<1x2x8x8x4xbf16>
      tpu.vector_store %arg11[%c1_83, %c0_84, %c0_85, %c0_86, %c8_87], %86 {strides = array<i32>} : memref<2x2x9x8x12xbf16, #tpu.memory_space<vmem>>, vector<1x2x8x8x4xbf16>,
    } else {
    }
    %c0 = arith.constant 0 : index
    %c0_1 = arith.constant 0 : index
    %c0_2 = arith.constant 0 : index
    %c0_3 = arith.constant 0 : index
    %c0_4 = arith.constant 0 : index
    %3 = vector.load %arg11[%c0, %c0_1, %c0_2, %c0_3, %c0_4] : memref<2x2x9x8x12xbf16, #tpu.memory_space<vmem>>, vector<1x2x8x8x12xbf16>
    %4 = vector.shape_cast %3 : vector<1x2x8x8x12xbf16> to vector<2x8x8x12xbf16>
    %5 = vector.shape_cast %4 : vector<2x8x8x12xbf16> to vector<128x12xbf16>
    %c0_5 = arith.constant 0 : index
    %c0_6 = arith.constant 0 : index
    %c0_7 = arith.constant 0 : index
    %6 = vector.load %arg3[%c0_5, %c0_6, %c0_7] : memref<3x12x8xbf16, #tpu.memory_space<vmem>>, vector<1x12x8xbf16>
    %7 = vector.shape_cast %6 : vector<1x12x8xbf16> to vector<12x8xbf16>
    %cst = arith.constant dense<0.000000e+00> : vector<128x8xf32>
    %8 = tpu.matmul %5, %7, %cst {dimension_numbers = #tpu.dot_dimension_numbers<[1], [0], [0], [1], [0, 0, 1, 1], [], []>} : vector<128x12xbf16>, vector<12x8xbf16>, vector<128x8xf32> -> vector<128x8xf32>
    %c1 = arith.constant 1 : index
    %c0_8 = arith.constant 0 : index
    %c0_9 = arith.constant 0 : index
    %c0_10 = arith.constant 0 : index
    %c0_11 = arith.constant 0 : index
    %9 = vector.load %arg11[%c1, %c0_8, %c0_9, %c0_10, %c0_11] : memref<2x2x9x8x12xbf16, #tpu.memory_space<vmem>>, vector<1x2x8x8x12xbf16>
    %10 = vector.shape_cast %9 : vector<1x2x8x8x12xbf16> to vector<2x8x8x12xbf16>
    %11 = vector.shape_cast %10 : vector<2x8x8x12xbf16> to vector<128x12xbf16>
    %c1_12 = arith.constant 1 : index
    %c0_13 = arith.constant 0 : index
    %c0_14 = arith.constant 0 : index
    %12 = vector.load %arg3[%c1_12, %c0_13, %c0_14] : memref<3x12x8xbf16, #tpu.memory_space<vmem>>, vector<1x12x8xbf16>
    %13 = vector.shape_cast %12 : vector<1x12x8xbf16> to vector<12x8xbf16>
    %cst_15 = arith.constant dense<0.000000e+00> : vector<128x8xf32>
    %14 = tpu.matmul %11, %13, %cst_15 {dimension_numbers = #tpu.dot_dimension_numbers<[1], [0], [0], [1], [0, 0, 1, 1], [], []>} : vector<128x12xbf16>, vector<12x8xbf16>, vector<128x8xf32> -> vector<128x8xf32>
    %15 = arith.addf %8, %14 : vector<128x8xf32>
    %c0_16 = arith.constant 0 : index
    %c0_17 = arith.constant 0 : index
    %c1_18 = arith.constant 1 : index
    %c0_19 = arith.constant 0 : index
    %c0_20 = arith.constant 0 : index
    %16 = vector.load %arg11[%c0_16, %c0_17, %c1_18, %c0_19, %c0_20] : memref<2x2x9x8x12xbf16, #tpu.memory_space<vmem>>, vector<1x2x8x8x12xbf16>
    %17 = vector.shape_cast %16 : vector<1x2x8x8x12xbf16> to vector<2x8x8x12xbf16>
    %18 = vector.shape_cast %17 : vector<2x8x8x12xbf16> to vector<128x12xbf16>
    %c2 = arith.constant 2 : index
    %c0_21 = arith.constant 0 : index
    %c0_22 = arith.constant 0 : index
    %19 = vector.load %arg3[%c2, %c0_21, %c0_22] : memref<3x12x8xbf16, #tpu.memory_space<vmem>>, vector<1x12x8xbf16>
    %20 = vector.shape_cast %19 : vector<1x12x8xbf16> to vector<12x8xbf16>
    %cst_23 = arith.constant dense<0.000000e+00> : vector<128x8xf32>
    %21 = tpu.matmul %18, %20, %cst_23 {dimension_numbers = #tpu.dot_dimension_numbers<[1], [0], [0], [1], [0, 0, 1, 1], [], []>} : vector<128x12xbf16>, vector<12x8xbf16>, vector<128x8xf32> -> vector<128x8xf32>
    %22 = arith.addf %15, %21 : vector<128x8xf32>
    %c0_24 = arith.constant 0 : index
    %c0_25 = arith.constant 0 : index
    %23 = vector.load %arg7[%c0_24, %c0_25] : memref<1x8xf32, #tpu.memory_space<vmem>>, vector<1x8xf32>
    %24 = vector.broadcast %23 : vector<1x8xf32> to vector<128x8xf32>
    %25 = arith.mulf %22, %24 : vector<128x8xf32>
    %c0_26 = arith.constant 0 : index
    %c0_27 = arith.constant 0 : index
    %26 = vector.load %arg8[%c0_26, %c0_27] : memref<1x8xf32, #tpu.memory_space<vmem>>, vector<1x8xf32>
    %27 = vector.broadcast %26 : vector<1x8xf32> to vector<128x8xf32>
    %28 = arith.addf %25, %27 : vector<128x8xf32>
    %cst_28 = arith.constant 0.000000e+00 : f32
    %29 = vector.broadcast %cst_28 : f32 to vector<128x8xf32>
    %30 = arith.maximumf %28, %29 : vector<128x8xf32>
    %31 = vector.shape_cast %30 : vector<128x8xf32> to vector<2x8x8x8xf32>
    %32 = arith.truncf %31 : vector<2x8x8x8xf32> to vector<2x8x8x8xbf16>
    %c0_29 = arith.constant 0 : index
    %c0_30 = arith.constant 0 : index
    %c0_31 = arith.constant 0 : index
    %c0_32 = arith.constant 0 : index
    %33 = vector.load %arg9[%c0_29, %c0_30, %c0_31, %c0_32] : memref<2x8x8x8xbf16, #tpu.memory_space<vmem>>, vector<2x8x8x8xbf16>
    tpu.vector_store %arg9[%c0_29, %c0_30, %c0_31, %c0_32], %32 {strides = array<i32>} : memref<2x8x8x8xbf16, #tpu.memory_space<vmem>>, vector<2x8x8x8xbf16>,
    %c1_33 = arith.constant 1 : index
    %c0_34 = arith.constant 0 : index
    %c0_35 = arith.constant 0 : index
    %c0_36 = arith.constant 0 : index
    %c0_37 = arith.constant 0 : index
    %34 = vector.load %arg11[%c1_33, %c0_34, %c0_35, %c0_36, %c0_37] : memref<2x2x9x8x12xbf16, #tpu.memory_space<vmem>>, vector<1x2x8x8x4xbf16>
    %35 = vector.shape_cast %34 : vector<1x2x8x8x4xbf16> to vector<2x8x8x4xbf16>
    %36 = vector.shape_cast %35 : vector<2x8x8x4xbf16> to vector<128x4xbf16>
    %c0_38 = arith.constant 0 : index
    %c0_39 = arith.constant 0 : index
    %37 = vector.load %arg4[%c0_38, %c0_39] : memref<4x8xbf16, #tpu.memory_space<vmem>>, vector<4x8xbf16>
    %cst_40 = arith.constant dense<0.000000e+00> : vector<128x8xf32>
    %38 = tpu.matmul %36, %37, %cst_40 {dimension_numbers = #tpu.dot_dimension_numbers<[1], [0], [0], [1], [0, 0, 1, 1], [], []>} : vector<128x4xbf16>, vector<4x8xbf16>, vector<128x8xf32> -> vector<128x8xf32>
    %39 = vector.shape_cast %38 : vector<128x8xf32> to vector<2x8x8x8xf32>
    %c0_41 = arith.constant 0 : index
    %c0_42 = arith.constant 0 : index
    %c0_43 = arith.constant 0 : index
    %c0_44 = arith.constant 0 : index
    %40 = vector.load %arg10[%c0_41, %c0_42, %c0_43, %c0_44] : memref<2x8x8x8xf32, #tpu.memory_space<vmem>>, vector<2x8x8x8xf32>
    tpu.vector_store %arg10[%c0_41, %c0_42, %c0_43, %c0_44], %39 {strides = array<i32>} : memref<2x8x8x8xf32, #tpu.memory_space<vmem>>, vector<2x8x8x8xf32>,
    return
  }
  func.func @transform_0(%arg0: i32, %arg1: i32) -> (i32, i32, i32, i32) {
    %c0_i32 = arith.constant 0 : i32
    %c0_i32_0 = arith.constant 0 : i32
    %c0_i32_1 = arith.constant 0 : i32
    %c0_i32_2 = arith.constant 0 : i32
    return %arg0, %c0_i32, %c0_i32_0, %c0_i32_1 : i32, i32, i32, i32
  }
  func.func @transform_1(%arg0: i32, %arg1: i32) -> (i32, i32, i32) {
    %c0_i32 = arith.constant 0 : i32
    %c0_i32_0 = arith.constant 0 : i32
    %c0_i32_1 = arith.constant 0 : i32
    return %c0_i32, %c0_i32_0, %arg1 : i32, i32, i32
  }
  func.func @transform_2(%arg0: i32, %arg1: i32) -> (i32, i32) {
    %c0_i32 = arith.constant 0 : i32
    %c0_i32_0 = arith.constant 0 : i32
    return %c0_i32, %arg1 : i32, i32
  }
  func.func @transform_3(%arg0: i32, %arg1: i32) -> (i32, i32) {
    %c0_i32 = arith.constant 0 : i32
    %c0_i32_0 = arith.constant 0 : i32
    %c0_i32_1 = arith.constant 0 : i32
    return %c0_i32, %c0_i32_0 : i32, i32
  }
  func.func @transform_4(%arg0: i32, %arg1: i32) -> (i32, i32) {
    %c0_i32 = arith.constant 0 : i32
    %c0_i32_0 = arith.constant 0 : i32
    %c0_i32_1 = arith.constant 0 : i32
    return %c0_i32, %c0_i32_0 : i32, i32
  }
  func.func @transform_5(%arg0: i32, %arg1: i32) -> (i32, i32) {
    %c0_i32 = arith.constant 0 : i32
    %c0_i32_0 = arith.constant 0 : i32
    return %c0_i32, %arg1 : i32, i32
  }
  func.func @transform_6(%arg0: i32, %arg1: i32) -> (i32, i32) {
    %c0_i32 = arith.constant 0 : i32
    %c0_i32_0 = arith.constant 0 : i32
    return %c0_i32, %arg1 : i32, i32
  }
  func.func @transform_7(%arg0: i32, %arg1: i32) -> (i32, i32, i32, i32) {
    %c0_i32 = arith.constant 0 : i32
    %c0_i32_0 = arith.constant 0 : i32
    %c0_i32_1 = arith.constant 0 : i32
    return %arg0, %c0_i32, %c0_i32_0, %arg1 : i32, i32, i32, i32
  }
  func.func @transform_8(%arg0: i32, %arg1: i32) -> (i32, i32, i32, i32) {
    %c0_i32 = arith.constant 0 : i32
    %c0_i32_0 = arith.constant 0 : i32
    %c0_i32_1 = arith.constant 0 : i32
    return %arg0, %c0_i32, %c0_i32_0, %arg1 : i32, i32, i32, i32
  }
}

module attributes {stable_mosaic.version = 11 : i64} {
  func.func @_conv2_kernel(%arg0: i32, %arg1: i32, %arg2: memref<2x8x8x8xbf16, #tpu.memory_space<vmem>>, %arg3: memref<3x24x8xbf16, #tpu.memory_space<vmem>>, %arg4: memref<2x8x8x8xf32, #tpu.memory_space<vmem>>, %arg5: memref<2x8x8x8xf32, #tpu.memory_space<vmem>>, %arg6: memref<2x10x8x24xbf16, #tpu.memory_space<vmem>>) attributes {dimension_semantics = [#tpu.dimension_semantics<parallel>, #tpu.dimension_semantics<arbitrary>], iteration_bounds = array<i64: 1, 1>, scalar_prefetch = 0 : i64, scratch_operands = 1 : i64, tpu.core_type = #tpu.core_type<tc>, window_params = [{transform_indices = @transform_0, window_bounds = array<i64: 2, 8, 8, 8>}, {transform_indices = @transform_1, window_bounds = array<i64: 3, 24, 8>}, {transform_indices = @transform_2, window_bounds = array<i64: 2, 8, 8, 8>}, {transform_indices = @transform_3, window_bounds = array<i64: 2, 8, 8, 8>}]} {
    %c0_i32 = arith.constant 0 : i32
    %0 = arith.cmpi eq, %arg1, %c0_i32 : i32
    %1 = arith.extui %0 : i1 to i32
    %c0_i32_0 = arith.constant 0 : i32
    %2 = arith.cmpi ne, %1, %c0_i32_0 : i32
    scf.if %2 {
      %c0_29 = arith.constant 0 : index
      %c0_30 = arith.constant 0 : index
      %c0_31 = arith.constant 0 : index
      %c0_32 = arith.constant 0 : index
      %24 = vector.load %arg2[%c0_29, %c0_30, %c0_31, %c0_32] : memref<2x8x8x8xbf16, #tpu.memory_space<vmem>>, vector<2x8x8x8xbf16>
      %cst_33 = arith.constant 0.000000e+00 : bf16
      %25 = vector.broadcast %cst_33 : bf16 to vector<2x10x8x24xbf16>
      %c0_34 = arith.constant 0 : index
      %c0_35 = arith.constant 0 : index
      %c0_36 = arith.constant 0 : index
      %c0_37 = arith.constant 0 : index
      %26 = vector.load %arg6[%c0_34, %c0_35, %c0_36, %c0_37] : memref<2x10x8x24xbf16, #tpu.memory_space<vmem>>, vector<2x10x8x24xbf16>
      tpu.vector_store %arg6[%c0_34, %c0_35, %c0_36, %c0_37], %25 {strides = array<i32>} : memref<2x10x8x24xbf16, #tpu.memory_space<vmem>>, vector<2x10x8x24xbf16>,
      %c0_38 = arith.constant 0 : index
      %c1_39 = arith.constant 1 : index
      %c0_40 = arith.constant 0 : index
      %c0_41 = arith.constant 0 : index
      %27 = vector.load %arg6[%c0_38, %c1_39, %c0_40, %c0_41] : memref<2x10x8x24xbf16, #tpu.memory_space<vmem>>, vector<2x8x8x8xbf16>
      tpu.vector_store %arg6[%c0_38, %c1_39, %c0_40, %c0_41], %24 {strides = array<i32>} : memref<2x10x8x24xbf16, #tpu.memory_space<vmem>>, vector<2x8x8x8xbf16>,
      %28 = vector.extract_strided_slice %24 {offsets = [0, 0, 0, 0], sizes = [2, 8, 7, 8], strides = [1, 1, 1, 1]} : vector<2x8x8x8xbf16> to vector<2x8x7x8xbf16>
      %c0_42 = arith.constant 0 : index
      %c1_43 = arith.constant 1 : index
      %c1_44 = arith.constant 1 : index
      %c8 = arith.constant 8 : index
      %29 = vector.load %arg6[%c0_42, %c1_43, %c1_44, %c8] : memref<2x10x8x24xbf16, #tpu.memory_space<vmem>>, vector<2x8x7x8xbf16>
      tpu.vector_store %arg6[%c0_42, %c1_43, %c1_44, %c8], %28 {strides = array<i32>} : memref<2x10x8x24xbf16, #tpu.memory_space<vmem>>, vector<2x8x7x8xbf16>,
      %30 = vector.extract_strided_slice %24 {offsets = [0, 0, 1, 0], sizes = [2, 8, 7, 8], strides = [1, 1, 1, 1]} : vector<2x8x8x8xbf16> to vector<2x8x7x8xbf16>
      %c0_45 = arith.constant 0 : index
      %c1_46 = arith.constant 1 : index
      %c0_47 = arith.constant 0 : index
      %c16 = arith.constant 16 : index
      %31 = vector.load %arg6[%c0_45, %c1_46, %c0_47, %c16] : memref<2x10x8x24xbf16, #tpu.memory_space<vmem>>, vector<2x8x7x8xbf16>
      tpu.vector_store %arg6[%c0_45, %c1_46, %c0_47, %c16], %30 {strides = array<i32>} : memref<2x10x8x24xbf16, #tpu.memory_space<vmem>>, vector<2x8x7x8xbf16>,
    } else {
    }
    %c0 = arith.constant 0 : index
    %c0_1 = arith.constant 0 : index
    %c0_2 = arith.constant 0 : index
    %c0_3 = arith.constant 0 : index
    %3 = vector.load %arg6[%c0, %c0_1, %c0_2, %c0_3] : memref<2x10x8x24xbf16, #tpu.memory_space<vmem>>, vector<2x8x8x24xbf16>
    %4 = vector.shape_cast %3 : vector<2x8x8x24xbf16> to vector<128x24xbf16>
    %c0_4 = arith.constant 0 : index
    %c0_5 = arith.constant 0 : index
    %c0_6 = arith.constant 0 : index
    %5 = vector.load %arg3[%c0_4, %c0_5, %c0_6] : memref<3x24x8xbf16, #tpu.memory_space<vmem>>, vector<1x24x8xbf16>
    %6 = vector.shape_cast %5 : vector<1x24x8xbf16> to vector<24x8xbf16>
    %cst = arith.constant dense<0.000000e+00> : vector<128x8xf32>
    %7 = tpu.matmul %4, %6, %cst {dimension_numbers = #tpu.dot_dimension_numbers<[1], [0], [0], [1], [0, 0, 1, 1], [], []>} : vector<128x24xbf16>, vector<24x8xbf16>, vector<128x8xf32> -> vector<128x8xf32>
    %c0_7 = arith.constant 0 : index
    %c1 = arith.constant 1 : index
    %c0_8 = arith.constant 0 : index
    %c0_9 = arith.constant 0 : index
    %8 = vector.load %arg6[%c0_7, %c1, %c0_8, %c0_9] : memref<2x10x8x24xbf16, #tpu.memory_space<vmem>>, vector<2x8x8x24xbf16>
    %9 = vector.shape_cast %8 : vector<2x8x8x24xbf16> to vector<128x24xbf16>
    %c1_10 = arith.constant 1 : index
    %c0_11 = arith.constant 0 : index
    %c0_12 = arith.constant 0 : index
    %10 = vector.load %arg3[%c1_10, %c0_11, %c0_12] : memref<3x24x8xbf16, #tpu.memory_space<vmem>>, vector<1x24x8xbf16>
    %11 = vector.shape_cast %10 : vector<1x24x8xbf16> to vector<24x8xbf16>
    %cst_13 = arith.constant dense<0.000000e+00> : vector<128x8xf32>
    %12 = tpu.matmul %9, %11, %cst_13 {dimension_numbers = #tpu.dot_dimension_numbers<[1], [0], [0], [1], [0, 0, 1, 1], [], []>} : vector<128x24xbf16>, vector<24x8xbf16>, vector<128x8xf32> -> vector<128x8xf32>
    %13 = arith.addf %7, %12 : vector<128x8xf32>
    %c0_14 = arith.constant 0 : index
    %c2 = arith.constant 2 : index
    %c0_15 = arith.constant 0 : index
    %c0_16 = arith.constant 0 : index
    %14 = vector.load %arg6[%c0_14, %c2, %c0_15, %c0_16] : memref<2x10x8x24xbf16, #tpu.memory_space<vmem>>, vector<2x8x8x24xbf16>
    %15 = vector.shape_cast %14 : vector<2x8x8x24xbf16> to vector<128x24xbf16>
    %c2_17 = arith.constant 2 : index
    %c0_18 = arith.constant 0 : index
    %c0_19 = arith.constant 0 : index
    %16 = vector.load %arg3[%c2_17, %c0_18, %c0_19] : memref<3x24x8xbf16, #tpu.memory_space<vmem>>, vector<1x24x8xbf16>
    %17 = vector.shape_cast %16 : vector<1x24x8xbf16> to vector<24x8xbf16>
    %cst_20 = arith.constant dense<0.000000e+00> : vector<128x8xf32>
    %18 = tpu.matmul %15, %17, %cst_20 {dimension_numbers = #tpu.dot_dimension_numbers<[1], [0], [0], [1], [0, 0, 1, 1], [], []>} : vector<128x24xbf16>, vector<24x8xbf16>, vector<128x8xf32> -> vector<128x8xf32>
    %19 = arith.addf %13, %18 : vector<128x8xf32>
    %20 = vector.shape_cast %19 : vector<128x8xf32> to vector<2x8x8x8xf32>
    %c0_21 = arith.constant 0 : index
    %c0_22 = arith.constant 0 : index
    %c0_23 = arith.constant 0 : index
    %c0_24 = arith.constant 0 : index
    %21 = vector.load %arg4[%c0_21, %c0_22, %c0_23, %c0_24] : memref<2x8x8x8xf32, #tpu.memory_space<vmem>>, vector<2x8x8x8xf32>
    %22 = arith.addf %20, %21 : vector<2x8x8x8xf32>
    %c0_25 = arith.constant 0 : index
    %c0_26 = arith.constant 0 : index
    %c0_27 = arith.constant 0 : index
    %c0_28 = arith.constant 0 : index
    %23 = vector.load %arg5[%c0_25, %c0_26, %c0_27, %c0_28] : memref<2x8x8x8xf32, #tpu.memory_space<vmem>>, vector<2x8x8x8xf32>
    tpu.vector_store %arg5[%c0_25, %c0_26, %c0_27, %c0_28], %22 {strides = array<i32>} : memref<2x8x8x8xf32, #tpu.memory_space<vmem>>, vector<2x8x8x8xf32>,
    return
  }
  func.func @transform_0(%arg0: i32, %arg1: i32) -> (i32, i32, i32, i32) {
    %c0_i32 = arith.constant 0 : i32
    %c0_i32_0 = arith.constant 0 : i32
    %c0_i32_1 = arith.constant 0 : i32
    %c0_i32_2 = arith.constant 0 : i32
    return %arg0, %c0_i32, %c0_i32_0, %c0_i32_1 : i32, i32, i32, i32
  }
  func.func @transform_1(%arg0: i32, %arg1: i32) -> (i32, i32, i32) {
    %c0_i32 = arith.constant 0 : i32
    %c0_i32_0 = arith.constant 0 : i32
    %c0_i32_1 = arith.constant 0 : i32
    return %c0_i32, %c0_i32_0, %arg1 : i32, i32, i32
  }
  func.func @transform_2(%arg0: i32, %arg1: i32) -> (i32, i32, i32, i32) {
    %c0_i32 = arith.constant 0 : i32
    %c0_i32_0 = arith.constant 0 : i32
    %c0_i32_1 = arith.constant 0 : i32
    return %arg0, %c0_i32, %c0_i32_0, %arg1 : i32, i32, i32, i32
  }
  func.func @transform_3(%arg0: i32, %arg1: i32) -> (i32, i32, i32, i32) {
    %c0_i32 = arith.constant 0 : i32
    %c0_i32_0 = arith.constant 0 : i32
    %c0_i32_1 = arith.constant 0 : i32
    return %arg0, %c0_i32, %c0_i32_0, %arg1 : i32, i32, i32, i32
  }
}

</mosaic_0001>

<llo_original>
// kernel: tile.13
$region0: #{tile.13}
  #allocation0 [shape = 's32[1]{0}', space=sflag, size = 0x4, scoped, tag = 'scoped memory for tile.13']
  %s0 = inlined_call_operand.vmem [shape: f32[4], index: 0, kind: input, shape index: {}]
  %s1 = inlined_call_operand.vmem [shape: f32[2,4], index: 1, kind: output, shape index: {}]
  // Predicated region
  $region2: #{tile.13} parent=0 // pred_check
    _
  $region3: #{tile.13} parent=0 // pred_check_branch
    %3 = sbr.rel (0) target = $region5
  $region4: #{tile.13} parent=0 // pred_region
    _
  $region5: #{tile.13} parent=0 // pred_fallthru
    _
  %v4 = vld [vmem:[%s0] ss:$0 sm:$0xff]
  %5 = vst [vmem:[%s1] sm:$0x3] %v4

// kernel: tile.14
$region0: #{tile.14}
  %s0 = inlined_call_operand.vmem [shape: f32[2,4], index: 0, kind: input, shape index: {}]
  %s1 = inlined_call_operand.vmem [shape: f32[1,8], index: 1, kind: output, shape index: {}]
  $region1: #{tile.14} parent=0
    #allocation0 [shape = 'u8[4096]{0}', space=vmem, size = 0x1000, scoped, tag = 'scoped mem for output reshape']
    #allocation1 [shape = 'u8[4096]{0}', space=vmem, size = 0x1000, scoped, tag = 'scoped mem for input reshape']
    %s3 = sshll.u32 1, 2
    %s4 = ssub.s32 %s3, 1
    %v5 = vld [vmem:[%s0] sm:%s4]
    %6 = vst [vmem:[#allocation1] sm:%s4] %v5
    %v7 = vld [vmem:[#allocation1] sm:$0x1]
    %vm8 = vcmask 31744
    %9 = vst.msk [vmem:[#allocation0] sm:$0x1] %vm8, %v7
    %s10 = scalar_lea.vmem [#allocation1], 1
    %v11 = vld [vmem:[%s10] sm:$0x1]
    %12 = vrot.lane.b32.xlu0 %v11, 4
    %v13 = vpop.permute.xlu0 %12
    %vm14 = vcmask 64544
    %15 = vst.msk [vmem:[#allocation0] sm:$0x1] %vm14, %v13
    %s17 = sshll.u32 1, 1
    %s18 = ssub.s32 %s17, 1
    %v20 = vld [vmem:[#allocation0] sm:%s18]
    %s21 = sshll.u32 1, 1
    %s22 = ssub.s32 %s21, 1
    %23 = vst [vmem:[%s1] sm:%s22] %v20

// kernel: basic_block_forward.3
$region0: #{basic_block_forward.3}
  #allocation0 [shape = 'u32[]', space=smem, size = 0x4, offset = 0x4, fixed_abs, tag = 'smem constant byte address 0x4 - core index']
  #allocation1 [shape = 'u32[144,128]{1,0:T(1,128)}', space=vmem, size = 0x12000, scoped, tag = 'internal scratch']
  #allocation2 [shape = 'bf16[2,10,8,24]{3,2,1,0:T(8,128)(2,1)}', space=vmem, size = 0xa000, scoped, tag = 'scratch operand']
  %s0 = inlined_call_operand.vmem [shape: bf16[2,8,8,8], index: 0, kind: input, shape index: {}]
  %s1 = inlined_call_operand.vmem [shape: bf16[3,24,8], index: 1, kind: input, shape index: {}]
  %s2 = inlined_call_operand.vmem [shape: f32[2,8,8,8], index: 2, kind: input, shape index: {}, may-alias: {2,3}]
  %s3 = inlined_call_operand.vmem [shape: f32[2,8,8,8], index: 3, kind: output, shape index: {}, may-alias: {2,3}]
  %s4 = sld [smem:[#allocation0]]
  $region26: #{basic_block_forward.3} parent=0
    _
  %s6 = ssub.s32 1, %s4
  %s7 = scalar_select 0, %s6, %s4
  // Predicated region
  $region2: #{basic_block_forward.3} parent=0 // pred_check
    _
  $region3: #{basic_block_forward.3} parent=0 // pred_check_branch
    %9 = sbr.rel (0) target = $region5
  $region4: #{basic_block_forward.3} parent=0 // pred_region
    _
  $region5: #{basic_block_forward.3} parent=0 // pred_fallthru
    _
  // Predicated region
  $region6: #{basic_block_forward.3} parent=0 // pred_check
    _
  $region7: #{basic_block_forward.3} parent=0 // pred_check_branch
    %11 = sbr.rel (0) target = $region9
  $region8: #{basic_block_forward.3} parent=0 // pred_region
    _
  $region9: #{basic_block_forward.3} parent=0 // pred_fallthru
    _
  // Predicated region
  $region10: #{basic_block_forward.3} parent=0 // pred_check
    _
  $region11: #{basic_block_forward.3} parent=0 // pred_check_branch
    %13 = sbr.rel (0) target = $region13
  $region12: #{basic_block_forward.3} parent=0 // pred_region
    _
  $region13: #{basic_block_forward.3} parent=0 // pred_fallthru
    _
  %p15 = scmp.eq.s32.totalorder 0, 0
  // Predicated region
  $region14: #{basic_block_forward.3} parent=0 // pred_check
    %p16 = pneg %p15
  $region15: #{basic_block_forward.3} parent=0 // pred_check_branch
    %18 = sbr.rel (%p16) target = $region17
  $region16: #{basic_block_forward.3} parent=0 // pred_region
    %v19 = vld [vmem:[%s0] sm:$0xf]
    %v20 = vld [vmem:[%s0 + $0x4] sm:$0xf]
    %v21 = vld [vmem:[%s0 + $0x8] sm:$0xf]
    %v22 = vld [vmem:[%s0 + $0xc] sm:$0xf]
    %v23 = vld [vmem:[%s0 + $0x10] sm:$0xf]
    %v24 = vld [vmem:[%s0 + $0x14] sm:$0xf]
    %v25 = vld [vmem:[%s0 + $0x18] sm:$0xf]
    %v26 = vld [vmem:[%s0 + $0x1c] sm:$0xf]
    %v27 = vld [vmem:[%s0 + $0x20] sm:$0xf]
    %v28 = vld [vmem:[%s0 + $0x24] sm:$0xf]
    %v29 = vld [vmem:[%s0 + $0x28] sm:$0xf]
    %v30 = vld [vmem:[%s0 + $0x2c] sm:$0xf]
    %v31 = vld [vmem:[%s0 + $0x30] sm:$0xf]
    %v32 = vld [vmem:[%s0 + $0x34] sm:$0xf]
    %v33 = vld [vmem:[%s0 + $0x38] sm:$0xf]
    %v34 = vld [vmem:[%s0 + $0x3c] sm:$0xf]
    %vm35 = vcmask 191488
    %36 = vst.msk [vmem:[#allocation2] sm:$0xf] %vm35, 0
    %37 = vst.msk [vmem:[#allocation2 + $0x4] sm:$0xf] %vm35, 0
    %38 = vst.msk [vmem:[#allocation2 + $0x8] sm:$0xf] %vm35, 0
    %39 = vst.msk [vmem:[#allocation2 + $0xc] sm:$0xf] %vm35, 0
    %40 = vst.msk [vmem:[#allocation2 + $0x10] sm:$0xf] %vm35, 0
    %41 = vst.msk [vmem:[#allocation2 + $0x14] sm:$0xf] %vm35, 0
    %42 = vst.msk [vmem:[#allocation2 + $0x18] sm:$0xf] %vm35, 0
    %43 = vst.msk [vmem:[#allocation2 + $0x1c] sm:$0xf] %vm35, 0
    %44 = vst.msk [vmem:[#allocation2 + $0x20] sm:$0xf] %vm35, 0
    %45 = vst.msk [vmem:[#allocation2 + $0x24] sm:$0xf] %vm35, 0
    %46 = vst.msk [vmem:[#allocation2 + $0x28] sm:$0xf] %vm35, 0
    %47 = vst.msk [vmem:[#allocation2 + $0x2c] sm:$0xf] %vm35, 0
    %48 = vst.msk [vmem:[#allocation2 + $0x30] sm:$0xf] %vm35, 0
    %49 = vst.msk [vmem:[#allocation2 + $0x34] sm:$0xf] %vm35, 0
    %50 = vst.msk [vmem:[#allocation2 + $0x38] sm:$0xf] %vm35, 0
    %51 = vst.msk [vmem:[#allocation2 + $0x3c] sm:$0xf] %vm35, 0
    %52 = vst.msk [vmem:[#allocation2 + $0x40] sm:$0xf] %vm35, 0
    %53 = vst.msk [vmem:[#allocation2 + $0x44] sm:$0xf] %vm35, 0
    %54 = vst.msk [vmem:[#allocation2 + $0x48] sm:$0xf] %vm35, 0
    %55 = vst.msk [vmem:[#allocation2 + $0x4c] sm:$0xf] %vm35, 0
    %s56 = scalar_lea.vmem [#allocation2], 4
    %vm57 = vcmask 60416
    %58 = vst.msk [vmem:[%s56] sm:$0xf] %vm57, %v19
    %59 = vst.msk [vmem:[%s56 + $0x4] sm:$0xf] %vm57, %v20
    %60 = vst.msk [vmem:[%s56 + $0x8] sm:$0xf] %vm57, %v21
    %61 = vst.msk [vmem:[%s56 + $0xc] sm:$0xf] %vm57, %v22
    %62 = vst.msk [vmem:[%s56 + $0x10] sm:$0xf] %vm57, %v23
    %63 = vst.msk [vmem:[%s56 + $0x14] sm:$0xf] %vm57, %v24
    %64 = vst.msk [vmem:[%s56 + $0x18] sm:$0xf] %vm57, %v25
    %65 = vst.msk [vmem:[%s56 + $0x1c] sm:$0xf] %vm57, %v26
    %66 = vst.msk [vmem:[%s56 + $0x28] sm:$0xf] %vm57, %v27
    %67 = vst.msk [vmem:[%s56 + $0x2c] sm:$0xf] %vm57, %v28
    %68 = vst.msk [vmem:[%s56 + $0x30] sm:$0xf] %vm57, %v29
    %69 = vst.msk [vmem:[%s56 + $0x34] sm:$0xf] %vm57, %v30
    %70 = vst.msk [vmem:[%s56 + $0x38] sm:$0xf] %vm57, %v31
    %71 = vst.msk [vmem:[%s56 + $0x3c] sm:$0xf] %vm57, %v32
    %72 = vst.msk [vmem:[%s56 + $0x40] sm:$0xf] %vm57, %v33
    %73 = vst.msk [vmem:[%s56 + $0x44] sm:$0xf] %vm57, %v34
    %v75 = vshrl.u32 %v19, 16
    %v77 = vrot.slane %v75, 7
    %v78 = vshll.u32 %v19, 16
    %v80 = vor.u32 %v77, %v78
    %v82 = vshrl.u32 %v20, 16
    %v84 = vrot.slane %v82, 7
    %v85 = vshll.u32 %v20, 16
    %v87 = vor.u32 %v84, %v85
    %v89 = vshrl.u32 %v21, 16
    %v91 = vrot.slane %v89, 7
    %v92 = vshll.u32 %v21, 16
    %v94 = vor.u32 %v91, %v92
    %v96 = vshrl.u32 %v22, 16
    %v98 = vrot.slane %v96, 7
    %v99 = vshll.u32 %v22, 16
    %v101 = vor.u32 %v98, %v99
    %v103 = vshrl.u32 %v23, 16
    %v105 = vrot.slane %v103, 7
    %v106 = vshll.u32 %v23, 16
    %v108 = vor.u32 %v105, %v106
    %v110 = vshrl.u32 %v24, 16
    %v112 = vrot.slane %v110, 7
    %v113 = vshll.u32 %v24, 16
    %v115 = vor.u32 %v112, %v113
    %v117 = vshrl.u32 %v25, 16
    %v119 = vrot.slane %v117, 7
    %v120 = vshll.u32 %v25, 16
    %v122 = vor.u32 %v119, %v120
    %v124 = vshrl.u32 %v26, 16
    %v126 = vrot.slane %v124, 7
    %v127 = vshll.u32 %v26, 16
    %v129 = vor.u32 %v126, %v127
    %v131 = vshrl.u32 %v27, 16
    %v133 = vrot.slane %v131, 7
    %v134 = vshll.u32 %v27, 16
    %v136 = vor.u32 %v133, %v134
    %v138 = vshrl.u32 %v28, 16
    %v140 = vrot.slane %v138, 7
    %v141 = vshll.u32 %v28, 16
    %v143 = vor.u32 %v140, %v141
    %v145 = vshrl.u32 %v29, 16
    %v147 = vrot.slane %v145, 7
    %v148 = vshll.u32 %v29, 16
    %v150 = vor.u32 %v147, %v148
    %v152 = vshrl.u32 %v30, 16
    %v154 = vrot.slane %v152, 7
    %v155 = vshll.u32 %v30, 16
    %v157 = vor.u32 %v154, %v155
    %v159 = vshrl.u32 %v31, 16
    %v161 = vrot.slane %v159, 7
    %v162 = vshll.u32 %v31, 16
    %v164 = vor.u32 %v161, %v162
    %v166 = vshrl.u32 %v32, 16
    %v168 = vrot.slane %v166, 7
    %v169 = vshll.u32 %v32, 16
    %v171 = vor.u32 %v168, %v169
    %v173 = vshrl.u32 %v33, 16
    %v175 = vrot.slane %v173, 7
    %v176 = vshll.u32 %v33, 16
    %v178 = vor.u32 %v175, %v176
    %v180 = vshrl.u32 %v34, 16
    %v182 = vrot.slane %v180, 7
    %v183 = vshll.u32 %v34, 16
    %v185 = vor.u32 %v182, %v183
    %186 = vrot.lane.b32.xlu0 %v80, 8
    %v187 = vpop.permute.xlu0 %186
    %188 = vrot.lane.b32.xlu0 %v87, 8
    %v189 = vpop.permute.xlu0 %188
    %190 = vrot.lane.b32.xlu0 %v94, 8
    %v191 = vpop.permute.xlu0 %190
    %192 = vrot.lane.b32.xlu0 %v101, 8
    %v193 = vpop.permute.xlu0 %192
    %194 = vrot.lane.b32.xlu0 %v108, 8
    %v195 = vpop.permute.xlu0 %194
    %196 = vrot.lane.b32.xlu0 %v115, 8
    %v197 = vpop.permute.xlu0 %196
    %198 = vrot.lane.b32.xlu0 %v122, 8
    %v199 = vpop.permute.xlu0 %198
    %200 = vrot.lane.b32.xlu0 %v129, 8
    %v201 = vpop.permute.xlu0 %200
    %202 = vrot.lane.b32.xlu0 %v136, 8
    %v203 = vpop.permute.xlu0 %202
    %204 = vrot.lane.b32.xlu0 %v143, 8
    %v205 = vpop.permute.xlu0 %204
    %206 = vrot.lane.b32.xlu0 %v150, 8
    %v207 = vpop.permute.xlu0 %206
    %208 = vrot.lane.b32.xlu0 %v157, 8
    %v209 = vpop.permute.xlu0 %208
    %210 = vrot.lane.b32.xlu0 %v164, 8
    %v211 = vpop.permute.xlu0 %210
    %212 = vrot.lane.b32.xlu0 %v171, 8
    %v213 = vpop.permute.xlu0 %212
    %214 = vrot.lane.b32.xlu0 %v178, 8
    %v215 = vpop.permute.xlu0 %214
    %216 = vrot.lane.b32.xlu0 %v185, 8
    %v217 = vpop.permute.xlu0 %216
    %vm234 = vcmask 126016
    %vm235 = vsmask.f32 7938
    %vm236 = vmand %vm234, %vm235
    %v237 = vld [vmem:[%s56] sm:$0xf]
    %v238 = vsel %vm236, %v187, %v237
    %239 = vst [vmem:[%s56] sm:$0xf] %v238
    %v240 = vld [vmem:[%s56 + $0x4] sm:$0xf]
    %v241 = vsel %vm236, %v189, %v240
    %242 = vst [vmem:[%s56 + $0x4] sm:$0xf] %v241
    %v243 = vld [vmem:[%s56 + $0x8] sm:$0xf]
    %v244 = vsel %vm236, %v191, %v243
    %245 = vst [vmem:[%s56 + $0x8] sm:$0xf] %v244
    %v246 = vld [vmem:[%s56 + $0xc] sm:$0xf]
    %v247 = vsel %vm236, %v193, %v246
    %248 = vst [vmem:[%s56 + $0xc] sm:$0xf] %v247
    %v249 = vld [vmem:[%s56 + $0x10] sm:$0xf]
    %v250 = vsel %vm236, %v195, %v249
    %251 = vst [vmem:[%s56 + $0x10] sm:$0xf] %v250
    %v252 = vld [vmem:[%s56 + $0x14] sm:$0xf]
    %v253 = vsel %vm236, %v197, %v252
    %254 = vst [vmem:[%s56 + $0x14] sm:$0xf] %v253
    %v255 = vld [vmem:[%s56 + $0x18] sm:$0xf]
    %v256 = vsel %vm236, %v199, %v255
    %257 = vst [vmem:[%s56 + $0x18] sm:$0xf] %v256
    %v258 = vld [vmem:[%s56 + $0x1c] sm:$0xf]
    %v259 = vsel %vm236, %v201, %v258
    %260 = vst [vmem:[%s56 + $0x1c] sm:$0xf] %v259
    %v261 = vld [vmem:[%s56 + $0x28] sm:$0xf]
    %v262 = vsel %vm236, %v203, %v261
    %263 = vst [vmem:[%s56 + $0x28] sm:$0xf] %v262
    %v264 = vld [vmem:[%s56 + $0x2c] sm:$0xf]
    %v265 = vsel %vm236, %v205, %v264
    %266 = vst [vmem:[%s56 + $0x2c] sm:$0xf] %v265
    %v267 = vld [vmem:[%s56 + $0x30] sm:$0xf]
    %v268 = vsel %vm236, %v207, %v267
    %269 = vst [vmem:[%s56 + $0x30] sm:$0xf] %v268
    %v270 = vld [vmem:[%s56 + $0x34] sm:$0xf]
    %v271 = vsel %vm236, %v209, %v270
    %272 = vst [vmem:[%s56 + $0x34] sm:$0xf] %v271
    %v273 = vld [vmem:[%s56 + $0x38] sm:$0xf]
    %v274 = vsel %vm236, %v211, %v273
    %275 = vst [vmem:[%s56 + $0x38] sm:$0xf] %v274
    %v276 = vld [vmem:[%s56 + $0x3c] sm:$0xf]
    %v277 = vsel %vm236, %v213, %v276
    %278 = vst [vmem:[%s56 + $0x3c] sm:$0xf] %v277
    %v279 = vld [vmem:[%s56 + $0x40] sm:$0xf]
    %v280 = vsel %vm236, %v215, %v279
    %281 = vst [vmem:[%s56 + $0x40] sm:$0xf] %v280
    %v282 = vld [vmem:[%s56 + $0x44] sm:$0xf]
    %v283 = vsel %vm236, %v217, %v282
    %284 = vst [vmem:[%s56 + $0x44] sm:$0xf] %v283
    %v285 = vrot.slane %v75, 4
    %v286 = vrot.slane %v78, 5
    %v287 = vor.u32 %v285, %v286
    %v288 = vrot.slane %v287, 4
    %v289 = vrot.slane %v82, 4
    %v290 = vrot.slane %v85, 5
    %v291 = vor.u32 %v289, %v290
    %v292 = vrot.slane %v291, 4
    %v293 = vrot.slane %v89, 4
    %v294 = vrot.slane %v92, 5
    %v295 = vor.u32 %v293, %v294
    %v296 = vrot.slane %v295, 4
    %v297 = vrot.slane %v96, 4
    %v298 = vrot.slane %v99, 5
    %v299 = vor.u32 %v297, %v298
    %v300 = vrot.slane %v299, 4
    %v301 = vrot.slane %v103, 4
    %v302 = vrot.slane %v106, 5
    %v303 = vor.u32 %v301, %v302
    %v304 = vrot.slane %v303, 4
    %v305 = vrot.slane %v110, 4
    %v306 = vrot.slane %v113, 5
    %v307 = vor.u32 %v305, %v306
    %v308 = vrot.slane %v307, 4
    %v309 = vrot.slane %v117, 4
    %v310 = vrot.slane %v120, 5
    %v311 = vor.u32 %v309, %v310
    %v312 = vrot.slane %v311, 4
    %v313 = vrot.slane %v124, 4
    %v314 = vrot.slane %v127, 5
    %v315 = vor.u32 %v313, %v314
    %v316 = vrot.slane %v315, 4
    %v317 = vrot.slane %v131, 4
    %v318 = vrot.slane %v134, 5
    %v319 = vor.u32 %v317, %v318
    %v320 = vrot.slane %v319, 4
    %v321 = vrot.slane %v138, 4
    %v322 = vrot.slane %v141, 5
    %v323 = vor.u32 %v321, %v322
    %v324 = vrot.slane %v323, 4
    %v325 = vrot.slane %v145, 4
    %v326 = vrot.slane %v148, 5
    %v327 = vor.u32 %v325, %v326
    %v328 = vrot.slane %v327, 4
    %v329 = vrot.slane %v152, 4
    %v330 = vrot.slane %v155, 5
    %v331 = vor.u32 %v329, %v330
    %v332 = vrot.slane %v331, 4
    %v333 = vrot.slane %v159, 4
    %v334 = vrot.slane %v162, 5
    %v335 = vor.u32 %v333, %v334
    %v336 = vrot.slane %v335, 4
    %v337 = vrot.slane %v166, 4
    %v338 = vrot.slane %v169, 5
    %v339 = vor.u32 %v337, %v338
    %v340 = vrot.slane %v339, 4
    %v341 = vrot.slane %v173, 4
    %v342 = vrot.slane %v176, 5
    %v343 = vor.u32 %v341, %v342
    %v344 = vrot.slane %v343, 4
    %v345 = vrot.slane %v180, 4
    %v346 = vrot.slane %v183, 5
    %v347 = vor.u32 %v345, %v346
    %v348 = vrot.slane %v347, 4
    %349 = vrot.lane.b32.xlu0 %v288, 16
    %v350 = vpop.permute.xlu0 %349
    %351 = vrot.lane.b32.xlu0 %v292, 16
    %v352 = vpop.permute.xlu0 %351
    %353 = vrot.lane.b32.xlu0 %v296, 16
    %v354 = vpop.permute.xlu0 %353
    %355 = vrot.lane.b32.xlu0 %v300, 16
    %v356 = vpop.permute.xlu0 %355
    %357 = vrot.lane.b32.xlu0 %v304, 16
    %v358 = vpop.permute.xlu0 %357
    %359 = vrot.lane.b32.xlu0 %v308, 16
    %v360 = vpop.permute.xlu0 %359
    %361 = vrot.lane.b32.xlu0 %v312, 16
    %v362 = vpop.permute.xlu0 %361
    %363 = vrot.lane.b32.xlu0 %v316, 16
    %v364 = vpop.permute.xlu0 %363
    %365 = vrot.lane.b32.xlu0 %v320, 16
    %v366 = vpop.permute.xlu0 %365
    %367 = vrot.lane.b32.xlu0 %v324, 16
    %v368 = vpop.permute.xlu0 %367
    %369 = vrot.lane.b32.xlu0 %v328, 16
    %v370 = vpop.permute.xlu0 %369
    %371 = vrot.lane.b32.xlu0 %v332, 16
    %v372 = vpop.permute.xlu0 %371
    %373 = vrot.lane.b32.xlu0 %v336, 16
    %v374 = vpop.permute.xlu0 %373
    %375 = vrot.lane.b32.xlu0 %v340, 16
    %v376 = vpop.permute.xlu0 %375
    %377 = vrot.lane.b32.xlu0 %v344, 16
    %v378 = vpop.permute.xlu0 %377
    %379 = vrot.lane.b32.xlu0 %v348, 16
    %v380 = vpop.permute.xlu0 %379
    %vm397 = vcmask 191616
    %vm398 = vsmask.f32 3328
    %vm399 = vmand %vm397, %vm398
    %v400 = vld [vmem:[%s56] sm:$0xf]
    %v401 = vsel %vm399, %v350, %v400
    %402 = vst [vmem:[%s56] sm:$0xf] %v401
    %v403 = vld [vmem:[%s56 + $0x4] sm:$0xf]
    %v404 = vsel %vm399, %v352, %v403
    %405 = vst [vmem:[%s56 + $0x4] sm:$0xf] %v404
    %v406 = vld [vmem:[%s56 + $0x8] sm:$0xf]
    %v407 = vsel %vm399, %v354, %v406
    %408 = vst [vmem:[%s56 + $0x8] sm:$0xf] %v407
    %v409 = vld [vmem:[%s56 + $0xc] sm:$0xf]
    %v410 = vsel %vm399, %v356, %v409
    %411 = vst [vmem:[%s56 + $0xc] sm:$0xf] %v410
    %v412 = vld [vmem:[%s56 + $0x10] sm:$0xf]
    %v413 = vsel %vm399, %v358, %v412
    %414 = vst [vmem:[%s56 + $0x10] sm:$0xf] %v413
    %v415 = vld [vmem:[%s56 + $0x14] sm:$0xf]
    %v416 = vsel %vm399, %v360, %v415
    %417 = vst [vmem:[%s56 + $0x14] sm:$0xf] %v416
    %v418 = vld [vmem:[%s56 + $0x18] sm:$0xf]
    %v419 = vsel %vm399, %v362, %v418
    %420 = vst [vmem:[%s56 + $0x18] sm:$0xf] %v419
    %v421 = vld [vmem:[%s56 + $0x1c] sm:$0xf]
    %v422 = vsel %vm399, %v364, %v421
    %423 = vst [vmem:[%s56 + $0x1c] sm:$0xf] %v422
    %v424 = vld [vmem:[%s56 + $0x28] sm:$0xf]
    %v425 = vsel %vm399, %v366, %v424
    %426 = vst [vmem:[%s56 + $0x28] sm:$0xf] %v425
    %v427 = vld [vmem:[%s56 + $0x2c] sm:$0xf]
    %v428 = vsel %vm399, %v368, %v427
    %429 = vst [vmem:[%s56 + $0x2c] sm:$0xf] %v428
    %v430 = vld [vmem:[%s56 + $0x30] sm:$0xf]
    %v431 = vsel %vm399, %v370, %v430
    %432 = vst [vmem:[%s56 + $0x30] sm:$0xf] %v431
    %v433 = vld [vmem:[%s56 + $0x34] sm:$0xf]
    %v434 = vsel %vm399, %v372, %v433
    %435 = vst [vmem:[%s56 + $0x34] sm:$0xf] %v434
    %v436 = vld [vmem:[%s56 + $0x38] sm:$0xf]
    %v437 = vsel %vm399, %v374, %v436
    %438 = vst [vmem:[%s56 + $0x38] sm:$0xf] %v437
    %v439 = vld [vmem:[%s56 + $0x3c] sm:$0xf]
    %v440 = vsel %vm399, %v376, %v439
    %441 = vst [vmem:[%s56 + $0x3c] sm:$0xf] %v440
    %v442 = vld [vmem:[%s56 + $0x40] sm:$0xf]
    %v443 = vsel %vm399, %v378, %v442
    %444 = vst [vmem:[%s56 + $0x40] sm:$0xf] %v443
    %v445 = vld [vmem:[%s56 + $0x44] sm:$0xf]
    %v446 = vsel %vm399, %v380, %v445
    %447 = vst [vmem:[%s56 + $0x44] sm:$0xf] %v446
  $region17: #{basic_block_forward.3} parent=0 // pred_fallthru
    _
  %v448 = vld [vmem:[#allocation2] sm:$0xf]
  %v449 = vld [vmem:[#allocation2 + $0x4] sm:$0xf]
  %v450 = vld [vmem:[#allocation2 + $0x8] sm:$0xf]
  %v451 = vld [vmem:[#allocation2 + $0xc] sm:$0xf]
  %v452 = vld [vmem:[#allocation2 + $0x10] sm:$0xf]
  %v453 = vld [vmem:[#allocation2 + $0x14] sm:$0xf]
  %v454 = vld [vmem:[#allocation2 + $0x18] sm:$0xf]
  %v455 = vld [vmem:[#allocation2 + $0x1c] sm:$0xf]
  %v456 = vld [vmem:[#allocation2 + $0x28] sm:$0xf]
  %v457 = vld [vmem:[#allocation2 + $0x2c] sm:$0xf]
  %v458 = vld [vmem:[#allocation2 + $0x30] sm:$0xf]
  %v459 = vld [vmem:[#allocation2 + $0x34] sm:$0xf]
  %v460 = vld [vmem:[#allocation2 + $0x38] sm:$0xf]
  %v461 = vld [vmem:[#allocation2 + $0x3c] sm:$0xf]
  %v462 = vld [vmem:[#allocation2 + $0x40] sm:$0xf]
  %v463 = vld [vmem:[#allocation2 + $0x44] sm:$0xf]
  %v464 = vld [vmem:[%s1] sm:$0xf]
  %v465 = vld [vmem:[%s1 + $0x4] sm:$0xf]
  %v466 = vld [vmem:[%s1 + $0x8] sm:$0xf]
  %s467 = scalar_lea.vmem [#allocation2], 4
  %v468 = vld [vmem:[%s467] sm:$0xf]
  %v469 = vld [vmem:[%s467 + $0x4] sm:$0xf]
  %v470 = vld [vmem:[%s467 + $0x8] sm:$0xf]
  %v471 = vld [vmem:[%s467 + $0xc] sm:$0xf]
  %v472 = vld [vmem:[%s467 + $0x10] sm:$0xf]
  %v473 = vld [vmem:[%s467 + $0x14] sm:$0xf]
  %v474 = vld [vmem:[%s467 + $0x18] sm:$0xf]
  %v475 = vld [vmem:[%s467 + $0x1c] sm:$0xf]
  %v476 = vld [vmem:[%s467 + $0x28] sm:$0xf]
  %v477 = vld [vmem:[%s467 + $0x2c] sm:$0xf]
  %v478 = vld [vmem:[%s467 + $0x30] sm:$0xf]
  %v479 = vld [vmem:[%s467 + $0x34] sm:$0xf]
  %v480 = vld [vmem:[%s467 + $0x38] sm:$0xf]
  %v481 = vld [vmem:[%s467 + $0x3c] sm:$0xf]
  %v482 = vld [vmem:[%s467 + $0x40] sm:$0xf]
  %v483 = vld [vmem:[%s467 + $0x44] sm:$0xf]
  %s484 = scalar_lea.vmem %s1, 12
  %v485 = vld [vmem:[%s484] sm:$0xf]
  %v486 = vld [vmem:[%s484 + $0x4] sm:$0xf]
  %v487 = vld [vmem:[%s484 + $0x8] sm:$0xf]
  %v504 = vunpack.c.l.b16 %v468
  %v505 = vunpack.c.l.b16 %v469
  %v506 = vunpack.c.l.b16 %v470
  %v507 = vunpack.c.l.b16 %v471
  %v508 = vunpack.c.l.b16 %v472
  %v509 = vunpack.c.l.b16 %v473
  %v510 = vunpack.c.l.b16 %v474
  %v511 = vunpack.c.l.b16 %v475
  %v512 = vunpack.c.l.b16 %v476
  %v513 = vunpack.c.l.b16 %v477
  %v514 = vunpack.c.l.b16 %v478
  %v515 = vunpack.c.l.b16 %v479
  %v516 = vunpack.c.l.b16 %v480
  %v517 = vunpack.c.l.b16 %v481
  %v518 = vunpack.c.l.b16 %v482
  %v519 = vunpack.c.l.b16 %v483
  %v520 = vpack.c.b16 %v505, %v504
  %v521 = vpack.c.b16 %v507, %v506
  %v522 = vpack.c.b16 %v509, %v508
  %v523 = vpack.c.b16 %v511, %v510
  %v524 = vpack.c.b16 %v513, %v512
  %v525 = vpack.c.b16 %v515, %v514
  %v526 = vpack.c.b16 %v517, %v516
  %v527 = vpack.c.b16 %v519, %v518
  %v531 = vunpack.c.l.b16 %v485
  %v532 = vunpack.c.l.b16 %v486
  %v533 = vunpack.c.l.b16 %v487
  %v534 = vpack.c.b16 %v532, %v531
  %v535 = vpack.c.b16 %v533, %v533
  %vm537 = vcmask 195584
  %v539 = vsel %vm537, %v520, 0
  %v542 = vsel %vm537, %v521, 0
  %v545 = vsel %vm537, %v522, 0
  %v548 = vsel %vm537, %v523, 0
  %v551 = vsel %vm537, %v524, 0
  %v554 = vsel %vm537, %v525, 0
  %v557 = vsel %vm537, %v526, 0
  %v560 = vsel %vm537, %v527, 0
  %vm562 = vcmask 1043456
  %v564 = vsel %vm562, %v535, 0
  %566 = vmatprep.subr.bf16.mxu0 0
  %567 = vmatpush1.bf16.msra.mxu0 0
  %568 = vmatprep.subr.bf16.mxu0 0
  %569 = vmatpush1.bf16.msra.mxu0 0
  %570 = vmatprep.subr.bf16.mxu0 0
  %571 = vmatpush1.bf16.msra.mxu0 0
  %572 = vmatprep.subr.bf16.mxu0 0
  %573 = vmatpush1.bf16.msra.mxu0 0
  %574 = vmatprep.subr.bf16.mxu0 0
  %575 = vmatpush1.bf16.msra.mxu0 0
  %576 = vmatprep.subr.bf16.mxu0 0
  %577 = vmatpush1.bf16.msra.mxu0 0
  %578 = vmatprep.subr.bf16.mxu0 0
  %579 = vmatpush1.bf16.msra.mxu0 %v564
  %580 = vmatprep.subr.bf16.mxu0 0
  %581 = vmatpush1.bf16.msra.mxu0 %v534
  %582 = vmatprep.subr.bf16.mxu0 0
  %583 = vmatpush2.bf16.msra.mxu0 0
  %584 = vmatprep.subr.bf16.mxu0 0
  %585 = vmatpush2.bf16.msra.mxu0 0
  %586 = vmatprep.subr.bf16.mxu0 0
  %587 = vmatpush2.bf16.msra.mxu0 0
  %588 = vmatprep.subr.bf16.mxu0 0
  %589 = vmatpush2.bf16.msra.mxu0 0
  %590 = vmatprep.subr.bf16.mxu0 0
  %591 = vmatpush2.bf16.msra.mxu0 0
  %592 = vmatprep.subr.bf16.mxu0 0
  %593 = vmatpush2.bf16.msra.mxu0 0
  %594 = vmatprep.subr.bf16.mxu0 0
  %595 = vmatpush2.bf16.msra.mxu0 0
  %596 = vmatprep.subr.bf16.mxu0 0
  %597 = vmatpush2.bf16.msra.mxu0 0
  %598 = vmatprep.mubr.bf16.mxu0 0
  %599 = vmatmul.mubr.bf16.gmra.mxu0 %v539
  %v600 = vpop.f32.mrf.mxu0
  %v601 = vadd.f32 0.0, %v600
  %v602 = vpop.f32.mrf.mxu0
  %v603 = vpop.f32.mrf.mxu0
  %v604 = vadd.f32 0.0, %v603
  %v605 = vpop.f32.mrf.mxu0
  %606 = vmatprep.mubr.bf16.mxu0 0
  %607 = vmatmul.mubr.bf16.gmra.mxu0 %v542
  %v608 = vpop.f32.mrf.mxu0
  %v609 = vadd.f32 0.0, %v608
  %v610 = vpop.f32.mrf.mxu0
  %v611 = vpop.f32.mrf.mxu0
  %v612 = vadd.f32 0.0, %v611
  %v613 = vpop.f32.mrf.mxu0
  %614 = vmatprep.mubr.bf16.mxu0 0
  %615 = vmatmul.mubr.bf16.gmra.mxu0 %v545
  %v616 = vpop.f32.mrf.mxu0
  %v617 = vadd.f32 0.0, %v616
  %v618 = vpop.f32.mrf.mxu0
  %v619 = vpop.f32.mrf.mxu0
  %v620 = vadd.f32 0.0, %v619
  %v621 = vpop.f32.mrf.mxu0
  %622 = vmatprep.mubr.bf16.mxu0 0
  %623 = vmatmul.mubr.bf16.gmra.mxu0 %v548
  %v624 = vpop.f32.mrf.mxu0
  %v625 = vadd.f32 0.0, %v624
  %v626 = vpop.f32.mrf.mxu0
  %v627 = vpop.f32.mrf.mxu0
  %v628 = vadd.f32 0.0, %v627
  %v629 = vpop.f32.mrf.mxu0
  %630 = vmatprep.mubr.bf16.mxu0 0
  %631 = vmatmul.mubr.bf16.gmra.mxu0 %v551
  %v632 = vpop.f32.mrf.mxu0
  %v633 = vadd.f32 0.0, %v632
  %v634 = vpop.f32.mrf.mxu0
  %v635 = vpop.f32.mrf.mxu0
  %v636 = vadd.f32 0.0, %v635
  %v637 = vpop.f32.mrf.mxu0
  %638 = vmatprep.mubr.bf16.mxu0 0
  %639 = vmatmul.mubr.bf16.gmra.mxu0 %v554
  %v640 = vpop.f32.mrf.mxu0
  %v641 = vadd.f32 0.0, %v640
  %v642 = vpop.f32.mrf.mxu0
  %v643 = vpop.f32.mrf.mxu0
  %v644 = vadd.f32 0.0, %v643
  %v645 = vpop.f32.mrf.mxu0
  %646 = vmatprep.mubr.bf16.mxu0 0
  %647 = vmatmul.mubr.bf16.gmra.mxu0 %v557
  %v648 = vpop.f32.mrf.mxu0
  %v649 = vadd.f32 0.0, %v648
  %v650 = vpop.f32.mrf.mxu0
  %v651 = vpop.f32.mrf.mxu0
  %v652 = vadd.f32 0.0, %v651
  %v653 = vpop.f32.mrf.mxu0
  %654 = vmatprep.mubr.bf16.mxu0 0
  %655 = vmatmul.mubr.bf16.gmra.mxu0 %v560
  %v656 = vpop.f32.mrf.mxu0
  %v657 = vadd.f32 0.0, %v656
  %v658 = vpop.f32.mrf.mxu0
  %v659 = vpop.f32.mrf.mxu0
  %v660 = vadd.f32 0.0, %v659
  %v661 = vpop.f32.mrf.mxu0
  %662 = vdwg.mxu0
  %v679 = vunpack.c.l.b16 %v448
  %v680 = vunpack.c.l.b16 %v449
  %v681 = vunpack.c.l.b16 %v450
  %v682 = vunpack.c.l.b16 %v451
  %v683 = vunpack.c.l.b16 %v452
  %v684 = vunpack.c.l.b16 %v453
  %v685 = vunpack.c.l.b16 %v454
  %v686 = vunpack.c.l.b16 %v455
  %v687 = vunpack.c.l.b16 %v456
  %v688 = vunpack.c.l.b16 %v457
  %v689 = vunpack.c.l.b16 %v458
  %v690 = vunpack.c.l.b16 %v459
  %v691 = vunpack.c.l.b16 %v460
  %v692 = vunpack.c.l.b16 %v461
  %v693 = vunpack.c.l.b16 %v462
  %v694 = vunpack.c.l.b16 %v463
  %v695 = vpack.c.b16 %v680, %v679
  %v696 = vpack.c.b16 %v682, %v681
  %v697 = vpack.c.b16 %v684, %v683
  %v698 = vpack.c.b16 %v686, %v685
  %v699 = vpack.c.b16 %v688, %v687
  %v700 = vpack.c.b16 %v690, %v689
  %v701 = vpack.c.b16 %v692, %v691
  %v702 = vpack.c.b16 %v694, %v693
  %v706 = vunpack.c.l.b16 %v464
  %v707 = vunpack.c.l.b16 %v465
  %v708 = vunpack.c.l.b16 %v466
  %v709 = vpack.c.b16 %v707, %v706
  %v710 = vpack.c.b16 %v708, %v708
  %v713 = vsel %vm537, %v695, 0
  %v716 = vsel %vm537, %v696, 0
  %v719 = vsel %vm537, %v697, 0
  %v722 = vsel %vm537, %v698, 0
  %v725 = vsel %vm537, %v699, 0
  %v728 = vsel %vm537, %v700, 0
  %v731 = vsel %vm537, %v701, 0
  %v734 = vsel %vm537, %v702, 0
  %v737 = vsel %vm562, %v710, 0
  %739 = vmatprep.subr.bf16.mxu0 0
  %740 = vmatpush1.bf16.msra.mxu0 0
  %741 = vmatprep.subr.bf16.mxu0 0
  %742 = vmatpush1.bf16.msra.mxu0 0
  %743 = vmatprep.subr.bf16.mxu0 0
  %744 = vmatpush1.bf16.msra.mxu0 0
  %745 = vmatprep.subr.bf16.mxu0 0
  %746 = vmatpush1.bf16.msra.mxu0 0
  %747 = vmatprep.subr.bf16.mxu0 0
  %748 = vmatpush1.bf16.msra.mxu0 0
  %749 = vmatprep.subr.bf16.mxu0 0
  %750 = vmatpush1.bf16.msra.mxu0 0
  %751 = vmatprep.subr.bf16.mxu0 0
  %752 = vmatpush1.bf16.msra.mxu0 %v737
  %753 = vmatprep.subr.bf16.mxu0 0
  %754 = vmatpush1.bf16.msra.mxu0 %v709
  %755 = vmatprep.subr.bf16.mxu0 0
  %756 = vmatpush2.bf16.msra.mxu0 0
  %757 = vmatprep.subr.bf16.mxu0 0
  %758 = vmatpush2.bf16.msra.mxu0 0
  %759 = vmatprep.subr.bf16.mxu0 0
  %760 = vmatpush2.bf16.msra.mxu0 0
  %761 = vmatprep.subr.bf16.mxu0 0
  %762 = vmatpush2.bf16.msra.mxu0 0
  %763 = vmatprep.subr.bf16.mxu0 0
  %764 = vmatpush2.bf16.msra.mxu0 0
  %765 = vmatprep.subr.bf16.mxu0 0
  %766 = vmatpush2.bf16.msra.mxu0 0
  %767 = vmatprep.subr.bf16.mxu0 0
  %768 = vmatpush2.bf16.msra.mxu0 0
  %769 = vmatprep.subr.bf16.mxu0 0
  %770 = vmatpush2.bf16.msra.mxu0 0
  %771 = vmatprep.mubr.bf16.mxu0 0
  %772 = vmatmul.mubr.bf16.gmra.mxu0 %v713
  %v773 = vpop.f32.mrf.mxu0
  %v774 = vadd.f32 %v601, %v773
  %v775 = vpop.f32.mrf.mxu0
  %v776 = vpop.f32.mrf.mxu0
  %v777 = vadd.f32 %v604, %v776
  %v778 = vpop.f32.mrf.mxu0
  %779 = vmatprep.mubr.bf16.mxu0 0
  %780 = vmatmul.mubr.bf16.gmra.mxu0 %v716
  %v781 = vpop.f32.mrf.mxu0
  %v782 = vadd.f32 %v609, %v781
  %v783 = vpop.f32.mrf.mxu0
  %v784 = vpop.f32.mrf.mxu0
  %v785 = vadd.f32 %v612, %v784
  %v786 = vpop.f32.mrf.mxu0
  %787 = vmatprep.mubr.bf16.mxu0 0
  %788 = vmatmul.mubr.bf16.gmra.mxu0 %v719
  %v789 = vpop.f32.mrf.mxu0
  %v790 = vadd.f32 %v617, %v789
  %v791 = vpop.f32.mrf.mxu0
  %v792 = vpop.f32.mrf.mxu0
  %v793 = vadd.f32 %v620, %v792
  %v794 = vpop.f32.mrf.mxu0
  %795 = vmatprep.mubr.bf16.mxu0 0
  %796 = vmatmul.mubr.bf16.gmra.mxu0 %v722
  %v797 = vpop.f32.mrf.mxu0
  %v798 = vadd.f32 %v625, %v797
  %v799 = vpop.f32.mrf.mxu0
  %v800 = vpop.f32.mrf.mxu0
  %v801 = vadd.f32 %v628, %v800
  %v802 = vpop.f32.mrf.mxu0
  %803 = vmatprep.mubr.bf16.mxu0 0
  %804 = vmatmul.mubr.bf16.gmra.mxu0 %v725
  %v805 = vpop.f32.mrf.mxu0
  %v806 = vadd.f32 %v633, %v805
  %v807 = vpop.f32.mrf.mxu0
  %v808 = vpop.f32.mrf.mxu0
  %v809 = vadd.f32 %v636, %v808
  %v810 = vpop.f32.mrf.mxu0
  %811 = vmatprep.mubr.bf16.mxu0 0
  %812 = vmatmul.mubr.bf16.gmra.mxu0 %v728
  %v813 = vpop.f32.mrf.mxu0
  %v814 = vadd.f32 %v641, %v813
  %v815 = vpop.f32.mrf.mxu0
  %v816 = vpop.f32.mrf.mxu0
  %v817 = vadd.f32 %v644, %v816
  %v818 = vpop.f32.mrf.mxu0
  %819 = vmatprep.mubr.bf16.mxu0 0
  %820 = vmatmul.mubr.bf16.gmra.mxu0 %v731
  %v821 = vpop.f32.mrf.mxu0
  %v822 = vadd.f32 %v649, %v821
  %v823 = vpop.f32.mrf.mxu0
  %v824 = vpop.f32.mrf.mxu0
  %v825 = vadd.f32 %v652, %v824
  %v826 = vpop.f32.mrf.mxu0
  %827 = vmatprep.mubr.bf16.mxu0 0
  %828 = vmatmul.mubr.bf16.gmra.mxu0 %v734
  %v829 = vpop.f32.mrf.mxu0
  %v830 = vadd.f32 %v657, %v829
  %v831 = vpop.f32.mrf.mxu0
  %v832 = vpop.f32.mrf.mxu0
  %v833 = vadd.f32 %v660, %v832
  %v834 = vpop.f32.mrf.mxu0
  %835 = vdwg.mxu0
  %s836 = scalar_lea.vmem [#allocation2], 8
  %v837 = vld [vmem:[%s836] sm:$0xf]
  %v838 = vld [vmem:[%s836 + $0x4] sm:$0xf]
  %v839 = vld [vmem:[%s836 + $0x8] sm:$0xf]
  %v840 = vld [vmem:[%s836 + $0xc] sm:$0xf]
  %v841 = vld [vmem:[%s836 + $0x10] sm:$0xf]
  %v842 = vld [vmem:[%s836 + $0x14] sm:$0xf]
  %v843 = vld [vmem:[%s836 + $0x18] sm:$0xf]
  %v844 = vld [vmem:[%s836 + $0x1c] sm:$0xf]
  %v845 = vld [vmem:[%s836 + $0x28] sm:$0xf]
  %v846 = vld [vmem:[%s836 + $0x2c] sm:$0xf]
  %v847 = vld [vmem:[%s836 + $0x30] sm:$0xf]
  %v848 = vld [vmem:[%s836 + $0x34] sm:$0xf]
  %v849 = vld [vmem:[%s836 + $0x38] sm:$0xf]
  %v850 = vld [vmem:[%s836 + $0x3c] sm:$0xf]
  %v851 = vld [vmem:[%s836 + $0x40] sm:$0xf]
  %v852 = vld [vmem:[%s836 + $0x44] sm:$0xf]
  %s853 = scalar_lea.vmem %s1, 24
  %v854 = vld [vmem:[%s853] sm:$0xf]
  %v855 = vld [vmem:[%s853 + $0x4] sm:$0xf]
  %v856 = vld [vmem:[%s853 + $0x8] sm:$0xf]
  %v873 = vunpack.c.l.b16 %v837
  %v874 = vunpack.c.l.b16 %v838
  %v875 = vunpack.c.l.b16 %v839
  %v876 = vunpack.c.l.b16 %v840
  %v877 = vunpack.c.l.b16 %v841
  %v878 = vunpack.c.l.b16 %v842
  %v879 = vunpack.c.l.b16 %v843
  %v880 = vunpack.c.l.b16 %v844
  %v881 = vunpack.c.l.b16 %v845
  %v882 = vunpack.c.l.b16 %v846
  %v883 = vunpack.c.l.b16 %v847
  %v884 = vunpack.c.l.b16 %v848
  %v885 = vunpack.c.l.b16 %v849
  %v886 = vunpack.c.l.b16 %v850
  %v887 = vunpack.c.l.b16 %v851
  %v888 = vunpack.c.l.b16 %v852
  %v889 = vpack.c.b16 %v874, %v873
  %v890 = vpack.c.b16 %v876, %v875
  %v891 = vpack.c.b16 %v878, %v877
  %v892 = vpack.c.b16 %v880, %v879
  %v893 = vpack.c.b16 %v882, %v881
  %v894 = vpack.c.b16 %v884, %v883
  %v895 = vpack.c.b16 %v886, %v885
  %v896 = vpack.c.b16 %v888, %v887
  %v900 = vunpack.c.l.b16 %v854
  %v901 = vunpack.c.l.b16 %v855
  %v902 = vunpack.c.l.b16 %v856
  %v903 = vpack.c.b16 %v901, %v900
  %v904 = vpack.c.b16 %v902, %v902
  %v907 = vsel %vm537, %v889, 0
  %v910 = vsel %vm537, %v890, 0
  %v913 = vsel %vm537, %v891, 0
  %v916 = vsel %vm537, %v892, 0
  %v919 = vsel %vm537, %v893, 0
  %v922 = vsel %vm537, %v894, 0
  %v925 = vsel %vm537, %v895, 0
  %v928 = vsel %vm537, %v896, 0
  %v931 = vsel %vm562, %v904, 0
  %933 = vmatprep.subr.bf16.mxu0 0
  %934 = vmatpush1.bf16.msra.mxu0 0
  %935 = vmatprep.subr.bf16.mxu0 0
  %936 = vmatpush1.bf16.msra.mxu0 0
  %937 = vmatprep.subr.bf16.mxu0 0
  %938 = vmatpush1.bf16.msra.mxu0 0
  %939 = vmatprep.subr.bf16.mxu0 0
  %940 = vmatpush1.bf16.msra.mxu0 0
  %941 = vmatprep.subr.bf16.mxu0 0
  %942 = vmatpush1.bf16.msra.mxu0 0
  %943 = vmatprep.subr.bf16.mxu0 0
  %944 = vmatpush1.bf16.msra.mxu0 0
  %945 = vmatprep.subr.bf16.mxu0 0
  %946 = vmatpush1.bf16.msra.mxu0 %v931
  %947 = vmatprep.subr.bf16.mxu0 0
  %948 = vmatpush1.bf16.msra.mxu0 %v903
  %949 = vmatprep.subr.bf16.mxu0 0
  %950 = vmatpush2.bf16.msra.mxu0 0
  %951 = vmatprep.subr.bf16.mxu0 0
  %952 = vmatpush2.bf16.msra.mxu0 0
  %953 = vmatprep.subr.bf16.mxu0 0
  %954 = vmatpush2.bf16.msra.mxu0 0
  %955 = vmatprep.subr.bf16.mxu0 0
  %956 = vmatpush2.bf16.msra.mxu0 0
  %957 = vmatprep.subr.bf16.mxu0 0
  %958 = vmatpush2.bf16.msra.mxu0 0
  %959 = vmatprep.subr.bf16.mxu0 0
  %960 = vmatpush2.bf16.msra.mxu0 0
  %961 = vmatprep.subr.bf16.mxu0 0
  %962 = vmatpush2.bf16.msra.mxu0 0
  %963 = vmatprep.subr.bf16.mxu0 0
  %964 = vmatpush2.bf16.msra.mxu0 0
  %965 = vmatprep.mubr.bf16.mxu0 0
  %966 = vmatmul.mubr.bf16.gmra.mxu0 %v907
  %v967 = vpop.f32.mrf.mxu0
  %v968 = vadd.f32 0.0, %v967
  %v969 = vpop.f32.mrf.mxu0
  %v970 = vpop.f32.mrf.mxu0
  %v971 = vadd.f32 0.0, %v970
  %v972 = vpop.f32.mrf.mxu0
  %973 = vmatprep.mubr.bf16.mxu0 0
  %974 = vmatmul.mubr.bf16.gmra.mxu0 %v910
  %v975 = vpop.f32.mrf.mxu0
  %v976 = vadd.f32 0.0, %v975
  %v977 = vpop.f32.mrf.mxu0
  %v978 = vpop.f32.mrf.mxu0
  %v979 = vadd.f32 0.0, %v978
  %v980 = vpop.f32.mrf.mxu0
  %981 = vmatprep.mubr.bf16.mxu0 0
  %982 = vmatmul.mubr.bf16.gmra.mxu0 %v913
  %v983 = vpop.f32.mrf.mxu0
  %v984 = vadd.f32 0.0, %v983
  %v985 = vpop.f32.mrf.mxu0
  %v986 = vpop.f32.mrf.mxu0
  %v987 = vadd.f32 0.0, %v986
  %v988 = vpop.f32.mrf.mxu0
  %989 = vmatprep.mubr.bf16.mxu0 0
  %990 = vmatmul.mubr.bf16.gmra.mxu0 %v916
  %v991 = vpop.f32.mrf.mxu0
  %v992 = vadd.f32 0.0, %v991
  %v993 = vpop.f32.mrf.mxu0
  %v994 = vpop.f32.mrf.mxu0
  %v995 = vadd.f32 0.0, %v994
  %v996 = vpop.f32.mrf.mxu0
  %997 = vmatprep.mubr.bf16.mxu0 0
  %998 = vmatmul.mubr.bf16.gmra.mxu0 %v919
  %v999 = vpop.f32.mrf.mxu0
  %v1000 = vadd.f32 0.0, %v999
  %v1001 = vpop.f32.mrf.mxu0
  %v1002 = vpop.f32.mrf.mxu0
  %v1003 = vadd.f32 0.0, %v1002
  %v1004 = vpop.f32.mrf.mxu0
  %1005 = vmatprep.mubr.bf16.mxu0 0
  %1006 = vmatmul.mubr.bf16.gmra.mxu0 %v922
  %v1007 = vpop.f32.mrf.mxu0
  %v1008 = vadd.f32 0.0, %v1007
  %v1009 = vpop.f32.mrf.mxu0
  %v1010 = vpop.f32.mrf.mxu0
  %v1011 = vadd.f32 0.0, %v1010
  %v1012 = vpop.f32.mrf.mxu0
  %1013 = vmatprep.mubr.bf16.mxu0 0
  %1014 = vmatmul.mubr.bf16.gmra.mxu0 %v925
  %v1015 = vpop.f32.mrf.mxu0
  %v1016 = vadd.f32 0.0, %v1015
  %v1017 = vpop.f32.mrf.mxu0
  %v1018 = vpop.f32.mrf.mxu0
  %v1019 = vadd.f32 0.0, %v1018
  %v1020 = vpop.f32.mrf.mxu0
  %1021 = vmatprep.mubr.bf16.mxu0 0
  %1022 = vmatmul.mubr.bf16.gmra.mxu0 %v928
  %v1023 = vpop.f32.mrf.mxu0
  %v1024 = vadd.f32 0.0, %v1023
  %v1025 = vpop.f32.mrf.mxu0
  %v1026 = vpop.f32.mrf.mxu0
  %v1027 = vadd.f32 0.0, %v1026
  %v1028 = vpop.f32.mrf.mxu0
  %1029 = vdwg.mxu0
  %v1030 = vadd.f32 %v774, %v968
  %v1031 = vadd.f32 %v777, %v971
  %v1032 = vadd.f32 %v782, %v976
  %v1033 = vadd.f32 %v785, %v979
  %v1034 = vadd.f32 %v790, %v984
  %v1035 = vadd.f32 %v793, %v987
  %v1036 = vadd.f32 %v798, %v992
  %v1037 = vadd.f32 %v801, %v995
  %v1038 = vadd.f32 %v806, %v1000
  %v1039 = vadd.f32 %v809, %v1003
  %v1040 = vadd.f32 %v814, %v1008
  %v1041 = vadd.f32 %v817, %v1011
  %v1042 = vadd.f32 %v822, %v1016
  %v1043 = vadd.f32 %v825, %v1019
  %v1044 = vadd.f32 %v830, %v1024
  %v1045 = vadd.f32 %v833, %v1027
  %v1046 = vld [vmem:[%s2] sm:$0xff]
  %v1047 = vld [vmem:[%s2 + $0x8] sm:$0xff]
  %v1048 = vld [vmem:[%s2 + $0x10] sm:$0xff]
  %v1049 = vld [vmem:[%s2 + $0x18] sm:$0xff]
  %v1050 = vld [vmem:[%s2 + $0x20] sm:$0xff]
  %v1051 = vld [vmem:[%s2 + $0x28] sm:$0xff]
  %v1052 = vld [vmem:[%s2 + $0x30] sm:$0xff]
  %v1053 = vld [vmem:[%s2 + $0x38] sm:$0xff]
  %v1054 = vld [vmem:[%s2 + $0x40] sm:$0xff]
  %v1055 = vld [vmem:[%s2 + $0x48] sm:$0xff]
  %v1056 = vld [vmem:[%s2 + $0x50] sm:$0xff]
  %v1057 = vld [vmem:[%s2 + $0x58] sm:$0xff]
  %v1058 = vld [vmem:[%s2 + $0x60] sm:$0xff]
  %v1059 = vld [vmem:[%s2 + $0x68] sm:$0xff]
  %v1060 = vld [vmem:[%s2 + $0x70] sm:$0xff]
  %v1061 = vld [vmem:[%s2 + $0x78] sm:$0xff]
  %v1062 = vadd.f32 %v1030, %v1046
  %v1063 = vadd.f32 %v1031, %v1047
  %v1064 = vadd.f32 %v1032, %v1048
  %v1065 = vadd.f32 %v1033, %v1049
  %v1066 = vadd.f32 %v1034, %v1050
  %v1067 = vadd.f32 %v1035, %v1051
  %v1068 = vadd.f32 %v1036, %v1052
  %v1069 = vadd.f32 %v1037, %v1053
  %v1070 = vadd.f32 %v1038, %v1054
  %v1071 = vadd.f32 %v1039, %v1055
  %v1072 = vadd.f32 %v1040, %v1056
  %v1073 = vadd.f32 %v1041, %v1057
  %v1074 = vadd.f32 %v1042, %v1058
  %v1075 = vadd.f32 %v1043, %v1059
  %v1076 = vadd.f32 %v1044, %v1060
  %v1077 = vadd.f32 %v1045, %v1061
  %vm1078 = vcmask 64512
  %1079 = vst.msk [vmem:[%s3] sm:$0xff] %vm1078, %v1062
  %1080 = vst.msk [vmem:[%s3 + $0x8] sm:$0xff] %vm1078, %v1063
  %1081 = vst.msk [vmem:[%s3 + $0x10] sm:$0xff] %vm1078, %v1064
  %1082 = vst.msk [vmem:[%s3 + $0x18] sm:$0xff] %vm1078, %v1065
  %1083 = vst.msk [vmem:[%s3 + $0x20] sm:$0xff] %vm1078, %v1066
  %1084 = vst.msk [vmem:[%s3 + $0x28] sm:$0xff] %vm1078, %v1067
  %1085 = vst.msk [vmem:[%s3 + $0x30] sm:$0xff] %vm1078, %v1068
  %1086 = vst.msk [vmem:[%s3 + $0x38] sm:$0xff] %vm1078, %v1069
  %1087 = vst.msk [vmem:[%s3 + $0x40] sm:$0xff] %vm1078, %v1070
  %1088 = vst.msk [vmem:[%s3 + $0x48] sm:$0xff] %vm1078, %v1071
  %1089 = vst.msk [vmem:[%s3 + $0x50] sm:$0xff] %vm1078, %v1072
  %1090 = vst.msk [vmem:[%s3 + $0x58] sm:$0xff] %vm1078, %v1073
  %1091 = vst.msk [vmem:[%s3 + $0x60] sm:$0xff] %vm1078, %v1074
  %1092 = vst.msk [vmem:[%s3 + $0x68] sm:$0xff] %vm1078, %v1075
  %1093 = vst.msk [vmem:[%s3 + $0x70] sm:$0xff] %vm1078, %v1076
  %1094 = vst.msk [vmem:[%s3 + $0x78] sm:$0xff] %vm1078, %v1077
  // Predicated region
  $region18: #{basic_block_forward.3} parent=0 // pred_check
    _
  $region19: #{basic_block_forward.3} parent=0 // pred_check_branch
    %1096 = sbr.rel (0) target = $region21
  $region20: #{basic_block_forward.3} parent=0 // pred_region
    _
  $region21: #{basic_block_forward.3} parent=0 // pred_fallthru
    _
  // Predicated region
  $region22: #{basic_block_forward.3} parent=0 // pred_check
    _
  $region23: #{basic_block_forward.3} parent=0 // pred_check_branch
    %1098 = sbr.rel (0) target = $region25
  $region24: #{basic_block_forward.3} parent=0 // pred_region
    _
  $region25: #{basic_block_forward.3} parent=0 // pred_fallthru
    _

// kernel: basic_block_forward.2
$region0: #{basic_block_forward.2}
  #allocation0 [shape = 'u32[]', space=smem, size = 0x4, offset = 0x4, fixed_abs, tag = 'smem constant byte address 0x4 - core index']
  #allocation1 [shape = 'u32[144,128]{1,0:T(1,128)}', space=vmem, size = 0x12000, scoped, tag = 'internal scratch']
  #allocation2 [shape = 'bf16[2,2,9,8,12]{4,3,2,1,0:T(8,128)(2,1)}', space=vmem, size = 0x12000, scoped, tag = 'scratch operand']
  %s0 = inlined_call_operand.vmem [shape: f32[2,16,8,8], index: 0, kind: input, shape index: {}]
  %s1 = inlined_call_operand.vmem [shape: bf16[3,12,8], index: 1, kind: input, shape index: {}]
  %s2 = inlined_call_operand.vmem [shape: bf16[4,8], index: 2, kind: input, shape index: {}]
  %s3 = inlined_call_operand.vmem [shape: f32[1,8], index: 3, kind: input, shape index: {}]
  %s4 = inlined_call_operand.vmem [shape: f32[1,8], index: 4, kind: input, shape index: {}]
  %s5 = inlined_call_operand.vmem [shape: f32[1,8], index: 5, kind: input, shape index: {}]
  %s6 = inlined_call_operand.vmem [shape: f32[1,8], index: 6, kind: input, shape index: {}]
  %s7 = inlined_call_operand.vmem [shape: bf16[2,8,8,8], index: 7, kind: output, shape index: {0}]
  %s8 = inlined_call_operand.vmem [shape: f32[2,8,8,8], index: 8, kind: output, shape index: {1}]
  %9 = xla_tuple %s7, %s8
  %s10 = sld [smem:[#allocation0]]
  $region50: #{basic_block_forward.2} parent=0
    _
  %s12 = ssub.s32 1, %s10
  %s13 = scalar_select 0, %s12, %s10
  // Predicated region
  $region2: #{basic_block_forward.2} parent=0 // pred_check
    _
  $region3: #{basic_block_forward.2} parent=0 // pred_check_branch
    %15 = sbr.rel (0) target = $region5
  $region4: #{basic_block_forward.2} parent=0 // pred_region
    _
  $region5: #{basic_block_forward.2} parent=0 // pred_fallthru
    _
  // Predicated region
  $region6: #{basic_block_forward.2} parent=0 // pred_check
    _
  $region7: #{basic_block_forward.2} parent=0 // pred_check_branch
    %17 = sbr.rel (0) target = $region9
  $region8: #{basic_block_forward.2} parent=0 // pred_region
    _
  $region9: #{basic_block_forward.2} parent=0 // pred_fallthru
    _
  // Predicated region
  $region10: #{basic_block_forward.2} parent=0 // pred_check
    _
  $region11: #{basic_block_forward.2} parent=0 // pred_check_branch
    %19 = sbr.rel (0) target = $region13
  $region12: #{basic_block_forward.2} parent=0 // pred_region
    _
  $region13: #{basic_block_forward.2} parent=0 // pred_fallthru
    _
  // Predicated region
  $region14: #{basic_block_forward.2} parent=0 // pred_check
    _
  $region15: #{basic_block_forward.2} parent=0 // pred_check_branch
    %21 = sbr.rel (0) target = $region17
  $region16: #{basic_block_forward.2} parent=0 // pred_region
    _
  $region17: #{basic_block_forward.2} parent=0 // pred_fallthru
    _
  // Predicated region
  $region18: #{basic_block_forward.2} parent=0 // pred_check
    _
  $region19: #{basic_block_forward.2} parent=0 // pred_check_branch
    %23 = sbr.rel (0) target = $region21
  $region20: #{basic_block_forward.2} parent=0 // pred_region
    _
  $region21: #{basic_block_forward.2} parent=0 // pred_fallthru
    _
  // Predicated region
  $region22: #{basic_block_forward.2} parent=0 // pred_check
    _
  $region23: #{basic_block_forward.2} parent=0 // pred_check_branch
    %25 = sbr.rel (0) target = $region25
  $region24: #{basic_block_forward.2} parent=0 // pred_region
    _
  $region25: #{basic_block_forward.2} parent=0 // pred_fallthru
    _
  // Predicated region
  $region26: #{basic_block_forward.2} parent=0 // pred_check
    _
  $region27: #{basic_block_forward.2} parent=0 // pred_check_branch
    %27 = sbr.rel (0) target = $region29
  $region28: #{basic_block_forward.2} parent=0 // pred_region
    _
  $region29: #{basic_block_forward.2} parent=0 // pred_fallthru
    _
  %p29 = scmp.eq.s32.totalorder 0, 0
  // Predicated region
  $region30: #{basic_block_forward.2} parent=0 // pred_check
    %p30 = pneg %p29
  $region31: #{basic_block_forward.2} parent=0 // pred_check_branch
    %32 = sbr.rel (%p30) target = $region33
  $region32: #{basic_block_forward.2} parent=0 // pred_region
    %v33 = vld [vmem:[%s0] sm:$0xff]
    %v34 = vld [vmem:[%s0 + $0x8] sm:$0xff]
    %v35 = vld [vmem:[%s0 + $0x10] sm:$0xff]
    %v36 = vld [vmem:[%s0 + $0x18] sm:$0xff]
    %v37 = vld [vmem:[%s0 + $0x20] sm:$0xff]
    %v38 = vld [vmem:[%s0 + $0x28] sm:$0xff]
    %v39 = vld [vmem:[%s0 + $0x30] sm:$0xff]
    %v40 = vld [vmem:[%s0 + $0x38] sm:$0xff]
    %v41 = vld [vmem:[%s0 + $0x40] sm:$0xff]
    %v42 = vld [vmem:[%s0 + $0x48] sm:$0xff]
    %v43 = vld [vmem:[%s0 + $0x50] sm:$0xff]
    %v44 = vld [vmem:[%s0 + $0x58] sm:$0xff]
    %v45 = vld [vmem:[%s0 + $0x60] sm:$0xff]
    %v46 = vld [vmem:[%s0 + $0x68] sm:$0xff]
    %v47 = vld [vmem:[%s0 + $0x70] sm:$0xff]
    %v48 = vld [vmem:[%s0 + $0x78] sm:$0xff]
    %v49 = vld [vmem:[%s0 + $0x80] sm:$0xff]
    %v50 = vld [vmem:[%s0 + $0x88] sm:$0xff]
    %v51 = vld [vmem:[%s0 + $0x90] sm:$0xff]
    %v52 = vld [vmem:[%s0 + $0x98] sm:$0xff]
    %v53 = vld [vmem:[%s0 + $0xa0] sm:$0xff]
    %v54 = vld [vmem:[%s0 + $0xa8] sm:$0xff]
    %v55 = vld [vmem:[%s0 + $0xb0] sm:$0xff]
    %v56 = vld [vmem:[%s0 + $0xb8] sm:$0xff]
    %v57 = vld [vmem:[%s0 + $0xc0] sm:$0xff]
    %v58 = vld [vmem:[%s0 + $0xc8] sm:$0xff]
    %v59 = vld [vmem:[%s0 + $0xd0] sm:$0xff]
    %v60 = vld [vmem:[%s0 + $0xd8] sm:$0xff]
    %v61 = vld [vmem:[%s0 + $0xe0] sm:$0xff]
    %v62 = vld [vmem:[%s0 + $0xe8] sm:$0xff]
    %v63 = vld [vmem:[%s0 + $0xf0] sm:$0xff]
    %v64 = vld [vmem:[%s0 + $0xf8] sm:$0xff]
    %v65 = vld [vmem:[%s3] sm:$0x1]
    %v67 = vlaneseq
    %v68 = vshrl.u32 %v67, 7
    %v69 = vsub.s32 0, %v68
    %v70 = vrot.slane %v65, %v69
    %v72 = vmul.f32 %v33, %v70
    %v73 = vmul.f32 %v34, %v70
    %v74 = vmul.f32 %v35, %v70
    %v75 = vmul.f32 %v36, %v70
    %v76 = vmul.f32 %v37, %v70
    %v77 = vmul.f32 %v38, %v70
    %v78 = vmul.f32 %v39, %v70
    %v79 = vmul.f32 %v40, %v70
    %v80 = vmul.f32 %v41, %v70
    %v81 = vmul.f32 %v42, %v70
    %v82 = vmul.f32 %v43, %v70
    %v83 = vmul.f32 %v44, %v70
    %v84 = vmul.f32 %v45, %v70
    %v85 = vmul.f32 %v46, %v70
    %v86 = vmul.f32 %v47, %v70
    %v87 = vmul.f32 %v48, %v70
    %v88 = vmul.f32 %v49, %v70
    %v89 = vmul.f32 %v50, %v70
    %v90 = vmul.f32 %v51, %v70
    %v91 = vmul.f32 %v52, %v70
    %v92 = vmul.f32 %v53, %v70
    %v93 = vmul.f32 %v54, %v70
    %v94 = vmul.f32 %v55, %v70
    %v95 = vmul.f32 %v56, %v70
    %v96 = vmul.f32 %v57, %v70
    %v97 = vmul.f32 %v58, %v70
    %v98 = vmul.f32 %v59, %v70
    %v99 = vmul.f32 %v60, %v70
    %v100 = vmul.f32 %v61, %v70
    %v101 = vmul.f32 %v62, %v70
    %v102 = vmul.f32 %v63, %v70
    %v103 = vmul.f32 %v64, %v70
    %v104 = vld [vmem:[%s4] sm:$0x1]
    %v106 = vlaneseq
    %v107 = vshrl.u32 %v106, 7
    %v108 = vsub.s32 0, %v107
    %v109 = vrot.slane %v104, %v108
    %v111 = vadd.f32 %v72, %v109
    %v112 = vadd.f32 %v73, %v109
    %v113 = vadd.f32 %v74, %v109
    %v114 = vadd.f32 %v75, %v109
    %v115 = vadd.f32 %v76, %v109
    %v116 = vadd.f32 %v77, %v109
    %v117 = vadd.f32 %v78, %v109
    %v118 = vadd.f32 %v79, %v109
    %v119 = vadd.f32 %v80, %v109
    %v120 = vadd.f32 %v81, %v109
    %v121 = vadd.f32 %v82, %v109
    %v122 = vadd.f32 %v83, %v109
    %v123 = vadd.f32 %v84, %v109
    %v124 = vadd.f32 %v85, %v109
    %v125 = vadd.f32 %v86, %v109
    %v126 = vadd.f32 %v87, %v109
    %v127 = vadd.f32 %v88, %v109
    %v128 = vadd.f32 %v89, %v109
    %v129 = vadd.f32 %v90, %v109
    %v130 = vadd.f32 %v91, %v109
    %v131 = vadd.f32 %v92, %v109
    %v132 = vadd.f32 %v93, %v109
    %v133 = vadd.f32 %v94, %v109
    %v134 = vadd.f32 %v95, %v109
    %v135 = vadd.f32 %v96, %v109
    %v136 = vadd.f32 %v97, %v109
    %v137 = vadd.f32 %v98, %v109
    %v138 = vadd.f32 %v99, %v109
    %v139 = vadd.f32 %v100, %v109
    %v140 = vadd.f32 %v101, %v109
    %v141 = vadd.f32 %v102, %v109
    %v142 = vadd.f32 %v103, %v109
    %v143 = vmax.f32 %v111, 0.0
    %v144 = vmax.f32 %v112, 0.0
    %v145 = vmax.f32 %v113, 0.0
    %v146 = vmax.f32 %v114, 0.0
    %v147 = vmax.f32 %v115, 0.0
    %v148 = vmax.f32 %v116, 0.0
    %v149 = vmax.f32 %v117, 0.0
    %v150 = vmax.f32 %v118, 0.0
    %v151 = vmax.f32 %v119, 0.0
    %v152 = vmax.f32 %v120, 0.0
    %v153 = vmax.f32 %v121, 0.0
    %v154 = vmax.f32 %v122, 0.0
    %v155 = vmax.f32 %v123, 0.0
    %v156 = vmax.f32 %v124, 0.0
    %v157 = vmax.f32 %v125, 0.0
    %v158 = vmax.f32 %v126, 0.0
    %v159 = vmax.f32 %v127, 0.0
    %v160 = vmax.f32 %v128, 0.0
    %v161 = vmax.f32 %v129, 0.0
    %v162 = vmax.f32 %v130, 0.0
    %v163 = vmax.f32 %v131, 0.0
    %v164 = vmax.f32 %v132, 0.0
    %v165 = vmax.f32 %v133, 0.0
    %v166 = vmax.f32 %v134, 0.0
    %v167 = vmax.f32 %v135, 0.0
    %v168 = vmax.f32 %v136, 0.0
    %v169 = vmax.f32 %v137, 0.0
    %v170 = vmax.f32 %v138, 0.0
    %v171 = vmax.f32 %v139, 0.0
    %v172 = vmax.f32 %v140, 0.0
    %v173 = vmax.f32 %v141, 0.0
    %v174 = vmax.f32 %v142, 0.0
    %v175 = vpack.c.bf16 %v143, %v143
    %v176 = vpack.c.bf16 %v144, %v144
    %v177 = vpack.c.bf16 %v145, %v145
    %v178 = vpack.c.bf16 %v146, %v146
    %v179 = vpack.c.bf16 %v147, %v147
    %v180 = vpack.c.bf16 %v148, %v148
    %v181 = vpack.c.bf16 %v149, %v149
    %v182 = vpack.c.bf16 %v150, %v150
    %v183 = vpack.c.bf16 %v151, %v151
    %v184 = vpack.c.bf16 %v152, %v152
    %v185 = vpack.c.bf16 %v153, %v153
    %v186 = vpack.c.bf16 %v154, %v154
    %v187 = vpack.c.bf16 %v155, %v155
    %v188 = vpack.c.bf16 %v156, %v156
    %v189 = vpack.c.bf16 %v157, %v157
    %v190 = vpack.c.bf16 %v158, %v158
    %v191 = vpack.c.bf16 %v159, %v159
    %v192 = vpack.c.bf16 %v160, %v160
    %v193 = vpack.c.bf16 %v161, %v161
    %v194 = vpack.c.bf16 %v162, %v162
    %v195 = vpack.c.bf16 %v163, %v163
    %v196 = vpack.c.bf16 %v164, %v164
    %v197 = vpack.c.bf16 %v165, %v165
    %v198 = vpack.c.bf16 %v166, %v166
    %v199 = vpack.c.bf16 %v167, %v167
    %v200 = vpack.c.bf16 %v168, %v168
    %v201 = vpack.c.bf16 %v169, %v169
    %v202 = vpack.c.bf16 %v170, %v170
    %v203 = vpack.c.bf16 %v171, %v171
    %v204 = vpack.c.bf16 %v172, %v172
    %v205 = vpack.c.bf16 %v173, %v173
    %v206 = vpack.c.bf16 %v174, %v174
    %vm207 = vcmask 93184
    %208 = vst.msk [vmem:[#allocation2] sm:$0xf] %vm207, 0
    %209 = vst.msk [vmem:[#allocation2 + $0x4] sm:$0xf] %vm207, 0
    %210 = vst.msk [vmem:[#allocation2 + $0x8] sm:$0xf] %vm207, 0
    %211 = vst.msk [vmem:[#allocation2 + $0xc] sm:$0xf] %vm207, 0
    %212 = vst.msk [vmem:[#allocation2 + $0x10] sm:$0xf] %vm207, 0
    %213 = vst.msk [vmem:[#allocation2 + $0x14] sm:$0xf] %vm207, 0
    %214 = vst.msk [vmem:[#allocation2 + $0x18] sm:$0xf] %vm207, 0
    %215 = vst.msk [vmem:[#allocation2 + $0x1c] sm:$0xf] %vm207, 0
    %216 = vst.msk [vmem:[#allocation2 + $0x20] sm:$0xf] %vm207, 0
    %217 = vst.msk [vmem:[#allocation2 + $0x24] sm:$0xf] %vm207, 0
    %218 = vst.msk [vmem:[#allocation2 + $0x28] sm:$0xf] %vm207, 0
    %219 = vst.msk [vmem:[#allocation2 + $0x2c] sm:$0xf] %vm207, 0
    %220 = vst.msk [vmem:[#allocation2 + $0x30] sm:$0xf] %vm207, 0
    %221 = vst.msk [vmem:[#allocation2 + $0x34] sm:$0xf] %vm207, 0
    %222 = vst.msk [vmem:[#allocation2 + $0x38] sm:$0xf] %vm207, 0
    %223 = vst.msk [vmem:[#allocation2 + $0x3c] sm:$0xf] %vm207, 0
    %224 = vst.msk [vmem:[#allocation2 + $0x40] sm:$0xf] %vm207, 0
    %225 = vst.msk [vmem:[#allocation2 + $0x44] sm:$0xf] %vm207, 0
    %226 = vst.msk [vmem:[#allocation2 + $0x48] sm:$0xf] %vm207, 0
    %227 = vst.msk [vmem:[#allocation2 + $0x4c] sm:$0xf] %vm207, 0
    %228 = vst.msk [vmem:[#allocation2 + $0x50] sm:$0xf] %vm207, 0
    %229 = vst.msk [vmem:[#allocation2 + $0x54] sm:$0xf] %vm207, 0
    %230 = vst.msk [vmem:[#allocation2 + $0x58] sm:$0xf] %vm207, 0
    %231 = vst.msk [vmem:[#allocation2 + $0x5c] sm:$0xf] %vm207, 0
    %232 = vst.msk [vmem:[#allocation2 + $0x60] sm:$0xf] %vm207, 0
    %233 = vst.msk [vmem:[#allocation2 + $0x64] sm:$0xf] %vm207, 0
    %234 = vst.msk [vmem:[#allocation2 + $0x68] sm:$0xf] %vm207, 0
    %235 = vst.msk [vmem:[#allocation2 + $0x6c] sm:$0xf] %vm207, 0
    %236 = vst.msk [vmem:[#allocation2 + $0x70] sm:$0xf] %vm207, 0
    %237 = vst.msk [vmem:[#allocation2 + $0x74] sm:$0xf] %vm207, 0
    %238 = vst.msk [vmem:[#allocation2 + $0x78] sm:$0xf] %vm207, 0
    %239 = vst.msk [vmem:[#allocation2 + $0x7c] sm:$0xf] %vm207, 0
    %240 = vst.msk [vmem:[#allocation2 + $0x80] sm:$0xf] %vm207, 0
    %241 = vst.msk [vmem:[#allocation2 + $0x84] sm:$0xf] %vm207, 0
    %242 = vst.msk [vmem:[#allocation2 + $0x88] sm:$0xf] %vm207, 0
    %243 = vst.msk [vmem:[#allocation2 + $0x8c] sm:$0xf] %vm207, 0
    %s244 = scalar_lea.vmem [#allocation2], 4
    %vm245 = vcmask 27648
    %246 = vst.msk [vmem:[%s244] sm:$0xf] %vm245, %v176
    %247 = vst.msk [vmem:[%s244 + $0x4] sm:$0xf] %vm245, %v178
    %248 = vst.msk [vmem:[%s244 + $0x8] sm:$0xf] %vm245, %v180
    %249 = vst.msk [vmem:[%s244 + $0xc] sm:$0xf] %vm245, %v182
    %250 = vst.msk [vmem:[%s244 + $0x10] sm:$0xf] %vm245, %v184
    %251 = vst.msk [vmem:[%s244 + $0x14] sm:$0xf] %vm245, %v186
    %252 = vst.msk [vmem:[%s244 + $0x18] sm:$0xf] %vm245, %v188
    %253 = vst.msk [vmem:[%s244 + $0x1c] sm:$0xf] %vm245, %v190
    %254 = vst.msk [vmem:[%s244 + $0x24] sm:$0xf] %vm245, %v192
    %255 = vst.msk [vmem:[%s244 + $0x28] sm:$0xf] %vm245, %v194
    %256 = vst.msk [vmem:[%s244 + $0x2c] sm:$0xf] %vm245, %v196
    %257 = vst.msk [vmem:[%s244 + $0x30] sm:$0xf] %vm245, %v198
    %258 = vst.msk [vmem:[%s244 + $0x34] sm:$0xf] %vm245, %v200
    %259 = vst.msk [vmem:[%s244 + $0x38] sm:$0xf] %vm245, %v202
    %260 = vst.msk [vmem:[%s244 + $0x3c] sm:$0xf] %vm245, %v204
    %261 = vst.msk [vmem:[%s244 + $0x40] sm:$0xf] %vm245, %v206
    %v278 = vunpack.c.l.b16 %v176
    %v279 = vunpack.c.l.b16 %v178
    %v280 = vunpack.c.l.b16 %v180
    %v281 = vunpack.c.l.b16 %v182
    %v282 = vunpack.c.l.b16 %v184
    %v283 = vunpack.c.l.b16 %v186
    %v284 = vunpack.c.l.b16 %v188
    %v285 = vunpack.c.l.b16 %v190
    %v286 = vunpack.c.l.b16 %v192
    %v287 = vunpack.c.l.b16 %v194
    %v288 = vunpack.c.l.b16 %v196
    %v289 = vunpack.c.l.b16 %v198
    %v290 = vunpack.c.l.b16 %v200
    %v291 = vunpack.c.l.b16 %v202
    %v292 = vunpack.c.l.b16 %v204
    %v293 = vunpack.c.l.b16 %v206
    %v294 = vpack.c.b16 %v278, %v278
    %v295 = vpack.c.b16 %v279, %v279
    %v296 = vpack.c.b16 %v280, %v280
    %v297 = vpack.c.b16 %v281, %v281
    %v298 = vpack.c.b16 %v282, %v282
    %v299 = vpack.c.b16 %v283, %v283
    %v300 = vpack.c.b16 %v284, %v284
    %v301 = vpack.c.b16 %v285, %v285
    %v302 = vpack.c.b16 %v286, %v286
    %v303 = vpack.c.b16 %v287, %v287
    %v304 = vpack.c.b16 %v288, %v288
    %v305 = vpack.c.b16 %v289, %v289
    %v306 = vpack.c.b16 %v290, %v290
    %v307 = vpack.c.b16 %v291, %v291
    %v308 = vpack.c.b16 %v292, %v292
    %v309 = vpack.c.b16 %v293, %v293
    %v311 = vshrl.u32 %v294, 16
    %v313 = vrot.slane %v311, 7
    %v314 = vshll.u32 %v294, 16
    %v316 = vor.u32 %v313, %v314
    %v318 = vshrl.u32 %v295, 16
    %v320 = vrot.slane %v318, 7
    %v321 = vshll.u32 %v295, 16
    %v323 = vor.u32 %v320, %v321
    %v325 = vshrl.u32 %v296, 16
    %v327 = vrot.slane %v325, 7
    %v328 = vshll.u32 %v296, 16
    %v330 = vor.u32 %v327, %v328
    %v332 = vshrl.u32 %v297, 16
    %v334 = vrot.slane %v332, 7
    %v335 = vshll.u32 %v297, 16
    %v337 = vor.u32 %v334, %v335
    %v339 = vshrl.u32 %v298, 16
    %v341 = vrot.slane %v339, 7
    %v342 = vshll.u32 %v298, 16
    %v344 = vor.u32 %v341, %v342
    %v346 = vshrl.u32 %v299, 16
    %v348 = vrot.slane %v346, 7
    %v349 = vshll.u32 %v299, 16
    %v351 = vor.u32 %v348, %v349
    %v353 = vshrl.u32 %v300, 16
    %v355 = vrot.slane %v353, 7
    %v356 = vshll.u32 %v300, 16
    %v358 = vor.u32 %v355, %v356
    %v360 = vshrl.u32 %v301, 16
    %v362 = vrot.slane %v360, 7
    %v363 = vshll.u32 %v301, 16
    %v365 = vor.u32 %v362, %v363
    %v367 = vshrl.u32 %v302, 16
    %v369 = vrot.slane %v367, 7
    %v370 = vshll.u32 %v302, 16
    %v372 = vor.u32 %v369, %v370
    %v374 = vshrl.u32 %v303, 16
    %v376 = vrot.slane %v374, 7
    %v377 = vshll.u32 %v303, 16
    %v379 = vor.u32 %v376, %v377
    %v381 = vshrl.u32 %v304, 16
    %v383 = vrot.slane %v381, 7
    %v384 = vshll.u32 %v304, 16
    %v386 = vor.u32 %v383, %v384
    %v388 = vshrl.u32 %v305, 16
    %v390 = vrot.slane %v388, 7
    %v391 = vshll.u32 %v305, 16
    %v393 = vor.u32 %v390, %v391
    %v395 = vshrl.u32 %v306, 16
    %v397 = vrot.slane %v395, 7
    %v398 = vshll.u32 %v306, 16
    %v400 = vor.u32 %v397, %v398
    %v402 = vshrl.u32 %v307, 16
    %v404 = vrot.slane %v402, 7
    %v405 = vshll.u32 %v307, 16
    %v407 = vor.u32 %v404, %v405
    %v409 = vshrl.u32 %v308, 16
    %v411 = vrot.slane %v409, 7
    %v412 = vshll.u32 %v308, 16
    %v414 = vor.u32 %v411, %v412
    %v416 = vshrl.u32 %v309, 16
    %v418 = vrot.slane %v416, 7
    %v419 = vshll.u32 %v309, 16
    %v421 = vor.u32 %v418, %v419
    %vm438 = vcmask 60448
    %vm439 = vsmask.f32 7938
    %vm440 = vmand %vm438, %vm439
    %v441 = vld [vmem:[%s244] sm:$0xf]
    %v442 = vsel %vm440, %v316, %v441
    %443 = vst [vmem:[%s244] sm:$0xf] %v442
    %v444 = vld [vmem:[%s244 + $0x4] sm:$0xf]
    %v445 = vsel %vm440, %v323, %v444
    %446 = vst [vmem:[%s244 + $0x4] sm:$0xf] %v445
    %v447 = vld [vmem:[%s244 + $0x8] sm:$0xf]
    %v448 = vsel %vm440, %v330, %v447
    %449 = vst [vmem:[%s244 + $0x8] sm:$0xf] %v448
    %v450 = vld [vmem:[%s244 + $0xc] sm:$0xf]
    %v451 = vsel %vm440, %v337, %v450
    %452 = vst [vmem:[%s244 + $0xc] sm:$0xf] %v451
    %v453 = vld [vmem:[%s244 + $0x10] sm:$0xf]
    %v454 = vsel %vm440, %v344, %v453
    %455 = vst [vmem:[%s244 + $0x10] sm:$0xf] %v454
    %v456 = vld [vmem:[%s244 + $0x14] sm:$0xf]
    %v457 = vsel %vm440, %v351, %v456
    %458 = vst [vmem:[%s244 + $0x14] sm:$0xf] %v457
    %v459 = vld [vmem:[%s244 + $0x18] sm:$0xf]
    %v460 = vsel %vm440, %v358, %v459
    %461 = vst [vmem:[%s244 + $0x18] sm:$0xf] %v460
    %v462 = vld [vmem:[%s244 + $0x1c] sm:$0xf]
    %v463 = vsel %vm440, %v365, %v462
    %464 = vst [vmem:[%s244 + $0x1c] sm:$0xf] %v463
    %v465 = vld [vmem:[%s244 + $0x24] sm:$0xf]
    %v466 = vsel %vm440, %v372, %v465
    %467 = vst [vmem:[%s244 + $0x24] sm:$0xf] %v466
    %v468 = vld [vmem:[%s244 + $0x28] sm:$0xf]
    %v469 = vsel %vm440, %v379, %v468
    %470 = vst [vmem:[%s244 + $0x28] sm:$0xf] %v469
    %v471 = vld [vmem:[%s244 + $0x2c] sm:$0xf]
    %v472 = vsel %vm440, %v386, %v471
    %473 = vst [vmem:[%s244 + $0x2c] sm:$0xf] %v472
    %v474 = vld [vmem:[%s244 + $0x30] sm:$0xf]
    %v475 = vsel %vm440, %v393, %v474
    %476 = vst [vmem:[%s244 + $0x30] sm:$0xf] %v475
    %v477 = vld [vmem:[%s244 + $0x34] sm:$0xf]
    %v478 = vsel %vm440, %v400, %v477
    %479 = vst [vmem:[%s244 + $0x34] sm:$0xf] %v478
    %v480 = vld [vmem:[%s244 + $0x38] sm:$0xf]
    %v481 = vsel %vm440, %v407, %v480
    %482 = vst [vmem:[%s244 + $0x38] sm:$0xf] %v481
    %v483 = vld [vmem:[%s244 + $0x3c] sm:$0xf]
    %v484 = vsel %vm440, %v414, %v483
    %485 = vst [vmem:[%s244 + $0x3c] sm:$0xf] %v484
    %v486 = vld [vmem:[%s244 + $0x40] sm:$0xf]
    %v487 = vsel %vm440, %v421, %v486
    %488 = vst [vmem:[%s244 + $0x40] sm:$0xf] %v487
    %489 = vrot.lane.b32.xlu0 %v294, 4
    %v490 = vpop.permute.xlu0 %489
    %491 = vrot.lane.b32.xlu0 %v295, 4
    %v492 = vpop.permute.xlu0 %491
    %493 = vrot.lane.b32.xlu0 %v296, 4
    %v494 = vpop.permute.xlu0 %493
    %495 = vrot.lane.b32.xlu0 %v297, 4
    %v496 = vpop.permute.xlu0 %495
    %497 = vrot.lane.b32.xlu0 %v298, 4
    %v498 = vpop.permute.xlu0 %497
    %499 = vrot.lane.b32.xlu0 %v299, 4
    %v500 = vpop.permute.xlu0 %499
    %501 = vrot.lane.b32.xlu0 %v300, 4
    %v502 = vpop.permute.xlu0 %501
    %503 = vrot.lane.b32.xlu0 %v301, 4
    %v504 = vpop.permute.xlu0 %503
    %505 = vrot.lane.b32.xlu0 %v302, 4
    %v506 = vpop.permute.xlu0 %505
    %507 = vrot.lane.b32.xlu0 %v303, 4
    %v508 = vpop.permute.xlu0 %507
    %509 = vrot.lane.b32.xlu0 %v304, 4
    %v510 = vpop.permute.xlu0 %509
    %511 = vrot.lane.b32.xlu0 %v305, 4
    %v512 = vpop.permute.xlu0 %511
    %513 = vrot.lane.b32.xlu0 %v306, 4
    %v514 = vpop.permute.xlu0 %513
    %515 = vrot.lane.b32.xlu0 %v307, 4
    %v516 = vpop.permute.xlu0 %515
    %517 = vrot.lane.b32.xlu0 %v308, 4
    %v518 = vpop.permute.xlu0 %517
    %519 = vrot.lane.b32.xlu0 %v309, 4
    %v520 = vpop.permute.xlu0 %519
    %vm537 = vcmask 93248
    %538 = vst.msk [vmem:[%s244] sm:$0xf] %vm537, %v490
    %539 = vst.msk [vmem:[%s244 + $0x4] sm:$0xf] %vm537, %v492
    %540 = vst.msk [vmem:[%s244 + $0x8] sm:$0xf] %vm537, %v494
    %541 = vst.msk [vmem:[%s244 + $0xc] sm:$0xf] %vm537, %v496
    %542 = vst.msk [vmem:[%s244 + $0x10] sm:$0xf] %vm537, %v498
    %543 = vst.msk [vmem:[%s244 + $0x14] sm:$0xf] %vm537, %v500
    %544 = vst.msk [vmem:[%s244 + $0x18] sm:$0xf] %vm537, %v502
    %545 = vst.msk [vmem:[%s244 + $0x1c] sm:$0xf] %vm537, %v504
    %546 = vst.msk [vmem:[%s244 + $0x24] sm:$0xf] %vm537, %v506
    %547 = vst.msk [vmem:[%s244 + $0x28] sm:$0xf] %vm537, %v508
    %548 = vst.msk [vmem:[%s244 + $0x2c] sm:$0xf] %vm537, %v510
    %549 = vst.msk [vmem:[%s244 + $0x30] sm:$0xf] %vm537, %v512
    %550 = vst.msk [vmem:[%s244 + $0x34] sm:$0xf] %vm537, %v514
    %551 = vst.msk [vmem:[%s244 + $0x38] sm:$0xf] %vm537, %v516
    %552 = vst.msk [vmem:[%s244 + $0x3c] sm:$0xf] %vm537, %v518
    %553 = vst.msk [vmem:[%s244 + $0x40] sm:$0xf] %vm537, %v520
    %s554 = scalar_lea.vmem [#allocation2], 72
    %555 = vst.msk [vmem:[%s554] sm:$0xf] %vm245, %v175
    %556 = vst.msk [vmem:[%s554 + $0x4] sm:$0xf] %vm245, %v177
    %557 = vst.msk [vmem:[%s554 + $0x8] sm:$0xf] %vm245, %v179
    %558 = vst.msk [vmem:[%s554 + $0xc] sm:$0xf] %vm245, %v181
    %559 = vst.msk [vmem:[%s554 + $0x10] sm:$0xf] %vm245, %v183
    %560 = vst.msk [vmem:[%s554 + $0x14] sm:$0xf] %vm245, %v185
    %561 = vst.msk [vmem:[%s554 + $0x18] sm:$0xf] %vm245, %v187
    %562 = vst.msk [vmem:[%s554 + $0x1c] sm:$0xf] %vm245, %v189
    %563 = vst.msk [vmem:[%s554 + $0x24] sm:$0xf] %vm245, %v191
    %564 = vst.msk [vmem:[%s554 + $0x28] sm:$0xf] %vm245, %v193
    %565 = vst.msk [vmem:[%s554 + $0x2c] sm:$0xf] %vm245, %v195
    %566 = vst.msk [vmem:[%s554 + $0x30] sm:$0xf] %vm245, %v197
    %567 = vst.msk [vmem:[%s554 + $0x34] sm:$0xf] %vm245, %v199
    %568 = vst.msk [vmem:[%s554 + $0x38] sm:$0xf] %vm245, %v201
    %569 = vst.msk [vmem:[%s554 + $0x3c] sm:$0xf] %vm245, %v203
    %570 = vst.msk [vmem:[%s554 + $0x40] sm:$0xf] %vm245, %v205
    %v587 = vunpack.c.l.b16 %v175
    %v588 = vunpack.c.l.b16 %v177
    %v589 = vunpack.c.l.b16 %v179
    %v590 = vunpack.c.l.b16 %v181
    %v591 = vunpack.c.l.b16 %v183
    %v592 = vunpack.c.l.b16 %v185
    %v593 = vunpack.c.l.b16 %v187
    %v594 = vunpack.c.l.b16 %v189
    %v595 = vunpack.c.l.b16 %v191
    %v596 = vunpack.c.l.b16 %v193
    %v597 = vunpack.c.l.b16 %v195
    %v598 = vunpack.c.l.b16 %v197
    %v599 = vunpack.c.l.b16 %v199
    %v600 = vunpack.c.l.b16 %v201
    %v601 = vunpack.c.l.b16 %v203
    %v602 = vunpack.c.l.b16 %v205
    %v603 = vpack.c.b16 %v587, %v587
    %v604 = vpack.c.b16 %v588, %v588
    %v605 = vpack.c.b16 %v589, %v589
    %v606 = vpack.c.b16 %v590, %v590
    %v607 = vpack.c.b16 %v591, %v591
    %v608 = vpack.c.b16 %v592, %v592
    %v609 = vpack.c.b16 %v593, %v593
    %v610 = vpack.c.b16 %v594, %v594
    %v611 = vpack.c.b16 %v595, %v595
    %v612 = vpack.c.b16 %v596, %v596
    %v613 = vpack.c.b16 %v597, %v597
    %v614 = vpack.c.b16 %v598, %v598
    %v615 = vpack.c.b16 %v599, %v599
    %v616 = vpack.c.b16 %v600, %v600
    %v617 = vpack.c.b16 %v601, %v601
    %v618 = vpack.c.b16 %v602, %v602
    %v620 = vshrl.u32 %v603, 16
    %v622 = vrot.slane %v620, 7
    %v623 = vshll.u32 %v603, 16
    %v625 = vor.u32 %v622, %v623
    %v627 = vshrl.u32 %v604, 16
    %v629 = vrot.slane %v627, 7
    %v630 = vshll.u32 %v604, 16
    %v632 = vor.u32 %v629, %v630
    %v634 = vshrl.u32 %v605, 16
    %v636 = vrot.slane %v634, 7
    %v637 = vshll.u32 %v605, 16
    %v639 = vor.u32 %v636, %v637
    %v641 = vshrl.u32 %v606, 16
    %v643 = vrot.slane %v641, 7
    %v644 = vshll.u32 %v606, 16
    %v646 = vor.u32 %v643, %v644
    %v648 = vshrl.u32 %v607, 16
    %v650 = vrot.slane %v648, 7
    %v651 = vshll.u32 %v607, 16
    %v653 = vor.u32 %v650, %v651
    %v655 = vshrl.u32 %v608, 16
    %v657 = vrot.slane %v655, 7
    %v658 = vshll.u32 %v608, 16
    %v660 = vor.u32 %v657, %v658
    %v662 = vshrl.u32 %v609, 16
    %v664 = vrot.slane %v662, 7
    %v665 = vshll.u32 %v609, 16
    %v667 = vor.u32 %v664, %v665
    %v669 = vshrl.u32 %v610, 16
    %v671 = vrot.slane %v669, 7
    %v672 = vshll.u32 %v610, 16
    %v674 = vor.u32 %v671, %v672
    %v676 = vshrl.u32 %v611, 16
    %v678 = vrot.slane %v676, 7
    %v679 = vshll.u32 %v611, 16
    %v681 = vor.u32 %v678, %v679
    %v683 = vshrl.u32 %v612, 16
    %v685 = vrot.slane %v683, 7
    %v686 = vshll.u32 %v612, 16
    %v688 = vor.u32 %v685, %v686
    %v690 = vshrl.u32 %v613, 16
    %v692 = vrot.slane %v690, 7
    %v693 = vshll.u32 %v613, 16
    %v695 = vor.u32 %v692, %v693
    %v697 = vshrl.u32 %v614, 16
    %v699 = vrot.slane %v697, 7
    %v700 = vshll.u32 %v614, 16
    %v702 = vor.u32 %v699, %v700
    %v704 = vshrl.u32 %v615, 16
    %v706 = vrot.slane %v704, 7
    %v707 = vshll.u32 %v615, 16
    %v709 = vor.u32 %v706, %v707
    %v711 = vshrl.u32 %v616, 16
    %v713 = vrot.slane %v711, 7
    %v714 = vshll.u32 %v616, 16
    %v716 = vor.u32 %v713, %v714
    %v718 = vshrl.u32 %v617, 16
    %v720 = vrot.slane %v718, 7
    %v721 = vshll.u32 %v617, 16
    %v723 = vor.u32 %v720, %v721
    %v725 = vshrl.u32 %v618, 16
    %v727 = vrot.slane %v725, 7
    %v728 = vshll.u32 %v618, 16
    %v730 = vor.u32 %v727, %v728
    %v747 = vld [vmem:[%s554] sm:$0xf]
    %v748 = vsel %vm440, %v625, %v747
    %749 = vst [vmem:[%s554] sm:$0xf] %v748
    %v750 = vld [vmem:[%s554 + $0x4] sm:$0xf]
    %v751 = vsel %vm440, %v632, %v750
    %752 = vst [vmem:[%s554 + $0x4] sm:$0xf] %v751
    %v753 = vld [vmem:[%s554 + $0x8] sm:$0xf]
    %v754 = vsel %vm440, %v639, %v753
    %755 = vst [vmem:[%s554 + $0x8] sm:$0xf] %v754
    %v756 = vld [vmem:[%s554 + $0xc] sm:$0xf]
    %v757 = vsel %vm440, %v646, %v756
    %758 = vst [vmem:[%s554 + $0xc] sm:$0xf] %v757
    %v759 = vld [vmem:[%s554 + $0x10] sm:$0xf]
    %v760 = vsel %vm440, %v653, %v759
    %761 = vst [vmem:[%s554 + $0x10] sm:$0xf] %v760
    %v762 = vld [vmem:[%s554 + $0x14] sm:$0xf]
    %v763 = vsel %vm440, %v660, %v762
    %764 = vst [vmem:[%s554 + $0x14] sm:$0xf] %v763
    %v765 = vld [vmem:[%s554 + $0x18] sm:$0xf]
    %v766 = vsel %vm440, %v667, %v765
    %767 = vst [vmem:[%s554 + $0x18] sm:$0xf] %v766
    %v768 = vld [vmem:[%s554 + $0x1c] sm:$0xf]
    %v769 = vsel %vm440, %v674, %v768
    %770 = vst [vmem:[%s554 + $0x1c] sm:$0xf] %v769
    %v771 = vld [vmem:[%s554 + $0x24] sm:$0xf]
    %v772 = vsel %vm440, %v681, %v771
    %773 = vst [vmem:[%s554 + $0x24] sm:$0xf] %v772
    %v774 = vld [vmem:[%s554 + $0x28] sm:$0xf]
    %v775 = vsel %vm440, %v688, %v774
    %776 = vst [vmem:[%s554 + $0x28] sm:$0xf] %v775
    %v777 = vld [vmem:[%s554 + $0x2c] sm:$0xf]
    %v778 = vsel %vm440, %v695, %v777
    %779 = vst [vmem:[%s554 + $0x2c] sm:$0xf] %v778
    %v780 = vld [vmem:[%s554 + $0x30] sm:$0xf]
    %v781 = vsel %vm440, %v702, %v780
    %782 = vst [vmem:[%s554 + $0x30] sm:$0xf] %v781
    %v783 = vld [vmem:[%s554 + $0x34] sm:$0xf]
    %v784 = vsel %vm440, %v709, %v783
    %785 = vst [vmem:[%s554 + $0x34] sm:$0xf] %v784
    %v786 = vld [vmem:[%s554 + $0x38] sm:$0xf]
    %v787 = vsel %vm440, %v716, %v786
    %788 = vst [vmem:[%s554 + $0x38] sm:$0xf] %v787
    %v789 = vld [vmem:[%s554 + $0x3c] sm:$0xf]
    %v790 = vsel %vm440, %v723, %v789
    %791 = vst [vmem:[%s554 + $0x3c] sm:$0xf] %v790
    %v792 = vld [vmem:[%s554 + $0x40] sm:$0xf]
    %v793 = vsel %vm440, %v730, %v792
    %794 = vst [vmem:[%s554 + $0x40] sm:$0xf] %v793
    %795 = vrot.lane.b32.xlu0 %v603, 4
    %v796 = vpop.permute.xlu0 %795
    %797 = vrot.lane.b32.xlu0 %v604, 4
    %v798 = vpop.permute.xlu0 %797
    %799 = vrot.lane.b32.xlu0 %v605, 4
    %v800 = vpop.permute.xlu0 %799
    %801 = vrot.lane.b32.xlu0 %v606, 4
    %v802 = vpop.permute.xlu0 %801
    %803 = vrot.lane.b32.xlu0 %v607, 4
    %v804 = vpop.permute.xlu0 %803
    %805 = vrot.lane.b32.xlu0 %v608, 4
    %v806 = vpop.permute.xlu0 %805
    %807 = vrot.lane.b32.xlu0 %v609, 4
    %v808 = vpop.permute.xlu0 %807
    %809 = vrot.lane.b32.xlu0 %v610, 4
    %v810 = vpop.permute.xlu0 %809
    %811 = vrot.lane.b32.xlu0 %v611, 4
    %v812 = vpop.permute.xlu0 %811
    %813 = vrot.lane.b32.xlu0 %v612, 4
    %v814 = vpop.permute.xlu0 %813
    %815 = vrot.lane.b32.xlu0 %v613, 4
    %v816 = vpop.permute.xlu0 %815
    %817 = vrot.lane.b32.xlu0 %v614, 4
    %v818 = vpop.permute.xlu0 %817
    %819 = vrot.lane.b32.xlu0 %v615, 4
    %v820 = vpop.permute.xlu0 %819
    %821 = vrot.lane.b32.xlu0 %v616, 4
    %v822 = vpop.permute.xlu0 %821
    %823 = vrot.lane.b32.xlu0 %v617, 4
    %v824 = vpop.permute.xlu0 %823
    %825 = vrot.lane.b32.xlu0 %v618, 4
    %v826 = vpop.permute.xlu0 %825
    %843 = vst.msk [vmem:[%s554] sm:$0xf] %vm537, %v796
    %844 = vst.msk [vmem:[%s554 + $0x4] sm:$0xf] %vm537, %v798
    %845 = vst.msk [vmem:[%s554 + $0x8] sm:$0xf] %vm537, %v800
    %846 = vst.msk [vmem:[%s554 + $0xc] sm:$0xf] %vm537, %v802
    %847 = vst.msk [vmem:[%s554 + $0x10] sm:$0xf] %vm537, %v804
    %848 = vst.msk [vmem:[%s554 + $0x14] sm:$0xf] %vm537, %v806
    %849 = vst.msk [vmem:[%s554 + $0x18] sm:$0xf] %vm537, %v808
    %850 = vst.msk [vmem:[%s554 + $0x1c] sm:$0xf] %vm537, %v810
    %851 = vst.msk [vmem:[%s554 + $0x24] sm:$0xf] %vm537, %v812
    %852 = vst.msk [vmem:[%s554 + $0x28] sm:$0xf] %vm537, %v814
    %853 = vst.msk [vmem:[%s554 + $0x2c] sm:$0xf] %vm537, %v816
    %854 = vst.msk [vmem:[%s554 + $0x30] sm:$0xf] %vm537, %v818
    %855 = vst.msk [vmem:[%s554 + $0x34] sm:$0xf] %vm537, %v820
    %856 = vst.msk [vmem:[%s554 + $0x38] sm:$0xf] %vm537, %v822
    %857 = vst.msk [vmem:[%s554 + $0x3c] sm:$0xf] %vm537, %v824
    %858 = vst.msk [vmem:[%s554 + $0x40] sm:$0xf] %vm537, %v826
  $region33: #{basic_block_forward.2} parent=0 // pred_fallthru
    _
  %v859 = vld [vmem:[#allocation2] sm:$0xf]
  %v860 = vld [vmem:[#allocation2 + $0x4] sm:$0xf]
  %v861 = vld [vmem:[#allocation2 + $0x8] sm:$0xf]
  %v862 = vld [vmem:[#allocation2 + $0xc] sm:$0xf]
  %v863 = vld [vmem:[#allocation2 + $0x10] sm:$0xf]
  %v864 = vld [vmem:[#allocation2 + $0x14] sm:$0xf]
  %v865 = vld [vmem:[#allocation2 + $0x18] sm:$0xf]
  %v866 = vld [vmem:[#allocation2 + $0x1c] sm:$0xf]
  %v867 = vld [vmem:[#allocation2 + $0x24] sm:$0xf]
  %v868 = vld [vmem:[#allocation2 + $0x28] sm:$0xf]
  %v869 = vld [vmem:[#allocation2 + $0x2c] sm:$0xf]
  %v870 = vld [vmem:[#allocation2 + $0x30] sm:$0xf]
  %v871 = vld [vmem:[#allocation2 + $0x34] sm:$0xf]
  %v872 = vld [vmem:[#allocation2 + $0x38] sm:$0xf]
  %v873 = vld [vmem:[#allocation2 + $0x3c] sm:$0xf]
  %v874 = vld [vmem:[#allocation2 + $0x40] sm:$0xf]
  %v875 = vld [vmem:[%s1] sm:$0xf]
  %v876 = vld [vmem:[%s1 + $0x4] sm:$0x3]
  %s877 = scalar_lea.vmem [#allocation2], 72
  %v878 = vld [vmem:[%s877] sm:$0xf]
  %v879 = vld [vmem:[%s877 + $0x4] sm:$0xf]
  %v880 = vld [vmem:[%s877 + $0x8] sm:$0xf]
  %v881 = vld [vmem:[%s877 + $0xc] sm:$0xf]
  %v882 = vld [vmem:[%s877 + $0x10] sm:$0xf]
  %v883 = vld [vmem:[%s877 + $0x14] sm:$0xf]
  %v884 = vld [vmem:[%s877 + $0x18] sm:$0xf]
  %v885 = vld [vmem:[%s877 + $0x1c] sm:$0xf]
  %v886 = vld [vmem:[%s877 + $0x24] sm:$0xf]
  %v887 = vld [vmem:[%s877 + $0x28] sm:$0xf]
  %v888 = vld [vmem:[%s877 + $0x2c] sm:$0xf]
  %v889 = vld [vmem:[%s877 + $0x30] sm:$0xf]
  %v890 = vld [vmem:[%s877 + $0x34] sm:$0xf]
  %v891 = vld [vmem:[%s877 + $0x38] sm:$0xf]
  %v892 = vld [vmem:[%s877 + $0x3c] sm:$0xf]
  %v893 = vld [vmem:[%s877 + $0x40] sm:$0xf]
  %s894 = scalar_lea.vmem %s1, 8
  %v895 = vld [vmem:[%s894] sm:$0xf]
  %v896 = vld [vmem:[%s894 + $0x4] sm:$0x3]
  %v913 = vunpack.c.l.b16 %v878
  %v914 = vunpack.c.l.b16 %v879
  %v915 = vunpack.c.l.b16 %v880
  %v916 = vunpack.c.l.b16 %v881
  %v917 = vunpack.c.l.b16 %v882
  %v918 = vunpack.c.l.b16 %v883
  %v919 = vunpack.c.l.b16 %v884
  %v920 = vunpack.c.l.b16 %v885
  %v921 = vunpack.c.l.b16 %v886
  %v922 = vunpack.c.l.b16 %v887
  %v923 = vunpack.c.l.b16 %v888
  %v924 = vunpack.c.l.b16 %v889
  %v925 = vunpack.c.l.b16 %v890
  %v926 = vunpack.c.l.b16 %v891
  %v927 = vunpack.c.l.b16 %v892
  %v928 = vunpack.c.l.b16 %v893
  %v929 = vpack.c.b16 %v914, %v913
  %v930 = vpack.c.b16 %v916, %v915
  %v931 = vpack.c.b16 %v918, %v917
  %v932 = vpack.c.b16 %v920, %v919
  %v933 = vpack.c.b16 %v922, %v921
  %v934 = vpack.c.b16 %v924, %v923
  %v935 = vpack.c.b16 %v926, %v925
  %v936 = vpack.c.b16 %v928, %v927
  %v939 = vunpack.c.l.b16 %v895
  %v940 = vunpack.c.l.b16 %v896
  %v941 = vpack.c.b16 %v940, %v939
  %vm942 = vcmask 97280
  %v944 = vsel %vm942, %v929, 0
  %v947 = vsel %vm942, %v930, 0
  %v950 = vsel %vm942, %v931, 0
  %v953 = vsel %vm942, %v932, 0
  %v956 = vsel %vm942, %v933, 0
  %v959 = vsel %vm942, %v934, 0
  %v962 = vsel %vm942, %v935, 0
  %v965 = vsel %vm942, %v936, 0
  %vm967 = vcmask 1045504
  %v969 = vsel %vm967, %v941, 0
  %971 = vmatprep.subr.bf16.mxu0 0
  %972 = vmatpush1.bf16.msra.mxu0 0
  %973 = vmatprep.subr.bf16.mxu0 0
  %974 = vmatpush1.bf16.msra.mxu0 0
  %975 = vmatprep.subr.bf16.mxu0 0
  %976 = vmatpush1.bf16.msra.mxu0 0
  %977 = vmatprep.subr.bf16.mxu0 0
  %978 = vmatpush1.bf16.msra.mxu0 0
  %979 = vmatprep.subr.bf16.mxu0 0
  %980 = vmatpush1.bf16.msra.mxu0 0
  %981 = vmatprep.subr.bf16.mxu0 0
  %982 = vmatpush1.bf16.msra.mxu0 0
  %983 = vmatprep.subr.bf16.mxu0 0
  %984 = vmatpush1.bf16.msra.mxu0 0
  %985 = vmatprep.subr.bf16.mxu0 0
  %986 = vmatpush1.bf16.msra.mxu0 %v969
  %987 = vmatprep.subr.bf16.mxu0 0
  %988 = vmatpush2.bf16.msra.mxu0 0
  %989 = vmatprep.subr.bf16.mxu0 0
  %990 = vmatpush2.bf16.msra.mxu0 0
  %991 = vmatprep.subr.bf16.mxu0 0
  %992 = vmatpush2.bf16.msra.mxu0 0
  %993 = vmatprep.subr.bf16.mxu0 0
  %994 = vmatpush2.bf16.msra.mxu0 0
  %995 = vmatprep.subr.bf16.mxu0 0
  %996 = vmatpush2.bf16.msra.mxu0 0
  %997 = vmatprep.subr.bf16.mxu0 0
  %998 = vmatpush2.bf16.msra.mxu0 0
  %999 = vmatprep.subr.bf16.mxu0 0
  %1000 = vmatpush2.bf16.msra.mxu0 0
  %1001 = vmatprep.subr.bf16.mxu0 0
  %1002 = vmatpush2.bf16.msra.mxu0 0
  %1003 = vmatprep.mubr.bf16.mxu0 0
  %1004 = vmatmul.mubr.bf16.gmra.mxu0 %v944
  %v1005 = vpop.f32.mrf.mxu0
  %v1006 = vadd.f32 0.0, %v1005
  %v1007 = vpop.f32.mrf.mxu0
  %v1008 = vpop.f32.mrf.mxu0
  %v1009 = vadd.f32 0.0, %v1008
  %v1010 = vpop.f32.mrf.mxu0
  %1011 = vmatprep.mubr.bf16.mxu0 0
  %1012 = vmatmul.mubr.bf16.gmra.mxu0 %v947
  %v1013 = vpop.f32.mrf.mxu0
  %v1014 = vadd.f32 0.0, %v1013
  %v1015 = vpop.f32.mrf.mxu0
  %v1016 = vpop.f32.mrf.mxu0
  %v1017 = vadd.f32 0.0, %v1016
  %v1018 = vpop.f32.mrf.mxu0
  %1019 = vmatprep.mubr.bf16.mxu0 0
  %1020 = vmatmul.mubr.bf16.gmra.mxu0 %v950
  %v1021 = vpop.f32.mrf.mxu0
  %v1022 = vadd.f32 0.0, %v1021
  %v1023 = vpop.f32.mrf.mxu0
  %v1024 = vpop.f32.mrf.mxu0
  %v1025 = vadd.f32 0.0, %v1024
  %v1026 = vpop.f32.mrf.mxu0
  %1027 = vmatprep.mubr.bf16.mxu0 0
  %1028 = vmatmul.mubr.bf16.gmra.mxu0 %v953
  %v1029 = vpop.f32.mrf.mxu0
  %v1030 = vadd.f32 0.0, %v1029
  %v1031 = vpop.f32.mrf.mxu0
  %v1032 = vpop.f32.mrf.mxu0
  %v1033 = vadd.f32 0.0, %v1032
  %v1034 = vpop.f32.mrf.mxu0
  %1035 = vmatprep.mubr.bf16.mxu0 0
  %1036 = vmatmul.mubr.bf16.gmra.mxu0 %v956
  %v1037 = vpop.f32.mrf.mxu0
  %v1038 = vadd.f32 0.0, %v1037
  %v1039 = vpop.f32.mrf.mxu0
  %v1040 = vpop.f32.mrf.mxu0
  %v1041 = vadd.f32 0.0, %v1040
  %v1042 = vpop.f32.mrf.mxu0
  %1043 = vmatprep.mubr.bf16.mxu0 0
  %1044 = vmatmul.mubr.bf16.gmra.mxu0 %v959
  %v1045 = vpop.f32.mrf.mxu0
  %v1046 = vadd.f32 0.0, %v1045
  %v1047 = vpop.f32.mrf.mxu0
  %v1048 = vpop.f32.mrf.mxu0
  %v1049 = vadd.f32 0.0, %v1048
  %v1050 = vpop.f32.mrf.mxu0
  %1051 = vmatprep.mubr.bf16.mxu0 0
  %1052 = vmatmul.mubr.bf16.gmra.mxu0 %v962
  %v1053 = vpop.f32.mrf.mxu0
  %v1054 = vadd.f32 0.0, %v1053
  %v1055 = vpop.f32.mrf.mxu0
  %v1056 = vpop.f32.mrf.mxu0
  %v1057 = vadd.f32 0.0, %v1056
  %v1058 = vpop.f32.mrf.mxu0
  %1059 = vmatprep.mubr.bf16.mxu0 0
  %1060 = vmatmul.mubr.bf16.gmra.mxu0 %v965
  %v1061 = vpop.f32.mrf.mxu0
  %v1062 = vadd.f32 0.0, %v1061
  %v1063 = vpop.f32.mrf.mxu0
  %v1064 = vpop.f32.mrf.mxu0
  %v1065 = vadd.f32 0.0, %v1064
  %v1066 = vpop.f32.mrf.mxu0
  %1067 = vdwg.mxu0
  %v1084 = vunpack.c.l.b16 %v859
  %v1085 = vunpack.c.l.b16 %v860
  %v1086 = vunpack.c.l.b16 %v861
  %v1087 = vunpack.c.l.b16 %v862
  %v1088 = vunpack.c.l.b16 %v863
  %v1089 = vunpack.c.l.b16 %v864
  %v1090 = vunpack.c.l.b16 %v865
  %v1091 = vunpack.c.l.b16 %v866
  %v1092 = vunpack.c.l.b16 %v867
  %v1093 = vunpack.c.l.b16 %v868
  %v1094 = vunpack.c.l.b16 %v869
  %v1095 = vunpack.c.l.b16 %v870
  %v1096 = vunpack.c.l.b16 %v871
  %v1097 = vunpack.c.l.b16 %v872
  %v1098 = vunpack.c.l.b16 %v873
  %v1099 = vunpack.c.l.b16 %v874
  %v1100 = vpack.c.b16 %v1085, %v1084
  %v1101 = vpack.c.b16 %v1087, %v1086
  %v1102 = vpack.c.b16 %v1089, %v1088
  %v1103 = vpack.c.b16 %v1091, %v1090
  %v1104 = vpack.c.b16 %v1093, %v1092
  %v1105 = vpack.c.b16 %v1095, %v1094
  %v1106 = vpack.c.b16 %v1097, %v1096
  %v1107 = vpack.c.b16 %v1099, %v1098
  %v1110 = vunpack.c.l.b16 %v875
  %v1111 = vunpack.c.l.b16 %v876
  %v1112 = vpack.c.b16 %v1111, %v1110
  %v1114 = vsel %vm942, %v1100, 0
  %v1117 = vsel %vm942, %v1101, 0
  %v1120 = vsel %vm942, %v1102, 0
  %v1123 = vsel %vm942, %v1103, 0
  %v1126 = vsel %vm942, %v1104, 0
  %v1129 = vsel %vm942, %v1105, 0
  %v1132 = vsel %vm942, %v1106, 0
  %v1135 = vsel %vm942, %v1107, 0
  %v1138 = vsel %vm967, %v1112, 0
  %1140 = vmatprep.subr.bf16.mxu0 0
  %1141 = vmatpush1.bf16.msra.mxu0 0
  %1142 = vmatprep.subr.bf16.mxu0 0
  %1143 = vmatpush1.bf16.msra.mxu0 0
  %1144 = vmatprep.subr.bf16.mxu0 0
  %1145 = vmatpush1.bf16.msra.mxu0 0
  %1146 = vmatprep.subr.bf16.mxu0 0
  %1147 = vmatpush1.bf16.msra.mxu0 0
  %1148 = vmatprep.subr.bf16.mxu0 0
  %1149 = vmatpush1.bf16.msra.mxu0 0
  %1150 = vmatprep.subr.bf16.mxu0 0
  %1151 = vmatpush1.bf16.msra.mxu0 0
  %1152 = vmatprep.subr.bf16.mxu0 0
  %1153 = vmatpush1.bf16.msra.mxu0 0
  %1154 = vmatprep.subr.bf16.mxu0 0
  %1155 = vmatpush1.bf16.msra.mxu0 %v1138
  %1156 = vmatprep.subr.bf16.mxu0 0
  %1157 = vmatpush2.bf16.msra.mxu0 0
  %1158 = vmatprep.subr.bf16.mxu0 0
  %1159 = vmatpush2.bf16.msra.mxu0 0
  %1160 = vmatprep.subr.bf16.mxu0 0
  %1161 = vmatpush2.bf16.msra.mxu0 0
  %1162 = vmatprep.subr.bf16.mxu0 0
  %1163 = vmatpush2.bf16.msra.mxu0 0
  %1164 = vmatprep.subr.bf16.mxu0 0
  %1165 = vmatpush2.bf16.msra.mxu0 0
  %1166 = vmatprep.subr.bf16.mxu0 0
  %1167 = vmatpush2.bf16.msra.mxu0 0
  %1168 = vmatprep.subr.bf16.mxu0 0
  %1169 = vmatpush2.bf16.msra.mxu0 0
  %1170 = vmatprep.subr.bf16.mxu0 0
  %1171 = vmatpush2.bf16.msra.mxu0 0
  %1172 = vmatprep.mubr.bf16.mxu0 0
  %1173 = vmatmul.mubr.bf16.gmra.mxu0 %v1114
  %v1174 = vpop.f32.mrf.mxu0
  %v1175 = vadd.f32 %v1006, %v1174
  %v1176 = vpop.f32.mrf.mxu0
  %v1177 = vpop.f32.mrf.mxu0
  %v1178 = vadd.f32 %v1009, %v1177
  %v1179 = vpop.f32.mrf.mxu0
  %1180 = vmatprep.mubr.bf16.mxu0 0
  %1181 = vmatmul.mubr.bf16.gmra.mxu0 %v1117
  %v1182 = vpop.f32.mrf.mxu0
  %v1183 = vadd.f32 %v1014, %v1182
  %v1184 = vpop.f32.mrf.mxu0
  %v1185 = vpop.f32.mrf.mxu0
  %v1186 = vadd.f32 %v1017, %v1185
  %v1187 = vpop.f32.mrf.mxu0
  %1188 = vmatprep.mubr.bf16.mxu0 0
  %1189 = vmatmul.mubr.bf16.gmra.mxu0 %v1120
  %v1190 = vpop.f32.mrf.mxu0
  %v1191 = vadd.f32 %v1022, %v1190
  %v1192 = vpop.f32.mrf.mxu0
  %v1193 = vpop.f32.mrf.mxu0
  %v1194 = vadd.f32 %v1025, %v1193
  %v1195 = vpop.f32.mrf.mxu0
  %1196 = vmatprep.mubr.bf16.mxu0 0
  %1197 = vmatmul.mubr.bf16.gmra.mxu0 %v1123
  %v1198 = vpop.f32.mrf.mxu0
  %v1199 = vadd.f32 %v1030, %v1198
  %v1200 = vpop.f32.mrf.mxu0
  %v1201 = vpop.f32.mrf.mxu0
  %v1202 = vadd.f32 %v1033, %v1201
  %v1203 = vpop.f32.mrf.mxu0
  %1204 = vmatprep.mubr.bf16.mxu0 0
  %1205 = vmatmul.mubr.bf16.gmra.mxu0 %v1126
  %v1206 = vpop.f32.mrf.mxu0
  %v1207 = vadd.f32 %v1038, %v1206
  %v1208 = vpop.f32.mrf.mxu0
  %v1209 = vpop.f32.mrf.mxu0
  %v1210 = vadd.f32 %v1041, %v1209
  %v1211 = vpop.f32.mrf.mxu0
  %1212 = vmatprep.mubr.bf16.mxu0 0
  %1213 = vmatmul.mubr.bf16.gmra.mxu0 %v1129
  %v1214 = vpop.f32.mrf.mxu0
  %v1215 = vadd.f32 %v1046, %v1214
  %v1216 = vpop.f32.mrf.mxu0
  %v1217 = vpop.f32.mrf.mxu0
  %v1218 = vadd.f32 %v1049, %v1217
  %v1219 = vpop.f32.mrf.mxu0
  %1220 = vmatprep.mubr.bf16.mxu0 0
  %1221 = vmatmul.mubr.bf16.gmra.mxu0 %v1132
  %v1222 = vpop.f32.mrf.mxu0
  %v1223 = vadd.f32 %v1054, %v1222
  %v1224 = vpop.f32.mrf.mxu0
  %v1225 = vpop.f32.mrf.mxu0
  %v1226 = vadd.f32 %v1057, %v1225
  %v1227 = vpop.f32.mrf.mxu0
  %1228 = vmatprep.mubr.bf16.mxu0 0
  %1229 = vmatmul.mubr.bf16.gmra.mxu0 %v1135
  %v1230 = vpop.f32.mrf.mxu0
  %v1231 = vadd.f32 %v1062, %v1230
  %v1232 = vpop.f32.mrf.mxu0
  %v1233 = vpop.f32.mrf.mxu0
  %v1234 = vadd.f32 %v1065, %v1233
  %v1235 = vpop.f32.mrf.mxu0
  %1236 = vdwg.mxu0
  %s1237 = scalar_lea.vmem [#allocation2], 4
  %v1238 = vld [vmem:[%s1237] sm:$0xf]
  %v1239 = vld [vmem:[%s1237 + $0x4] sm:$0xf]
  %v1240 = vld [vmem:[%s1237 + $0x8] sm:$0xf]
  %v1241 = vld [vmem:[%s1237 + $0xc] sm:$0xf]
  %v1242 = vld [vmem:[%s1237 + $0x10] sm:$0xf]
  %v1243 = vld [vmem:[%s1237 + $0x14] sm:$0xf]
  %v1244 = vld [vmem:[%s1237 + $0x18] sm:$0xf]
  %v1245 = vld [vmem:[%s1237 + $0x1c] sm:$0xf]
  %v1246 = vld [vmem:[%s1237 + $0x24] sm:$0xf]
  %v1247 = vld [vmem:[%s1237 + $0x28] sm:$0xf]
  %v1248 = vld [vmem:[%s1237 + $0x2c] sm:$0xf]
  %v1249 = vld [vmem:[%s1237 + $0x30] sm:$0xf]
  %v1250 = vld [vmem:[%s1237 + $0x34] sm:$0xf]
  %v1251 = vld [vmem:[%s1237 + $0x38] sm:$0xf]
  %v1252 = vld [vmem:[%s1237 + $0x3c] sm:$0xf]
  %v1253 = vld [vmem:[%s1237 + $0x40] sm:$0xf]
  %s1254 = scalar_lea.vmem %s1, 16
  %v1255 = vld [vmem:[%s1254] sm:$0xf]
  %v1256 = vld [vmem:[%s1254 + $0x4] sm:$0x3]
  %v1273 = vunpack.c.l.b16 %v1238
  %v1274 = vunpack.c.l.b16 %v1239
  %v1275 = vunpack.c.l.b16 %v1240
  %v1276 = vunpack.c.l.b16 %v1241
  %v1277 = vunpack.c.l.b16 %v1242
  %v1278 = vunpack.c.l.b16 %v1243
  %v1279 = vunpack.c.l.b16 %v1244
  %v1280 = vunpack.c.l.b16 %v1245
  %v1281 = vunpack.c.l.b16 %v1246
  %v1282 = vunpack.c.l.b16 %v1247
  %v1283 = vunpack.c.l.b16 %v1248
  %v1284 = vunpack.c.l.b16 %v1249
  %v1285 = vunpack.c.l.b16 %v1250
  %v1286 = vunpack.c.l.b16 %v1251
  %v1287 = vunpack.c.l.b16 %v1252
  %v1288 = vunpack.c.l.b16 %v1253
  %v1289 = vpack.c.b16 %v1274, %v1273
  %v1290 = vpack.c.b16 %v1276, %v1275
  %v1291 = vpack.c.b16 %v1278, %v1277
  %v1292 = vpack.c.b16 %v1280, %v1279
  %v1293 = vpack.c.b16 %v1282, %v1281
  %v1294 = vpack.c.b16 %v1284, %v1283
  %v1295 = vpack.c.b16 %v1286, %v1285
  %v1296 = vpack.c.b16 %v1288, %v1287
  %v1299 = vunpack.c.l.b16 %v1255
  %v1300 = vunpack.c.l.b16 %v1256
  %v1301 = vpack.c.b16 %v1300, %v1299
  %v1303 = vsel %vm942, %v1289, 0
  %v1306 = vsel %vm942, %v1290, 0
  %v1309 = vsel %vm942, %v1291, 0
  %v1312 = vsel %vm942, %v1292, 0
  %v1315 = vsel %vm942, %v1293, 0
  %v1318 = vsel %vm942, %v1294, 0
  %v1321 = vsel %vm942, %v1295, 0
  %v1324 = vsel %vm942, %v1296, 0
  %v1327 = vsel %vm967, %v1301, 0
  %1329 = vmatprep.subr.bf16.mxu0 0
  %1330 = vmatpush1.bf16.msra.mxu0 0
  %1331 = vmatprep.subr.bf16.mxu0 0
  %1332 = vmatpush1.bf16.msra.mxu0 0
  %1333 = vmatprep.subr.bf16.mxu0 0
  %1334 = vmatpush1.bf16.msra.mxu0 0
  %1335 = vmatprep.subr.bf16.mxu0 0
  %1336 = vmatpush1.bf16.msra.mxu0 0
  %1337 = vmatprep.subr.bf16.mxu0 0
  %1338 = vmatpush1.bf16.msra.mxu0 0
  %1339 = vmatprep.subr.bf16.mxu0 0
  %1340 = vmatpush1.bf16.msra.mxu0 0
  %1341 = vmatprep.subr.bf16.mxu0 0
  %1342 = vmatpush1.bf16.msra.mxu0 0
  %1343 = vmatprep.subr.bf16.mxu0 0
  %1344 = vmatpush1.bf16.msra.mxu0 %v1327
  %1345 = vmatprep.subr.bf16.mxu0 0
  %1346 = vmatpush2.bf16.msra.mxu0 0
  %1347 = vmatprep.subr.bf16.mxu0 0
  %1348 = vmatpush2.bf16.msra.mxu0 0
  %1349 = vmatprep.subr.bf16.mxu0 0
  %1350 = vmatpush2.bf16.msra.mxu0 0
  %1351 = vmatprep.subr.bf16.mxu0 0
  %1352 = vmatpush2.bf16.msra.mxu0 0
  %1353 = vmatprep.subr.bf16.mxu0 0
  %1354 = vmatpush2.bf16.msra.mxu0 0
  %1355 = vmatprep.subr.bf16.mxu0 0
  %1356 = vmatpush2.bf16.msra.mxu0 0
  %1357 = vmatprep.subr.bf16.mxu0 0
  %1358 = vmatpush2.bf16.msra.mxu0 0
  %1359 = vmatprep.subr.bf16.mxu0 0
  %1360 = vmatpush2.bf16.msra.mxu0 0
  %1361 = vmatprep.mubr.bf16.mxu0 0
  %1362 = vmatmul.mubr.bf16.gmra.mxu0 %v1303
  %v1363 = vpop.f32.mrf.mxu0
  %v1364 = vadd.f32 0.0, %v1363
  %v1365 = vpop.f32.mrf.mxu0
  %v1366 = vpop.f32.mrf.mxu0
  %v1367 = vadd.f32 0.0, %v1366
  %v1368 = vpop.f32.mrf.mxu0
  %1369 = vmatprep.mubr.bf16.mxu0 0
  %1370 = vmatmul.mubr.bf16.gmra.mxu0 %v1306
  %v1371 = vpop.f32.mrf.mxu0
  %v1372 = vadd.f32 0.0, %v1371
  %v1373 = vpop.f32.mrf.mxu0
  %v1374 = vpop.f32.mrf.mxu0
  %v1375 = vadd.f32 0.0, %v1374
  %v1376 = vpop.f32.mrf.mxu0
  %1377 = vmatprep.mubr.bf16.mxu0 0
  %1378 = vmatmul.mubr.bf16.gmra.mxu0 %v1309
  %v1379 = vpop.f32.mrf.mxu0
  %v1380 = vadd.f32 0.0, %v1379
  %v1381 = vpop.f32.mrf.mxu0
  %v1382 = vpop.f32.mrf.mxu0
  %v1383 = vadd.f32 0.0, %v1382
  %v1384 = vpop.f32.mrf.mxu0
  %1385 = vmatprep.mubr.bf16.mxu0 0
  %1386 = vmatmul.mubr.bf16.gmra.mxu0 %v1312
  %v1387 = vpop.f32.mrf.mxu0
  %v1388 = vadd.f32 0.0, %v1387
  %v1389 = vpop.f32.mrf.mxu0
  %v1390 = vpop.f32.mrf.mxu0
  %v1391 = vadd.f32 0.0, %v1390
  %v1392 = vpop.f32.mrf.mxu0
  %1393 = vmatprep.mubr.bf16.mxu0 0
  %1394 = vmatmul.mubr.bf16.gmra.mxu0 %v1315
  %v1395 = vpop.f32.mrf.mxu0
  %v1396 = vadd.f32 0.0, %v1395
  %v1397 = vpop.f32.mrf.mxu0
  %v1398 = vpop.f32.mrf.mxu0
  %v1399 = vadd.f32 0.0, %v1398
  %v1400 = vpop.f32.mrf.mxu0
  %1401 = vmatprep.mubr.bf16.mxu0 0
  %1402 = vmatmul.mubr.bf16.gmra.mxu0 %v1318
  %v1403 = vpop.f32.mrf.mxu0
  %v1404 = vadd.f32 0.0, %v1403
  %v1405 = vpop.f32.mrf.mxu0
  %v1406 = vpop.f32.mrf.mxu0
  %v1407 = vadd.f32 0.0, %v1406
  %v1408 = vpop.f32.mrf.mxu0
  %1409 = vmatprep.mubr.bf16.mxu0 0
  %1410 = vmatmul.mubr.bf16.gmra.mxu0 %v1321
  %v1411 = vpop.f32.mrf.mxu0
  %v1412 = vadd.f32 0.0, %v1411
  %v1413 = vpop.f32.mrf.mxu0
  %v1414 = vpop.f32.mrf.mxu0
  %v1415 = vadd.f32 0.0, %v1414
  %v1416 = vpop.f32.mrf.mxu0
  %1417 = vmatprep.mubr.bf16.mxu0 0
  %1418 = vmatmul.mubr.bf16.gmra.mxu0 %v1324
  %v1419 = vpop.f32.mrf.mxu0
  %v1420 = vadd.f32 0.0, %v1419
  %v1421 = vpop.f32.mrf.mxu0
  %v1422 = vpop.f32.mrf.mxu0
  %v1423 = vadd.f32 0.0, %v1422
  %v1424 = vpop.f32.mrf.mxu0
  %1425 = vdwg.mxu0
  %v1426 = vadd.f32 %v1175, %v1364
  %v1427 = vadd.f32 %v1178, %v1367
  %v1428 = vadd.f32 %v1183, %v1372
  %v1429 = vadd.f32 %v1186, %v1375
  %v1430 = vadd.f32 %v1191, %v1380
  %v1431 = vadd.f32 %v1194, %v1383
  %v1432 = vadd.f32 %v1199, %v1388
  %v1433 = vadd.f32 %v1202, %v1391
  %v1434 = vadd.f32 %v1207, %v1396
  %v1435 = vadd.f32 %v1210, %v1399
  %v1436 = vadd.f32 %v1215, %v1404
  %v1437 = vadd.f32 %v1218, %v1407
  %v1438 = vadd.f32 %v1223, %v1412
  %v1439 = vadd.f32 %v1226, %v1415
  %v1440 = vadd.f32 %v1231, %v1420
  %v1441 = vadd.f32 %v1234, %v1423
  %v1442 = vld [vmem:[%s5] sm:$0x1]
  %v1444 = vlaneseq
  %v1445 = vshrl.u32 %v1444, 7
  %v1446 = vsub.s32 0, %v1445
  %v1447 = vrot.slane %v1442, %v1446
  %v1449 = vmul.f32 %v1426, %v1447
  %v1450 = vmul.f32 %v1427, %v1447
  %v1451 = vmul.f32 %v1428, %v1447
  %v1452 = vmul.f32 %v1429, %v1447
  %v1453 = vmul.f32 %v1430, %v1447
  %v1454 = vmul.f32 %v1431, %v1447
  %v1455 = vmul.f32 %v1432, %v1447
  %v1456 = vmul.f32 %v1433, %v1447
  %v1457 = vmul.f32 %v1434, %v1447
  %v1458 = vmul.f32 %v1435, %v1447
  %v1459 = vmul.f32 %v1436, %v1447
  %v1460 = vmul.f32 %v1437, %v1447
  %v1461 = vmul.f32 %v1438, %v1447
  %v1462 = vmul.f32 %v1439, %v1447
  %v1463 = vmul.f32 %v1440, %v1447
  %v1464 = vmul.f32 %v1441, %v1447
  %v1465 = vld [vmem:[%s6] sm:$0x1]
  %v1467 = vlaneseq
  %v1468 = vshrl.u32 %v1467, 7
  %v1469 = vsub.s32 0, %v1468
  %v1470 = vrot.slane %v1465, %v1469
  %v1472 = vadd.f32 %v1449, %v1470
  %v1473 = vadd.f32 %v1450, %v1470
  %v1474 = vadd.f32 %v1451, %v1470
  %v1475 = vadd.f32 %v1452, %v1470
  %v1476 = vadd.f32 %v1453, %v1470
  %v1477 = vadd.f32 %v1454, %v1470
  %v1478 = vadd.f32 %v1455, %v1470
  %v1479 = vadd.f32 %v1456, %v1470
  %v1480 = vadd.f32 %v1457, %v1470
  %v1481 = vadd.f32 %v1458, %v1470
  %v1482 = vadd.f32 %v1459, %v1470
  %v1483 = vadd.f32 %v1460, %v1470
  %v1484 = vadd.f32 %v1461, %v1470
  %v1485 = vadd.f32 %v1462, %v1470
  %v1486 = vadd.f32 %v1463, %v1470
  %v1487 = vadd.f32 %v1464, %v1470
  %v1488 = vmax.f32 %v1472, 0.0
  %v1489 = vmax.f32 %v1473, 0.0
  %v1490 = vmax.f32 %v1474, 0.0
  %v1491 = vmax.f32 %v1475, 0.0
  %v1492 = vmax.f32 %v1476, 0.0
  %v1493 = vmax.f32 %v1477, 0.0
  %v1494 = vmax.f32 %v1478, 0.0
  %v1495 = vmax.f32 %v1479, 0.0
  %v1496 = vmax.f32 %v1480, 0.0
  %v1497 = vmax.f32 %v1481, 0.0
  %v1498 = vmax.f32 %v1482, 0.0
  %v1499 = vmax.f32 %v1483, 0.0
  %v1500 = vmax.f32 %v1484, 0.0
  %v1501 = vmax.f32 %v1485, 0.0
  %v1502 = vmax.f32 %v1486, 0.0
  %v1503 = vmax.f32 %v1487, 0.0
  %v1504 = vpack.c.bf16 %v1488, %v1488
  %v1505 = vpack.c.bf16 %v1489, %v1489
  %v1506 = vpack.c.bf16 %v1490, %v1490
  %v1507 = vpack.c.bf16 %v1491, %v1491
  %v1508 = vpack.c.bf16 %v1492, %v1492
  %v1509 = vpack.c.bf16 %v1493, %v1493
  %v1510 = vpack.c.bf16 %v1494, %v1494
  %v1511 = vpack.c.bf16 %v1495, %v1495
  %v1512 = vpack.c.bf16 %v1496, %v1496
  %v1513 = vpack.c.bf16 %v1497, %v1497
  %v1514 = vpack.c.bf16 %v1498, %v1498
  %v1515 = vpack.c.bf16 %v1499, %v1499
  %v1516 = vpack.c.bf16 %v1500, %v1500
  %v1517 = vpack.c.bf16 %v1501, %v1501
  %v1518 = vpack.c.bf16 %v1502, %v1502
  %v1519 = vpack.c.bf16 %v1503, %v1503
  %vm1520 = vcmask 60416
  %1521 = vst.msk [vmem:[%s7] sm:$0xf] %vm1520, %v1504
  %1522 = vst.msk [vmem:[%s7 + $0x4] sm:$0xf] %vm1520, %v1505
  %1523 = vst.msk [vmem:[%s7 + $0x8] sm:$0xf] %vm1520, %v1506
  %1524 = vst.msk [vmem:[%s7 + $0xc] sm:$0xf] %vm1520, %v1507
  %1525 = vst.msk [vmem:[%s7 + $0x10] sm:$0xf] %vm1520, %v1508
  %1526 = vst.msk [vmem:[%s7 + $0x14] sm:$0xf] %vm1520, %v1509
  %1527 = vst.msk [vmem:[%s7 + $0x18] sm:$0xf] %vm1520, %v1510
  %1528 = vst.msk [vmem:[%s7 + $0x1c] sm:$0xf] %vm1520, %v1511
  %1529 = vst.msk [vmem:[%s7 + $0x20] sm:$0xf] %vm1520, %v1512
  %1530 = vst.msk [vmem:[%s7 + $0x24] sm:$0xf] %vm1520, %v1513
  %1531 = vst.msk [vmem:[%s7 + $0x28] sm:$0xf] %vm1520, %v1514
  %1532 = vst.msk [vmem:[%s7 + $0x2c] sm:$0xf] %vm1520, %v1515
  %1533 = vst.msk [vmem:[%s7 + $0x30] sm:$0xf] %vm1520, %v1516
  %1534 = vst.msk [vmem:[%s7 + $0x34] sm:$0xf] %vm1520, %v1517
  %1535 = vst.msk [vmem:[%s7 + $0x38] sm:$0xf] %vm1520, %v1518
  %1536 = vst.msk [vmem:[%s7 + $0x3c] sm:$0xf] %vm1520, %v1519
  %v1537 = vld [vmem:[%s877] sm:$0xf]
  %v1538 = vld [vmem:[%s877 + $0x4] sm:$0xf]
  %v1539 = vld [vmem:[%s877 + $0x8] sm:$0xf]
  %v1540 = vld [vmem:[%s877 + $0xc] sm:$0xf]
  %v1541 = vld [vmem:[%s877 + $0x10] sm:$0xf]
  %v1542 = vld [vmem:[%s877 + $0x14] sm:$0xf]
  %v1543 = vld [vmem:[%s877 + $0x18] sm:$0xf]
  %v1544 = vld [vmem:[%s877 + $0x1c] sm:$0xf]
  %v1545 = vld [vmem:[%s877 + $0x24] sm:$0xf]
  %v1546 = vld [vmem:[%s877 + $0x28] sm:$0xf]
  %v1547 = vld [vmem:[%s877 + $0x2c] sm:$0xf]
  %v1548 = vld [vmem:[%s877 + $0x30] sm:$0xf]
  %v1549 = vld [vmem:[%s877 + $0x34] sm:$0xf]
  %v1550 = vld [vmem:[%s877 + $0x38] sm:$0xf]
  %v1551 = vld [vmem:[%s877 + $0x3c] sm:$0xf]
  %v1552 = vld [vmem:[%s877 + $0x40] sm:$0xf]
  %v1553 = vld [vmem:[%s2] sm:$0x3]
  %v1570 = vunpack.c.l.b16 %v1537
  %v1571 = vunpack.c.l.b16 %v1538
  %v1572 = vunpack.c.l.b16 %v1539
  %v1573 = vunpack.c.l.b16 %v1540
  %v1574 = vunpack.c.l.b16 %v1541
  %v1575 = vunpack.c.l.b16 %v1542
  %v1576 = vunpack.c.l.b16 %v1543
  %v1577 = vunpack.c.l.b16 %v1544
  %v1578 = vunpack.c.l.b16 %v1545
  %v1579 = vunpack.c.l.b16 %v1546
  %v1580 = vunpack.c.l.b16 %v1547
  %v1581 = vunpack.c.l.b16 %v1548
  %v1582 = vunpack.c.l.b16 %v1549
  %v1583 = vunpack.c.l.b16 %v1550
  %v1584 = vunpack.c.l.b16 %v1551
  %v1585 = vunpack.c.l.b16 %v1552
  %v1586 = vpack.c.b16 %v1571, %v1570
  %v1587 = vpack.c.b16 %v1573, %v1572
  %v1588 = vpack.c.b16 %v1575, %v1574
  %v1589 = vpack.c.b16 %v1577, %v1576
  %v1590 = vpack.c.b16 %v1579, %v1578
  %v1591 = vpack.c.b16 %v1581, %v1580
  %v1592 = vpack.c.b16 %v1583, %v1582
  %v1593 = vpack.c.b16 %v1585, %v1584
  %vm1594 = vcmask 31744
  %v1596 = vsel %vm1594, %v1586, 0
  %v1599 = vsel %vm1594, %v1587, 0
  %v1602 = vsel %vm1594, %v1588, 0
  %v1605 = vsel %vm1594, %v1589, 0
  %v1608 = vsel %vm1594, %v1590, 0
  %v1611 = vsel %vm1594, %v1591, 0
  %v1614 = vsel %vm1594, %v1592, 0
  %v1617 = vsel %vm1594, %v1593, 0
  %vm1619 = vcmask 1041408
  %v1621 = vsel %vm1619, %v1553, 0
  %1623 = vmatprep.subr.bf16.mxu0 0
  %1624 = vmatpush1.bf16.msra.mxu0 0
  %1625 = vmatprep.subr.bf16.mxu0 0
  %1626 = vmatpush1.bf16.msra.mxu0 0
  %1627 = vmatprep.subr.bf16.mxu0 0
  %1628 = vmatpush1.bf16.msra.mxu0 0
  %1629 = vmatprep.subr.bf16.mxu0 0
  %1630 = vmatpush1.bf16.msra.mxu0 0
  %1631 = vmatprep.subr.bf16.mxu0 0
  %1632 = vmatpush1.bf16.msra.mxu0 0
  %1633 = vmatprep.subr.bf16.mxu0 0
  %1634 = vmatpush1.bf16.msra.mxu0 0
  %1635 = vmatprep.subr.bf16.mxu0 0
  %1636 = vmatpush1.bf16.msra.mxu0 0
  %1637 = vmatprep.subr.bf16.mxu0 0
  %1638 = vmatpush1.bf16.msra.mxu0 %v1621
  %1639 = vmatprep.subr.bf16.mxu0 0
  %1640 = vmatpush2.bf16.msra.mxu0 0
  %1641 = vmatprep.subr.bf16.mxu0 0
  %1642 = vmatpush2.bf16.msra.mxu0 0
  %1643 = vmatprep.subr.bf16.mxu0 0
  %1644 = vmatpush2.bf16.msra.mxu0 0
  %1645 = vmatprep.subr.bf16.mxu0 0
  %1646 = vmatpush2.bf16.msra.mxu0 0
  %1647 = vmatprep.subr.bf16.mxu0 0
  %1648 = vmatpush2.bf16.msra.mxu0 0
  %1649 = vmatprep.subr.bf16.mxu0 0
  %1650 = vmatpush2.bf16.msra.mxu0 0
  %1651 = vmatprep.subr.bf16.mxu0 0
  %1652 = vmatpush2.bf16.msra.mxu0 0
  %1653 = vmatprep.subr.bf16.mxu0 0
  %1654 = vmatpush2.bf16.msra.mxu0 0
  %1655 = vmatprep.mubr.bf16.mxu0 0
  %1656 = vmatmul.mubr.bf16.gmra.mxu0 %v1596
  %v1657 = vpop.f32.mrf.mxu0
  %v1658 = vadd.f32 0.0, %v1657
  %v1659 = vpop.f32.mrf.mxu0
  %v1660 = vpop.f32.mrf.mxu0
  %v1661 = vadd.f32 0.0, %v1660
  %v1662 = vpop.f32.mrf.mxu0
  %1663 = vmatprep.mubr.bf16.mxu0 0
  %1664 = vmatmul.mubr.bf16.gmra.mxu0 %v1599
  %v1665 = vpop.f32.mrf.mxu0
  %v1666 = vadd.f32 0.0, %v1665
  %v1667 = vpop.f32.mrf.mxu0
  %v1668 = vpop.f32.mrf.mxu0
  %v1669 = vadd.f32 0.0, %v1668
  %v1670 = vpop.f32.mrf.mxu0
  %1671 = vmatprep.mubr.bf16.mxu0 0
  %1672 = vmatmul.mubr.bf16.gmra.mxu0 %v1602
  %v1673 = vpop.f32.mrf.mxu0
  %v1674 = vadd.f32 0.0, %v1673
  %v1675 = vpop.f32.mrf.mxu0
  %v1676 = vpop.f32.mrf.mxu0
  %v1677 = vadd.f32 0.0, %v1676
  %v1678 = vpop.f32.mrf.mxu0
  %1679 = vmatprep.mubr.bf16.mxu0 0
  %1680 = vmatmul.mubr.bf16.gmra.mxu0 %v1605
  %v1681 = vpop.f32.mrf.mxu0
  %v1682 = vadd.f32 0.0, %v1681
  %v1683 = vpop.f32.mrf.mxu0
  %v1684 = vpop.f32.mrf.mxu0
  %v1685 = vadd.f32 0.0, %v1684
  %v1686 = vpop.f32.mrf.mxu0
  %1687 = vmatprep.mubr.bf16.mxu0 0
  %1688 = vmatmul.mubr.bf16.gmra.mxu0 %v1608
  %v1689 = vpop.f32.mrf.mxu0
  %v1690 = vadd.f32 0.0, %v1689
  %v1691 = vpop.f32.mrf.mxu0
  %v1692 = vpop.f32.mrf.mxu0
  %v1693 = vadd.f32 0.0, %v1692
  %v1694 = vpop.f32.mrf.mxu0
  %1695 = vmatprep.mubr.bf16.mxu0 0
  %1696 = vmatmul.mubr.bf16.gmra.mxu0 %v1611
  %v1697 = vpop.f32.mrf.mxu0
  %v1698 = vadd.f32 0.0, %v1697
  %v1699 = vpop.f32.mrf.mxu0
  %v1700 = vpop.f32.mrf.mxu0
  %v1701 = vadd.f32 0.0, %v1700
  %v1702 = vpop.f32.mrf.mxu0
  %1703 = vmatprep.mubr.bf16.mxu0 0
  %1704 = vmatmul.mubr.bf16.gmra.mxu0 %v1614
  %v1705 = vpop.f32.mrf.mxu0
  %v1706 = vadd.f32 0.0, %v1705
  %v1707 = vpop.f32.mrf.mxu0
  %v1708 = vpop.f32.mrf.mxu0
  %v1709 = vadd.f32 0.0, %v1708
  %v1710 = vpop.f32.mrf.mxu0
  %1711 = vmatprep.mubr.bf16.mxu0 0
  %1712 = vmatmul.mubr.bf16.gmra.mxu0 %v1617
  %v1713 = vpop.f32.mrf.mxu0
  %v1714 = vadd.f32 0.0, %v1713
  %v1715 = vpop.f32.mrf.mxu0
  %v1716 = vpop.f32.mrf.mxu0
  %v1717 = vadd.f32 0.0, %v1716
  %v1718 = vpop.f32.mrf.mxu0
  %1719 = vdwg.mxu0
  %vm1720 = vcmask 64512
  %1721 = vst.msk [vmem:[%s8] sm:$0xff] %vm1720, %v1658
  %1722 = vst.msk [vmem:[%s8 + $0x8] sm:$0xff] %vm1720, %v1661
  %1723 = vst.msk [vmem:[%s8 + $0x10] sm:$0xff] %vm1720, %v1666
  %1724 = vst.msk [vmem:[%s8 + $0x18] sm:$0xff] %vm1720, %v1669
  %1725 = vst.msk [vmem:[%s8 + $0x20] sm:$0xff] %vm1720, %v1674
  %1726 = vst.msk [vmem:[%s8 + $0x28] sm:$0xff] %vm1720, %v1677
  %1727 = vst.msk [vmem:[%s8 + $0x30] sm:$0xff] %vm1720, %v1682
  %1728 = vst.msk [vmem:[%s8 + $0x38] sm:$0xff] %vm1720, %v1685
  %1729 = vst.msk [vmem:[%s8 + $0x40] sm:$0xff] %vm1720, %v1690
  %1730 = vst.msk [vmem:[%s8 + $0x48] sm:$0xff] %vm1720, %v1693
  %1731 = vst.msk [vmem:[%s8 + $0x50] sm:$0xff] %vm1720, %v1698
  %1732 = vst.msk [vmem:[%s8 + $0x58] sm:$0xff] %vm1720, %v1701
  %1733 = vst.msk [vmem:[%s8 + $0x60] sm:$0xff] %vm1720, %v1706
  %1734 = vst.msk [vmem:[%s8 + $0x68] sm:$0xff] %vm1720, %v1709
  %1735 = vst.msk [vmem:[%s8 + $0x70] sm:$0xff] %vm1720, %v1714
  %1736 = vst.msk [vmem:[%s8 + $0x78] sm:$0xff] %vm1720, %v1717
  // Predicated region
  $region34: #{basic_block_forward.2} parent=0 // pred_check
    _
  $region35: #{basic_block_forward.2} parent=0 // pred_check_branch
    %1738 = sbr.rel (0) target = $region37
  $region36: #{basic_block_forward.2} parent=0 // pred_region
    _
  $region37: #{basic_block_forward.2} parent=0 // pred_fallthru
    _
  // Predicated region
  $region38: #{basic_block_forward.2} parent=0 // pred_check
    _
  $region39: #{basic_block_forward.2} parent=0 // pred_check_branch
    %1740 = sbr.rel (0) target = $region41
  $region40: #{basic_block_forward.2} parent=0 // pred_region
    _
  $region41: #{basic_block_forward.2} parent=0 // pred_fallthru
    _
  // Predicated region
  $region42: #{basic_block_forward.2} parent=0 // pred_check
    _
  $region43: #{basic_block_forward.2} parent=0 // pred_check_branch
    %1742 = sbr.rel (0) target = $region45
  $region44: #{basic_block_forward.2} parent=0 // pred_region
    _
  $region45: #{basic_block_forward.2} parent=0 // pred_fallthru
    _
  // Predicated region
  $region46: #{basic_block_forward.2} parent=0 // pred_check
    _
  $region47: #{basic_block_forward.2} parent=0 // pred_check_branch
    %1744 = sbr.rel (0) target = $region49
  $region48: #{basic_block_forward.2} parent=0 // pred_region
    _
  $region49: #{basic_block_forward.2} parent=0 // pred_fallthru
    _

</llo_original>
